<compile_context>
chip_gen: v5e
topology: v5e:2x2
jax: 0.10.0
libtpu: 0.0.40
codegen_flags: <defaults>
</compile_context>

<pallas_src>
import numpy as np
import jax
import jax.numpy as jnp
from jax.experimental import pallas as pl
from jax.experimental.pallas import tpu as pltpu

K = 3
TAPS = K * K
# output_padding per layer (what PyTorch derives from output_size=):
# spatial dims go 2 -> 4 -> 7 -> 14 -> 28.
OUTPUT_PADDINGS = (1, 0, 1, 1)


# ---------------------------------------------------------------------------
# The fused Pallas kernel (whole decoder, one call, no grid).
# ---------------------------------------------------------------------------
def _make_decoder_kernel(grid_w, hw):
    """grid_w / hw: width (14) and size (196) of the layer-4 *input* grid."""

    def kernel(x_ref,
               g1_ref, g2_ref, g3_ref,
               w1_ref, w2_ref, w3_ref, w4_ref,
               b1_ref, b2_ref, b3_ref, b4_ref,
               maskn_ref,
               out_ref,
               ppad_ref):
        """Shapes (b = batch, stacked on sublanes):
          x_ref  : (b*C0, 4)              latent, channels x spatial
          g*     : (9, HWin, HWout)       0/1 tap scatter matrices (layers 1-3)
          w1..w3 : (9, b*Cout, b*Cin)     per-tap block-diag channel weights
          w4     : (b*9, b*32)            layer-4 per-tap channel projections
          b1..b3 : (b*Cout, 1)            biases tiled over the batch
          b4     : (1, 1)
          maskn  : (1, hw)                0 where n == grid_w-1 (14x14 grid)
          out    : (b*4, hw)              4 stride-2 output phases per sample
          ppad   : VMEM (b*9, hw+2*gw)    zero-padded staging slab for shifts
        """

        def tconv_layer(a, g_ref, w_ref, b_ref):
            # acc[b*Co+co, o] = sum_t sum_ci W[t][co,ci] a[b*Ci+ci, i] G[t][i, o]
            rows = w_ref.shape[1]
            hw_out = g_ref.shape[2]
            acc = jnp.zeros((rows, hw_out), jnp.float32)
            for t in range(TAPS):                       # unrolled, 9 taps
                mixed = jnp.dot(w_ref[t], a,            # channel mix first
                                preferred_element_type=jnp.float32)
                acc = acc + jnp.dot(mixed, g_ref[t],    # exact 1-hot scatter
                                    preferred_element_type=jnp.float32)
            return jax.nn.sigmoid(acc + b_ref[...])

        a = x_ref[...]                                  # (B*C0, 4)    2x2
        a = tconv_layer(a, g1_ref, w1_ref, b1_ref)      # (B*32, 16)   4x4
        a = tconv_layer(a, g2_ref, w2_ref, b2_ref)      # (B*32, 49)   7x7
        a = tconv_layer(a, g3_ref, w3_ref, b3_ref)      # (B*32, 196)  14x14

        # ---- layer 4 (Cout=1) as sub-pixel phases: no scatter matrix ----
        # p[b*9 + kh*3+kw, m*14+n] = sum_ci w4[ci,0,kh,kw] * a[b*32+ci, m*14+n]
        p = jnp.dot(w4_ref[...], a,
                    preferred_element_type=jnp.float32)  # (B*9, 196)

        # Zero-padded staging slab so the (m+1), (n+1) shifts are plain
        # static offset loads (out-of-grid contributions read zeros).
        ppad_ref[...] = jnp.zeros_like(ppad_ref)
        ppad_ref[:, 0:hw] = p

        maskn = maskn_ref[...]                           # kills the n -> n+1 wrap
        bias4 = b4_ref[...]                              # (1, 1)

        def tap(row, shift):
            return ppad_ref[row:row + 1, shift:shift + hw]

        nb = out_ref.shape[0] // 4
        for b in range(nb):                              # tiny static batch: unroll
            o = b * TAPS
            # tap index t = kh*3 + kw ; output pixel (2m+r, 2n+s)
            ph00 = tap(o + 4, 0)                                     # (kh,kw)=(1,1)
            ph01 = tap(o + 5, 0) + tap(o + 3, 1) * maskn             # (1,2)+(1,0)@n+1
            ph10 = tap(o + 7, 0) + tap(o + 1, grid_w)                # (2,1)+(0,1)@m+1
            ph11 = (tap(o + 8, 0) + tap(o + 6, 1) * maskn            # (2,2)+(2,0)@n+1
                    + tap(o + 2, grid_w)                             # (0,2)@m+1
                    + tap(o + 0, grid_w + 1) * maskn)                # (0,0)@m+1,n+1
            out_ref[b * 4 + 0:b * 4 + 1, :] = jax.nn.sigmoid(ph00 + bias4)
            out_ref[b * 4 + 1:b * 4 + 2, :] = jax.nn.sigmoid(ph01 + bias4)
            out_ref[b * 4 + 2:b * 4 + 3, :] = jax.nn.sigmoid(ph10 + bias4)
            out_ref[b * 4 + 3:b * 4 + 4, :] = jax.nn.sigmoid(ph11 + bias4)

    return kernel


# ---------------------------------------------------------------------------
# Constant / parameter preparation (plain JAX / numpy glue).
# ---------------------------------------------------------------------------
def _gather_constants(h0, w0):
    """Layers 1-3 only: 0/1 scatter matrices G of shape (9, H*W, OH*OW) with
    G[kh*3+kw, ih*W+iw, oh*OW+ow] = 1 iff oh = 2*ih - 1 + kh, ow = 2*iw - 1 + kw
    (stride-2, pad-1 transposed conv; output_padding folded into OH/OW)."""
    mats = []
    h, w = h0, w0
    for op in OUTPUT_PADDINGS[:3]:
        oh_n, ow_n = 2 * h - 1 + op, 2 * w - 1 + op
        g = np.zeros((TAPS, h * w, oh_n * ow_n), np.float32)
        for kh in range(K):
            for kw in range(K):
                t = kh * K + kw
                for ih in range(h):
                    oh = 2 * ih - 1 + kh
                    if oh < 0 or oh >= oh_n:
                        continue
                    for iw in range(w):
                        ow = 2 * iw - 1 + kw
                        if ow < 0 or ow >= ow_n:
                            continue
                        g[t, ih * w + iw, oh * ow_n + ow] = 1.0
        mats.append(g)
        h, w = oh_n, ow_n
    return mats, (h, w)


def _tap_weights(w):
    """PyTorch ConvTranspose2d weight (Cin, Cout, K, K) -> (9, Cout, Cin),
    tap t = kh*K + kw (no spatial flip; G uses oh = 2*ih - 1 + kh directly)."""
    cin, cout = w.shape[0], w.shape[1]
    return jnp.transpose(w, (2, 3, 1, 0)).reshape(TAPS, cout, cin)


def _block_diag_over_batch(m, batch):
    """(R, C) or (9, R, C) -> block-diagonal over the batch (batch-stacked rows)."""
    eye = jnp.eye(batch, dtype=m.dtype)
    if m.ndim == 2:
        return jnp.kron(eye, m)
    return jax.vmap(lambda x: jnp.kron(eye, x))(m)


@jax.jit
def conv_decoder_forward(params, x_nchw):
    """Forward pass matching the PyTorch module. x_nchw: (B, latent/4, 2, 2).
    Returns (B, 1, 28, 28) float32."""
    B, c0, h0, w0 = x_nchw.shape
    gs_np, (h3, w3) = _gather_constants(h0, w0)          # layers 1-3; h3=w3=14
    gs = [jnp.asarray(g) for g in gs_np]
    oh = 2 * h3 - 1 + OUTPUT_PADDINGS[3]
    ow = 2 * w3 - 1 + OUTPUT_PADDINGS[3]
    hw = h3 * w3

    taps = [_tap_weights(w) for (w, _) in params]        # (9, Cout, Cin)
    w_blk = [_block_diag_over_batch(t, B) for t in taps[:3]]   # (9, B*Co, B*Ci)
    w4 = _block_diag_over_batch(taps[3][:, 0, :], B)           # (B*9, B*32)
    bs = [jnp.tile(params[l][1].reshape(-1, 1), (B, 1)) for l in range(3)]
    b4 = params[3][1].reshape(1, 1)

    maskn_np = np.ones((1, hw), np.float32)
    maskn_np[0, w3 - 1::w3] = 0.0                        # n == 13 -> no n+1 neighbor
    maskn = jnp.asarray(maskn_np)

    vmem = pltpu.MemorySpace.VMEM
    phases = pl.pallas_call(
        _make_decoder_kernel(w3, hw),
        out_shape=jax.ShapeDtypeStruct((B * 4, hw), jnp.float32),
        in_specs=[pl.BlockSpec(memory_space=vmem)] * 13,
        out_specs=pl.BlockSpec(memory_space=vmem),
        scratch_shapes=[pltpu.VMEM((B * TAPS, hw + 2 * w3), jnp.float32)],
    )(x_nchw.reshape(B * c0, h0 * w0),
      gs[0], gs[1], gs[2],
      w_blk[0], w_blk[1], w_blk[2], w4,
      bs[0], bs[1], bs[2], b4,
      maskn)

    # Pixel-shuffle the 4 stride-2 phases (r, s) back into the 28x28 image.
    # Wrapper-side layout plumbing only (~B*784 floats), no compute.
    out = phases.reshape(B, 2, 2, h3, w3)                # [b, r, s, m, n]
    out = jnp.transpose(out, (0, 3, 1, 4, 2))            # [b, m, r, n, s]
    return out.reshape(B, 1, oh, ow)                     # oh = 2m+r, ow = 2n+s


# ---------------------------------------------------------------------------
# Parameters + pure-JAX reference for the self-test.
# ---------------------------------------------------------------------------
def init_params(key, latent_size):
    """Deterministic synthetic parameters with the module's shapes
    (PyTorch ConvTranspose2d layout: weight (Cin, Cout, K, K), bias (Cout,))."""
    c_in = latent_size // 4
    dims = [(c_in, 32), (32, 32), (32, 32), (32, 1)]
    params = []
    for i, (ci, co) in enumerate(dims):
        kw_key, kb_key = jax.random.split(jax.random.fold_in(key, i))
        bound = 1.0 / jnp.sqrt(jnp.float32(ci * K * K))
        w = jax.random.uniform(kw_key, (ci, co, K, K), jnp.float32,
                               minval=-bound, maxval=bound)
        b = jax.random.uniform(kb_key, (co,), jnp.float32,
                               minval=-bound, maxval=bound)
        params.append((w, b))
    return params


def _ref_forward(params, x_nchw):
    """Independent pure-JAX reference: transposed conv as lhs-dilated conv."""
    x = jnp.transpose(x_nchw, (0, 2, 3, 1))              # NCHW -> NHWC
    for (w, b), op in zip(params, OUTPUT_PADDINGS):
        wf = jnp.transpose(jnp.flip(w, (2, 3)), (2, 3, 0, 1))   # HWIO, flipped
        x = jax.lax.conv_general_dilated(
            x, wf, window_strides=(1, 1),
            padding=((1, 1 + op), (1, 1 + op)),
            lhs_dilation=(2, 2),
            dimension_numbers=('NHWC', 'HWIO', 'NHWC'),
            precision=jax.lax.Precision.HIGHEST)
        x = jax.nn.sigmoid(x + b)
    return jnp.transpose(x, (0, 3, 1, 2))                # NHWC -> NCHW


if __name__ == "__main__":
    latent_size = 40                    # docstring: input is (B, 10, 2, 2)
    batch = 2
    key = jax.random.PRNGKey(0)
    kx, kp = jax.random.split(key)
    x = jax.random.normal(kx, (batch, latent_size // 4, 2, 2), jnp.float32)
    params = init_params(kp, latent_size)

    out = conv_decoder_forward(params, x)
    out = jax.block_until_ready(out)
    assert out.shape == (batch, 1, 28, 28), out.shape

    ref = _ref_forward(params, x)
    assert jnp.allclose(out, ref, atol=1e-4, rtol=1e-4), \
        float(jnp.max(jnp.abs(out - ref)))

    print("KERNEL_OK")
</pallas_src>

<mosaic_0001>
module attributes {stable_mosaic.version = 11 : i64} {
  func.func @kernel(%arg0: memref<20x4xf32, #tpu.memory_space<vmem>>, %arg1: memref<9x4x16xf32, #tpu.memory_space<vmem>>, %arg2: memref<9x16x49xf32, #tpu.memory_space<vmem>>, %arg3: memref<9x49x196xf32, #tpu.memory_space<vmem>>, %arg4: memref<9x64x20xf32, #tpu.memory_space<vmem>>, %arg5: memref<9x64x64xf32, #tpu.memory_space<vmem>>, %arg6: memref<9x64x64xf32, #tpu.memory_space<vmem>>, %arg7: memref<18x64xf32, #tpu.memory_space<vmem>>, %arg8: memref<64x1xf32, #tpu.memory_space<vmem>>, %arg9: memref<64x1xf32, #tpu.memory_space<vmem>>, %arg10: memref<64x1xf32, #tpu.memory_space<vmem>>, %arg11: memref<1x1xf32, #tpu.memory_space<vmem>>, %arg12: memref<1x196xf32, #tpu.memory_space<vmem>>, %arg13: memref<8x196xf32, #tpu.memory_space<vmem>>, %arg14: memref<18x224xf32, #tpu.memory_space<vmem>>) attributes {dimension_semantics = [], scalar_prefetch = 0 : i64, scratch_operands = 1 : i64, tpu.core_type = #tpu.core_type<tc>} {
    %c0 = arith.constant 0 : index
    %c0_0 = arith.constant 0 : index
    %0 = vector.load %arg0[%c0, %c0_0] : memref<20x4xf32, #tpu.memory_space<vmem>>, vector<20x4xf32>
    %cst = arith.constant 0.000000e+00 : f32
    %1 = vector.broadcast %cst : f32 to vector<64x16xf32>
    %c0_1 = arith.constant 0 : index
    %c0_2 = arith.constant 0 : index
    %c0_3 = arith.constant 0 : index
    %2 = vector.load %arg4[%c0_1, %c0_2, %c0_3] : memref<9x64x20xf32, #tpu.memory_space<vmem>>, vector<1x64x20xf32>
    %3 = vector.shape_cast %2 : vector<1x64x20xf32> to vector<64x20xf32>
    %cst_4 = arith.constant dense<0.000000e+00> : vector<64x4xf32>
    %4 = tpu.matmul %3, %0, %cst_4 {dimension_numbers = #tpu.dot_dimension_numbers<[1], [0], [0], [1], [0, 0, 1, 1], [], []>} : vector<64x20xf32>, vector<20x4xf32>, vector<64x4xf32> -> vector<64x4xf32>
    %c0_5 = arith.constant 0 : index
    %c0_6 = arith.constant 0 : index
    %c0_7 = arith.constant 0 : index
    %5 = vector.load %arg1[%c0_5, %c0_6, %c0_7] : memref<9x4x16xf32, #tpu.memory_space<vmem>>, vector<1x4x16xf32>
    %6 = vector.shape_cast %5 : vector<1x4x16xf32> to vector<4x16xf32>
    %cst_8 = arith.constant dense<0.000000e+00> : vector<64x16xf32>
    %7 = tpu.matmul %4, %6, %cst_8 {dimension_numbers = #tpu.dot_dimension_numbers<[1], [0], [0], [1], [0, 0, 1, 1], [], []>} : vector<64x4xf32>, vector<4x16xf32>, vector<64x16xf32> -> vector<64x16xf32>
    %8 = arith.addf %1, %7 : vector<64x16xf32>
    %c1 = arith.constant 1 : index
    %c0_9 = arith.constant 0 : index
    %c0_10 = arith.constant 0 : index
    %9 = vector.load %arg4[%c1, %c0_9, %c0_10] : memref<9x64x20xf32, #tpu.memory_space<vmem>>, vector<1x64x20xf32>
    %10 = vector.shape_cast %9 : vector<1x64x20xf32> to vector<64x20xf32>
    %cst_11 = arith.constant dense<0.000000e+00> : vector<64x4xf32>
    %11 = tpu.matmul %10, %0, %cst_11 {dimension_numbers = #tpu.dot_dimension_numbers<[1], [0], [0], [1], [0, 0, 1, 1], [], []>} : vector<64x20xf32>, vector<20x4xf32>, vector<64x4xf32> -> vector<64x4xf32>
    %c1_12 = arith.constant 1 : index
    %c0_13 = arith.constant 0 : index
    %c0_14 = arith.constant 0 : index
    %12 = vector.load %arg1[%c1_12, %c0_13, %c0_14] : memref<9x4x16xf32, #tpu.memory_space<vmem>>, vector<1x4x16xf32>
    %13 = vector.shape_cast %12 : vector<1x4x16xf32> to vector<4x16xf32>
    %cst_15 = arith.constant dense<0.000000e+00> : vector<64x16xf32>
    %14 = tpu.matmul %11, %13, %cst_15 {dimension_numbers = #tpu.dot_dimension_numbers<[1], [0], [0], [1], [0, 0, 1, 1], [], []>} : vector<64x4xf32>, vector<4x16xf32>, vector<64x16xf32> -> vector<64x16xf32>
    %15 = arith.addf %8, %14 : vector<64x16xf32>
    %c2 = arith.constant 2 : index
    %c0_16 = arith.constant 0 : index
    %c0_17 = arith.constant 0 : index
    %16 = vector.load %arg4[%c2, %c0_16, %c0_17] : memref<9x64x20xf32, #tpu.memory_space<vmem>>, vector<1x64x20xf32>
    %17 = vector.shape_cast %16 : vector<1x64x20xf32> to vector<64x20xf32>
    %cst_18 = arith.constant dense<0.000000e+00> : vector<64x4xf32>
    %18 = tpu.matmul %17, %0, %cst_18 {dimension_numbers = #tpu.dot_dimension_numbers<[1], [0], [0], [1], [0, 0, 1, 1], [], []>} : vector<64x20xf32>, vector<20x4xf32>, vector<64x4xf32> -> vector<64x4xf32>
    %c2_19 = arith.constant 2 : index
    %c0_20 = arith.constant 0 : index
    %c0_21 = arith.constant 0 : index
    %19 = vector.load %arg1[%c2_19, %c0_20, %c0_21] : memref<9x4x16xf32, #tpu.memory_space<vmem>>, vector<1x4x16xf32>
    %20 = vector.shape_cast %19 : vector<1x4x16xf32> to vector<4x16xf32>
    %cst_22 = arith.constant dense<0.000000e+00> : vector<64x16xf32>
    %21 = tpu.matmul %18, %20, %cst_22 {dimension_numbers = #tpu.dot_dimension_numbers<[1], [0], [0], [1], [0, 0, 1, 1], [], []>} : vector<64x4xf32>, vector<4x16xf32>, vector<64x16xf32> -> vector<64x16xf32>
    %22 = arith.addf %15, %21 : vector<64x16xf32>
    %c3 = arith.constant 3 : index
    %c0_23 = arith.constant 0 : index
    %c0_24 = arith.constant 0 : index
    %23 = vector.load %arg4[%c3, %c0_23, %c0_24] : memref<9x64x20xf32, #tpu.memory_space<vmem>>, vector<1x64x20xf32>
    %24 = vector.shape_cast %23 : vector<1x64x20xf32> to vector<64x20xf32>
    %cst_25 = arith.constant dense<0.000000e+00> : vector<64x4xf32>
    %25 = tpu.matmul %24, %0, %cst_25 {dimension_numbers = #tpu.dot_dimension_numbers<[1], [0], [0], [1], [0, 0, 1, 1], [], []>} : vector<64x20xf32>, vector<20x4xf32>, vector<64x4xf32> -> vector<64x4xf32>
    %c3_26 = arith.constant 3 : index
    %c0_27 = arith.constant 0 : index
    %c0_28 = arith.constant 0 : index
    %26 = vector.load %arg1[%c3_26, %c0_27, %c0_28] : memref<9x4x16xf32, #tpu.memory_space<vmem>>, vector<1x4x16xf32>
    %27 = vector.shape_cast %26 : vector<1x4x16xf32> to vector<4x16xf32>
    %cst_29 = arith.constant dense<0.000000e+00> : vector<64x16xf32>
    %28 = tpu.matmul %25, %27, %cst_29 {dimension_numbers = #tpu.dot_dimension_numbers<[1], [0], [0], [1], [0, 0, 1, 1], [], []>} : vector<64x4xf32>, vector<4x16xf32>, vector<64x16xf32> -> vector<64x16xf32>
    %29 = arith.addf %22, %28 : vector<64x16xf32>
    %c4 = arith.constant 4 : index
    %c0_30 = arith.constant 0 : index
    %c0_31 = arith.constant 0 : index
    %30 = vector.load %arg4[%c4, %c0_30, %c0_31] : memref<9x64x20xf32, #tpu.memory_space<vmem>>, vector<1x64x20xf32>
    %31 = vector.shape_cast %30 : vector<1x64x20xf32> to vector<64x20xf32>
    %cst_32 = arith.constant dense<0.000000e+00> : vector<64x4xf32>
    %32 = tpu.matmul %31, %0, %cst_32 {dimension_numbers = #tpu.dot_dimension_numbers<[1], [0], [0], [1], [0, 0, 1, 1], [], []>} : vector<64x20xf32>, vector<20x4xf32>, vector<64x4xf32> -> vector<64x4xf32>
    %c4_33 = arith.constant 4 : index
    %c0_34 = arith.constant 0 : index
    %c0_35 = arith.constant 0 : index
    %33 = vector.load %arg1[%c4_33, %c0_34, %c0_35] : memref<9x4x16xf32, #tpu.memory_space<vmem>>, vector<1x4x16xf32>
    %34 = vector.shape_cast %33 : vector<1x4x16xf32> to vector<4x16xf32>
    %cst_36 = arith.constant dense<0.000000e+00> : vector<64x16xf32>
    %35 = tpu.matmul %32, %34, %cst_36 {dimension_numbers = #tpu.dot_dimension_numbers<[1], [0], [0], [1], [0, 0, 1, 1], [], []>} : vector<64x4xf32>, vector<4x16xf32>, vector<64x16xf32> -> vector<64x16xf32>
    %36 = arith.addf %29, %35 : vector<64x16xf32>
    %c5 = arith.constant 5 : index
    %c0_37 = arith.constant 0 : index
    %c0_38 = arith.constant 0 : index
    %37 = vector.load %arg4[%c5, %c0_37, %c0_38] : memref<9x64x20xf32, #tpu.memory_space<vmem>>, vector<1x64x20xf32>
    %38 = vector.shape_cast %37 : vector<1x64x20xf32> to vector<64x20xf32>
    %cst_39 = arith.constant dense<0.000000e+00> : vector<64x4xf32>
    %39 = tpu.matmul %38, %0, %cst_39 {dimension_numbers = #tpu.dot_dimension_numbers<[1], [0], [0], [1], [0, 0, 1, 1], [], []>} : vector<64x20xf32>, vector<20x4xf32>, vector<64x4xf32> -> vector<64x4xf32>
    %c5_40 = arith.constant 5 : index
    %c0_41 = arith.constant 0 : index
    %c0_42 = arith.constant 0 : index
    %40 = vector.load %arg1[%c5_40, %c0_41, %c0_42] : memref<9x4x16xf32, #tpu.memory_space<vmem>>, vector<1x4x16xf32>
    %41 = vector.shape_cast %40 : vector<1x4x16xf32> to vector<4x16xf32>
    %cst_43 = arith.constant dense<0.000000e+00> : vector<64x16xf32>
    %42 = tpu.matmul %39, %41, %cst_43 {dimension_numbers = #tpu.dot_dimension_numbers<[1], [0], [0], [1], [0, 0, 1, 1], [], []>} : vector<64x4xf32>, vector<4x16xf32>, vector<64x16xf32> -> vector<64x16xf32>
    %43 = arith.addf %36, %42 : vector<64x16xf32>
    %c6 = arith.constant 6 : index
    %c0_44 = arith.constant 0 : index
    %c0_45 = arith.constant 0 : index
    %44 = vector.load %arg4[%c6, %c0_44, %c0_45] : memref<9x64x20xf32, #tpu.memory_space<vmem>>, vector<1x64x20xf32>
    %45 = vector.shape_cast %44 : vector<1x64x20xf32> to vector<64x20xf32>
    %cst_46 = arith.constant dense<0.000000e+00> : vector<64x4xf32>
    %46 = tpu.matmul %45, %0, %cst_46 {dimension_numbers = #tpu.dot_dimension_numbers<[1], [0], [0], [1], [0, 0, 1, 1], [], []>} : vector<64x20xf32>, vector<20x4xf32>, vector<64x4xf32> -> vector<64x4xf32>
    %c6_47 = arith.constant 6 : index
    %c0_48 = arith.constant 0 : index
    %c0_49 = arith.constant 0 : index
    %47 = vector.load %arg1[%c6_47, %c0_48, %c0_49] : memref<9x4x16xf32, #tpu.memory_space<vmem>>, vector<1x4x16xf32>
    %48 = vector.shape_cast %47 : vector<1x4x16xf32> to vector<4x16xf32>
    %cst_50 = arith.constant dense<0.000000e+00> : vector<64x16xf32>
    %49 = tpu.matmul %46, %48, %cst_50 {dimension_numbers = #tpu.dot_dimension_numbers<[1], [0], [0], [1], [0, 0, 1, 1], [], []>} : vector<64x4xf32>, vector<4x16xf32>, vector<64x16xf32> -> vector<64x16xf32>
    %50 = arith.addf %43, %49 : vector<64x16xf32>
    %c7 = arith.constant 7 : index
    %c0_51 = arith.constant 0 : index
    %c0_52 = arith.constant 0 : index
    %51 = vector.load %arg4[%c7, %c0_51, %c0_52] : memref<9x64x20xf32, #tpu.memory_space<vmem>>, vector<1x64x20xf32>
    %52 = vector.shape_cast %51 : vector<1x64x20xf32> to vector<64x20xf32>
    %cst_53 = arith.constant dense<0.000000e+00> : vector<64x4xf32>
    %53 = tpu.matmul %52, %0, %cst_53 {dimension_numbers = #tpu.dot_dimension_numbers<[1], [0], [0], [1], [0, 0, 1, 1], [], []>} : vector<64x20xf32>, vector<20x4xf32>, vector<64x4xf32> -> vector<64x4xf32>
    %c7_54 = arith.constant 7 : index
    %c0_55 = arith.constant 0 : index
    %c0_56 = arith.constant 0 : index
    %54 = vector.load %arg1[%c7_54, %c0_55, %c0_56] : memref<9x4x16xf32, #tpu.memory_space<vmem>>, vector<1x4x16xf32>
    %55 = vector.shape_cast %54 : vector<1x4x16xf32> to vector<4x16xf32>
    %cst_57 = arith.constant dense<0.000000e+00> : vector<64x16xf32>
    %56 = tpu.matmul %53, %55, %cst_57 {dimension_numbers = #tpu.dot_dimension_numbers<[1], [0], [0], [1], [0, 0, 1, 1], [], []>} : vector<64x4xf32>, vector<4x16xf32>, vector<64x16xf32> -> vector<64x16xf32>
    %57 = arith.addf %50, %56 : vector<64x16xf32>
    %c8 = arith.constant 8 : index
    %c0_58 = arith.constant 0 : index
    %c0_59 = arith.constant 0 : index
    %58 = vector.load %arg4[%c8, %c0_58, %c0_59] : memref<9x64x20xf32, #tpu.memory_space<vmem>>, vector<1x64x20xf32>
    %59 = vector.shape_cast %58 : vector<1x64x20xf32> to vector<64x20xf32>
    %cst_60 = arith.constant dense<0.000000e+00> : vector<64x4xf32>
    %60 = tpu.matmul %59, %0, %cst_60 {dimension_numbers = #tpu.dot_dimension_numbers<[1], [0], [0], [1], [0, 0, 1, 1], [], []>} : vector<64x20xf32>, vector<20x4xf32>, vector<64x4xf32> -> vector<64x4xf32>
    %c8_61 = arith.constant 8 : index
    %c0_62 = arith.constant 0 : index
    %c0_63 = arith.constant 0 : index
    %61 = vector.load %arg1[%c8_61, %c0_62, %c0_63] : memref<9x4x16xf32, #tpu.memory_space<vmem>>, vector<1x4x16xf32>
    %62 = vector.shape_cast %61 : vector<1x4x16xf32> to vector<4x16xf32>
    %cst_64 = arith.constant dense<0.000000e+00> : vector<64x16xf32>
    %63 = tpu.matmul %60, %62, %cst_64 {dimension_numbers = #tpu.dot_dimension_numbers<[1], [0], [0], [1], [0, 0, 1, 1], [], []>} : vector<64x4xf32>, vector<4x16xf32>, vector<64x16xf32> -> vector<64x16xf32>
    %64 = arith.addf %57, %63 : vector<64x16xf32>
    %c0_65 = arith.constant 0 : index
    %c0_66 = arith.constant 0 : index
    %65 = vector.load %arg8[%c0_65, %c0_66] : memref<64x1xf32, #tpu.memory_space<vmem>>, vector<64x1xf32>
    %66 = vector.broadcast %65 : vector<64x1xf32> to vector<64x16xf32>
    %67 = arith.addf %64, %66 : vector<64x16xf32>
    %68 = arith.negf %67 : vector<64x16xf32>
    %69 = math.exp %68 : vector<64x16xf32>
    %cst_67 = arith.constant 1.000000e+00 : f32
    %70 = vector.broadcast %cst_67 : f32 to vector<64x16xf32>
    %71 = arith.addf %70, %69 : vector<64x16xf32>
    %72 = arith.divf %70, %71 : vector<64x16xf32>
    %cst_68 = arith.constant 0.000000e+00 : f32
    %73 = vector.broadcast %cst_68 : f32 to vector<64x49xf32>
    %c0_69 = arith.constant 0 : index
    %c0_70 = arith.constant 0 : index
    %c0_71 = arith.constant 0 : index
    %74 = vector.load %arg5[%c0_69, %c0_70, %c0_71] : memref<9x64x64xf32, #tpu.memory_space<vmem>>, vector<1x64x64xf32>
    %75 = vector.shape_cast %74 : vector<1x64x64xf32> to vector<64x64xf32>
    %cst_72 = arith.constant dense<0.000000e+00> : vector<64x16xf32>
    %76 = tpu.matmul %75, %72, %cst_72 {dimension_numbers = #tpu.dot_dimension_numbers<[1], [0], [0], [1], [0, 0, 1, 1], [], []>} : vector<64x64xf32>, vector<64x16xf32>, vector<64x16xf32> -> vector<64x16xf32>
    %c0_73 = arith.constant 0 : index
    %c0_74 = arith.constant 0 : index
    %c0_75 = arith.constant 0 : index
    %77 = vector.load %arg2[%c0_73, %c0_74, %c0_75] : memref<9x16x49xf32, #tpu.memory_space<vmem>>, vector<1x16x49xf32>
    %78 = vector.shape_cast %77 : vector<1x16x49xf32> to vector<16x49xf32>
    %cst_76 = arith.constant dense<0.000000e+00> : vector<64x49xf32>
    %79 = tpu.matmul %76, %78, %cst_76 {dimension_numbers = #tpu.dot_dimension_numbers<[1], [0], [0], [1], [0, 0, 1, 1], [], []>} : vector<64x16xf32>, vector<16x49xf32>, vector<64x49xf32> -> vector<64x49xf32>
    %80 = arith.addf %73, %79 : vector<64x49xf32>
    %c1_77 = arith.constant 1 : index
    %c0_78 = arith.constant 0 : index
    %c0_79 = arith.constant 0 : index
    %81 = vector.load %arg5[%c1_77, %c0_78, %c0_79] : memref<9x64x64xf32, #tpu.memory_space<vmem>>, vector<1x64x64xf32>
    %82 = vector.shape_cast %81 : vector<1x64x64xf32> to vector<64x64xf32>
    %cst_80 = arith.constant dense<0.000000e+00> : vector<64x16xf32>
    %83 = tpu.matmul %82, %72, %cst_80 {dimension_numbers = #tpu.dot_dimension_numbers<[1], [0], [0], [1], [0, 0, 1, 1], [], []>} : vector<64x64xf32>, vector<64x16xf32>, vector<64x16xf32> -> vector<64x16xf32>
    %c1_81 = arith.constant 1 : index
    %c0_82 = arith.constant 0 : index
    %c0_83 = arith.constant 0 : index
    %84 = vector.load %arg2[%c1_81, %c0_82, %c0_83] : memref<9x16x49xf32, #tpu.memory_space<vmem>>, vector<1x16x49xf32>
    %85 = vector.shape_cast %84 : vector<1x16x49xf32> to vector<16x49xf32>
    %cst_84 = arith.constant dense<0.000000e+00> : vector<64x49xf32>
    %86 = tpu.matmul %83, %85, %cst_84 {dimension_numbers = #tpu.dot_dimension_numbers<[1], [0], [0], [1], [0, 0, 1, 1], [], []>} : vector<64x16xf32>, vector<16x49xf32>, vector<64x49xf32> -> vector<64x49xf32>
    %87 = arith.addf %80, %86 : vector<64x49xf32>
    %c2_85 = arith.constant 2 : index
    %c0_86 = arith.constant 0 : index
    %c0_87 = arith.constant 0 : index
    %88 = vector.load %arg5[%c2_85, %c0_86, %c0_87] : memref<9x64x64xf32, #tpu.memory_space<vmem>>, vector<1x64x64xf32>
    %89 = vector.shape_cast %88 : vector<1x64x64xf32> to vector<64x64xf32>
    %cst_88 = arith.constant dense<0.000000e+00> : vector<64x16xf32>
    %90 = tpu.matmul %89, %72, %cst_88 {dimension_numbers = #tpu.dot_dimension_numbers<[1], [0], [0], [1], [0, 0, 1, 1], [], []>} : vector<64x64xf32>, vector<64x16xf32>, vector<64x16xf32> -> vector<64x16xf32>
    %c2_89 = arith.constant 2 : index
    %c0_90 = arith.constant 0 : index
    %c0_91 = arith.constant 0 : index
    %91 = vector.load %arg2[%c2_89, %c0_90, %c0_91] : memref<9x16x49xf32, #tpu.memory_space<vmem>>, vector<1x16x49xf32>
    %92 = vector.shape_cast %91 : vector<1x16x49xf32> to vector<16x49xf32>
    %cst_92 = arith.constant dense<0.000000e+00> : vector<64x49xf32>
    %93 = tpu.matmul %90, %92, %cst_92 {dimension_numbers = #tpu.dot_dimension_numbers<[1], [0], [0], [1], [0, 0, 1, 1], [], []>} : vector<64x16xf32>, vector<16x49xf32>, vector<64x49xf32> -> vector<64x49xf32>
    %94 = arith.addf %87, %93 : vector<64x49xf32>
    %c3_93 = arith.constant 3 : index
    %c0_94 = arith.constant 0 : index
    %c0_95 = arith.constant 0 : index
    %95 = vector.load %arg5[%c3_93, %c0_94, %c0_95] : memref<9x64x64xf32, #tpu.memory_space<vmem>>, vector<1x64x64xf32>
    %96 = vector.shape_cast %95 : vector<1x64x64xf32> to vector<64x64xf32>
    %cst_96 = arith.constant dense<0.000000e+00> : vector<64x16xf32>
    %97 = tpu.matmul %96, %72, %cst_96 {dimension_numbers = #tpu.dot_dimension_numbers<[1], [0], [0], [1], [0, 0, 1, 1], [], []>} : vector<64x64xf32>, vector<64x16xf32>, vector<64x16xf32> -> vector<64x16xf32>
    %c3_97 = arith.constant 3 : index
    %c0_98 = arith.constant 0 : index
    %c0_99 = arith.constant 0 : index
    %98 = vector.load %arg2[%c3_97, %c0_98, %c0_99] : memref<9x16x49xf32, #tpu.memory_space<vmem>>, vector<1x16x49xf32>
    %99 = vector.shape_cast %98 : vector<1x16x49xf32> to vector<16x49xf32>
    %cst_100 = arith.constant dense<0.000000e+00> : vector<64x49xf32>
    %100 = tpu.matmul %97, %99, %cst_100 {dimension_numbers = #tpu.dot_dimension_numbers<[1], [0], [0], [1], [0, 0, 1, 1], [], []>} : vector<64x16xf32>, vector<16x49xf32>, vector<64x49xf32> -> vector<64x49xf32>
    %101 = arith.addf %94, %100 : vector<64x49xf32>
    %c4_101 = arith.constant 4 : index
    %c0_102 = arith.constant 0 : index
    %c0_103 = arith.constant 0 : index
    %102 = vector.load %arg5[%c4_101, %c0_102, %c0_103] : memref<9x64x64xf32, #tpu.memory_space<vmem>>, vector<1x64x64xf32>
    %103 = vector.shape_cast %102 : vector<1x64x64xf32> to vector<64x64xf32>
    %cst_104 = arith.constant dense<0.000000e+00> : vector<64x16xf32>
    %104 = tpu.matmul %103, %72, %cst_104 {dimension_numbers = #tpu.dot_dimension_numbers<[1], [0], [0], [1], [0, 0, 1, 1], [], []>} : vector<64x64xf32>, vector<64x16xf32>, vector<64x16xf32> -> vector<64x16xf32>
    %c4_105 = arith.constant 4 : index
    %c0_106 = arith.constant 0 : index
    %c0_107 = arith.constant 0 : index
    %105 = vector.load %arg2[%c4_105, %c0_106, %c0_107] : memref<9x16x49xf32, #tpu.memory_space<vmem>>, vector<1x16x49xf32>
    %106 = vector.shape_cast %105 : vector<1x16x49xf32> to vector<16x49xf32>
    %cst_108 = arith.constant dense<0.000000e+00> : vector<64x49xf32>
    %107 = tpu.matmul %104, %106, %cst_108 {dimension_numbers = #tpu.dot_dimension_numbers<[1], [0], [0], [1], [0, 0, 1, 1], [], []>} : vector<64x16xf32>, vector<16x49xf32>, vector<64x49xf32> -> vector<64x49xf32>
    %108 = arith.addf %101, %107 : vector<64x49xf32>
    %c5_109 = arith.constant 5 : index
    %c0_110 = arith.constant 0 : index
    %c0_111 = arith.constant 0 : index
    %109 = vector.load %arg5[%c5_109, %c0_110, %c0_111] : memref<9x64x64xf32, #tpu.memory_space<vmem>>, vector<1x64x64xf32>
    %110 = vector.shape_cast %109 : vector<1x64x64xf32> to vector<64x64xf32>
    %cst_112 = arith.constant dense<0.000000e+00> : vector<64x16xf32>
    %111 = tpu.matmul %110, %72, %cst_112 {dimension_numbers = #tpu.dot_dimension_numbers<[1], [0], [0], [1], [0, 0, 1, 1], [], []>} : vector<64x64xf32>, vector<64x16xf32>, vector<64x16xf32> -> vector<64x16xf32>
    %c5_113 = arith.constant 5 : index
    %c0_114 = arith.constant 0 : index
    %c0_115 = arith.constant 0 : index
    %112 = vector.load %arg2[%c5_113, %c0_114, %c0_115] : memref<9x16x49xf32, #tpu.memory_space<vmem>>, vector<1x16x49xf32>
    %113 = vector.shape_cast %112 : vector<1x16x49xf32> to vector<16x49xf32>
    %cst_116 = arith.constant dense<0.000000e+00> : vector<64x49xf32>
    %114 = tpu.matmul %111, %113, %cst_116 {dimension_numbers = #tpu.dot_dimension_numbers<[1], [0], [0], [1], [0, 0, 1, 1], [], []>} : vector<64x16xf32>, vector<16x49xf32>, vector<64x49xf32> -> vector<64x49xf32>
    %115 = arith.addf %108, %114 : vector<64x49xf32>
    %c6_117 = arith.constant 6 : index
    %c0_118 = arith.constant 0 : index
    %c0_119 = arith.constant 0 : index
    %116 = vector.load %arg5[%c6_117, %c0_118, %c0_119] : memref<9x64x64xf32, #tpu.memory_space<vmem>>, vector<1x64x64xf32>
    %117 = vector.shape_cast %116 : vector<1x64x64xf32> to vector<64x64xf32>
    %cst_120 = arith.constant dense<0.000000e+00> : vector<64x16xf32>
    %118 = tpu.matmul %117, %72, %cst_120 {dimension_numbers = #tpu.dot_dimension_numbers<[1], [0], [0], [1], [0, 0, 1, 1], [], []>} : vector<64x64xf32>, vector<64x16xf32>, vector<64x16xf32> -> vector<64x16xf32>
    %c6_121 = arith.constant 6 : index
    %c0_122 = arith.constant 0 : index
    %c0_123 = arith.constant 0 : index
    %119 = vector.load %arg2[%c6_121, %c0_122, %c0_123] : memref<9x16x49xf32, #tpu.memory_space<vmem>>, vector<1x16x49xf32>
    %120 = vector.shape_cast %119 : vector<1x16x49xf32> to vector<16x49xf32>
    %cst_124 = arith.constant dense<0.000000e+00> : vector<64x49xf32>
    %121 = tpu.matmul %118, %120, %cst_124 {dimension_numbers = #tpu.dot_dimension_numbers<[1], [0], [0], [1], [0, 0, 1, 1], [], []>} : vector<64x16xf32>, vector<16x49xf32>, vector<64x49xf32> -> vector<64x49xf32>
    %122 = arith.addf %115, %121 : vector<64x49xf32>
    %c7_125 = arith.constant 7 : index
    %c0_126 = arith.constant 0 : index
    %c0_127 = arith.constant 0 : index
    %123 = vector.load %arg5[%c7_125, %c0_126, %c0_127] : memref<9x64x64xf32, #tpu.memory_space<vmem>>, vector<1x64x64xf32>
    %124 = vector.shape_cast %123 : vector<1x64x64xf32> to vector<64x64xf32>
    %cst_128 = arith.constant dense<0.000000e+00> : vector<64x16xf32>
    %125 = tpu.matmul %124, %72, %cst_128 {dimension_numbers = #tpu.dot_dimension_numbers<[1], [0], [0], [1], [0, 0, 1, 1], [], []>} : vector<64x64xf32>, vector<64x16xf32>, vector<64x16xf32> -> vector<64x16xf32>
    %c7_129 = arith.constant 7 : index
    %c0_130 = arith.constant 0 : index
    %c0_131 = arith.constant 0 : index
    %126 = vector.load %arg2[%c7_129, %c0_130, %c0_131] : memref<9x16x49xf32, #tpu.memory_space<vmem>>, vector<1x16x49xf32>
    %127 = vector.shape_cast %126 : vector<1x16x49xf32> to vector<16x49xf32>
    %cst_132 = arith.constant dense<0.000000e+00> : vector<64x49xf32>
    %128 = tpu.matmul %125, %127, %cst_132 {dimension_numbers = #tpu.dot_dimension_numbers<[1], [0], [0], [1], [0, 0, 1, 1], [], []>} : vector<64x16xf32>, vector<16x49xf32>, vector<64x49xf32> -> vector<64x49xf32>
    %129 = arith.addf %122, %128 : vector<64x49xf32>
    %c8_133 = arith.constant 8 : index
    %c0_134 = arith.constant 0 : index
    %c0_135 = arith.constant 0 : index
    %130 = vector.load %arg5[%c8_133, %c0_134, %c0_135] : memref<9x64x64xf32, #tpu.memory_space<vmem>>, vector<1x64x64xf32>
    %131 = vector.shape_cast %130 : vector<1x64x64xf32> to vector<64x64xf32>
    %cst_136 = arith.constant dense<0.000000e+00> : vector<64x16xf32>
    %132 = tpu.matmul %131, %72, %cst_136 {dimension_numbers = #tpu.dot_dimension_numbers<[1], [0], [0], [1], [0, 0, 1, 1], [], []>} : vector<64x64xf32>, vector<64x16xf32>, vector<64x16xf32> -> vector<64x16xf32>
    %c8_137 = arith.constant 8 : index
    %c0_138 = arith.constant 0 : index
    %c0_139 = arith.constant 0 : index
    %133 = vector.load %arg2[%c8_137, %c0_138, %c0_139] : memref<9x16x49xf32, #tpu.memory_space<vmem>>, vector<1x16x49xf32>
    %134 = vector.shape_cast %133 : vector<1x16x49xf32> to vector<16x49xf32>
    %cst_140 = arith.constant dense<0.000000e+00> : vector<64x49xf32>
    %135 = tpu.matmul %132, %134, %cst_140 {dimension_numbers = #tpu.dot_dimension_numbers<[1], [0], [0], [1], [0, 0, 1, 1], [], []>} : vector<64x16xf32>, vector<16x49xf32>, vector<64x49xf32> -> vector<64x49xf32>
    %136 = arith.addf %129, %135 : vector<64x49xf32>
    %c0_141 = arith.constant 0 : index
    %c0_142 = arith.constant 0 : index
    %137 = vector.load %arg9[%c0_141, %c0_142] : memref<64x1xf32, #tpu.memory_space<vmem>>, vector<64x1xf32>
    %138 = vector.broadcast %137 : vector<64x1xf32> to vector<64x49xf32>
    %139 = arith.addf %136, %138 : vector<64x49xf32>
    %140 = arith.negf %139 : vector<64x49xf32>
    %141 = math.exp %140 : vector<64x49xf32>
    %cst_143 = arith.constant 1.000000e+00 : f32
    %142 = vector.broadcast %cst_143 : f32 to vector<64x49xf32>
    %143 = arith.addf %142, %141 : vector<64x49xf32>
    %144 = arith.divf %142, %143 : vector<64x49xf32>
    %cst_144 = arith.constant 0.000000e+00 : f32
    %145 = vector.broadcast %cst_144 : f32 to vector<64x196xf32>
    %c0_145 = arith.constant 0 : index
    %c0_146 = arith.constant 0 : index
    %c0_147 = arith.constant 0 : index
    %146 = vector.load %arg6[%c0_145, %c0_146, %c0_147] : memref<9x64x64xf32, #tpu.memory_space<vmem>>, vector<1x64x64xf32>
    %147 = vector.shape_cast %146 : vector<1x64x64xf32> to vector<64x64xf32>
    %cst_148 = arith.constant dense<0.000000e+00> : vector<64x49xf32>
    %148 = tpu.matmul %147, %144, %cst_148 {dimension_numbers = #tpu.dot_dimension_numbers<[1], [0], [0], [1], [0, 0, 1, 1], [], []>} : vector<64x64xf32>, vector<64x49xf32>, vector<64x49xf32> -> vector<64x49xf32>
    %c0_149 = arith.constant 0 : index
    %c0_150 = arith.constant 0 : index
    %c0_151 = arith.constant 0 : index
    %149 = vector.load %arg3[%c0_149, %c0_150, %c0_151] : memref<9x49x196xf32, #tpu.memory_space<vmem>>, vector<1x49x196xf32>
    %150 = vector.shape_cast %149 : vector<1x49x196xf32> to vector<49x196xf32>
    %cst_152 = arith.constant dense<0.000000e+00> : vector<64x196xf32>
    %151 = tpu.matmul %148, %150, %cst_152 {dimension_numbers = #tpu.dot_dimension_numbers<[1], [0], [0], [1], [0, 0, 1, 1], [], []>} : vector<64x49xf32>, vector<49x196xf32>, vector<64x196xf32> -> vector<64x196xf32>
    %152 = arith.addf %145, %151 : vector<64x196xf32>
    %c1_153 = arith.constant 1 : index
    %c0_154 = arith.constant 0 : index
    %c0_155 = arith.constant 0 : index
    %153 = vector.load %arg6[%c1_153, %c0_154, %c0_155] : memref<9x64x64xf32, #tpu.memory_space<vmem>>, vector<1x64x64xf32>
    %154 = vector.shape_cast %153 : vector<1x64x64xf32> to vector<64x64xf32>
    %cst_156 = arith.constant dense<0.000000e+00> : vector<64x49xf32>
    %155 = tpu.matmul %154, %144, %cst_156 {dimension_numbers = #tpu.dot_dimension_numbers<[1], [0], [0], [1], [0, 0, 1, 1], [], []>} : vector<64x64xf32>, vector<64x49xf32>, vector<64x49xf32> -> vector<64x49xf32>
    %c1_157 = arith.constant 1 : index
    %c0_158 = arith.constant 0 : index
    %c0_159 = arith.constant 0 : index
    %156 = vector.load %arg3[%c1_157, %c0_158, %c0_159] : memref<9x49x196xf32, #tpu.memory_space<vmem>>, vector<1x49x196xf32>
    %157 = vector.shape_cast %156 : vector<1x49x196xf32> to vector<49x196xf32>
    %cst_160 = arith.constant dense<0.000000e+00> : vector<64x196xf32>
    %158 = tpu.matmul %155, %157, %cst_160 {dimension_numbers = #tpu.dot_dimension_numbers<[1], [0], [0], [1], [0, 0, 1, 1], [], []>} : vector<64x49xf32>, vector<49x196xf32>, vector<64x196xf32> -> vector<64x196xf32>
    %159 = arith.addf %152, %158 : vector<64x196xf32>
    %c2_161 = arith.constant 2 : index
    %c0_162 = arith.constant 0 : index
    %c0_163 = arith.constant 0 : index
    %160 = vector.load %arg6[%c2_161, %c0_162, %c0_163] : memref<9x64x64xf32, #tpu.memory_space<vmem>>, vector<1x64x64xf32>
    %161 = vector.shape_cast %160 : vector<1x64x64xf32> to vector<64x64xf32>
    %cst_164 = arith.constant dense<0.000000e+00> : vector<64x49xf32>
    %162 = tpu.matmul %161, %144, %cst_164 {dimension_numbers = #tpu.dot_dimension_numbers<[1], [0], [0], [1], [0, 0, 1, 1], [], []>} : vector<64x64xf32>, vector<64x49xf32>, vector<64x49xf32> -> vector<64x49xf32>
    %c2_165 = arith.constant 2 : index
    %c0_166 = arith.constant 0 : index
    %c0_167 = arith.constant 0 : index
    %163 = vector.load %arg3[%c2_165, %c0_166, %c0_167] : memref<9x49x196xf32, #tpu.memory_space<vmem>>, vector<1x49x196xf32>
    %164 = vector.shape_cast %163 : vector<1x49x196xf32> to vector<49x196xf32>
    %cst_168 = arith.constant dense<0.000000e+00> : vector<64x196xf32>
    %165 = tpu.matmul %162, %164, %cst_168 {dimension_numbers = #tpu.dot_dimension_numbers<[1], [0], [0], [1], [0, 0, 1, 1], [], []>} : vector<64x49xf32>, vector<49x196xf32>, vector<64x196xf32> -> vector<64x196xf32>
    %166 = arith.addf %159, %165 : vector<64x196xf32>
    %c3_169 = arith.constant 3 : index
    %c0_170 = arith.constant 0 : index
    %c0_171 = arith.constant 0 : index
    %167 = vector.load %arg6[%c3_169, %c0_170, %c0_171] : memref<9x64x64xf32, #tpu.memory_space<vmem>>, vector<1x64x64xf32>
    %168 = vector.shape_cast %167 : vector<1x64x64xf32> to vector<64x64xf32>
    %cst_172 = arith.constant dense<0.000000e+00> : vector<64x49xf32>
    %169 = tpu.matmul %168, %144, %cst_172 {dimension_numbers = #tpu.dot_dimension_numbers<[1], [0], [0], [1], [0, 0, 1, 1], [], []>} : vector<64x64xf32>, vector<64x49xf32>, vector<64x49xf32> -> vector<64x49xf32>
    %c3_173 = arith.constant 3 : index
    %c0_174 = arith.constant 0 : index
    %c0_175 = arith.constant 0 : index
    %170 = vector.load %arg3[%c3_173, %c0_174, %c0_175] : memref<9x49x196xf32, #tpu.memory_space<vmem>>, vector<1x49x196xf32>
    %171 = vector.shape_cast %170 : vector<1x49x196xf32> to vector<49x196xf32>
    %cst_176 = arith.constant dense<0.000000e+00> : vector<64x196xf32>
    %172 = tpu.matmul %169, %171, %cst_176 {dimension_numbers = #tpu.dot_dimension_numbers<[1], [0], [0], [1], [0, 0, 1, 1], [], []>} : vector<64x49xf32>, vector<49x196xf32>, vector<64x196xf32> -> vector<64x196xf32>
    %173 = arith.addf %166, %172 : vector<64x196xf32>
    %c4_177 = arith.constant 4 : index
    %c0_178 = arith.constant 0 : index
    %c0_179 = arith.constant 0 : index
    %174 = vector.load %arg6[%c4_177, %c0_178, %c0_179] : memref<9x64x64xf32, #tpu.memory_space<vmem>>, vector<1x64x64xf32>
    %175 = vector.shape_cast %174 : vector<1x64x64xf32> to vector<64x64xf32>
    %cst_180 = arith.constant dense<0.000000e+00> : vector<64x49xf32>
    %176 = tpu.matmul %175, %144, %cst_180 {dimension_numbers = #tpu.dot_dimension_numbers<[1], [0], [0], [1], [0, 0, 1, 1], [], []>} : vector<64x64xf32>, vector<64x49xf32>, vector<64x49xf32> -> vector<64x49xf32>
    %c4_181 = arith.constant 4 : index
    %c0_182 = arith.constant 0 : index
    %c0_183 = arith.constant 0 : index
    %177 = vector.load %arg3[%c4_181, %c0_182, %c0_183] : memref<9x49x196xf32, #tpu.memory_space<vmem>>, vector<1x49x196xf32>
    %178 = vector.shape_cast %177 : vector<1x49x196xf32> to vector<49x196xf32>
    %cst_184 = arith.constant dense<0.000000e+00> : vector<64x196xf32>
    %179 = tpu.matmul %176, %178, %cst_184 {dimension_numbers = #tpu.dot_dimension_numbers<[1], [0], [0], [1], [0, 0, 1, 1], [], []>} : vector<64x49xf32>, vector<49x196xf32>, vector<64x196xf32> -> vector<64x196xf32>
    %180 = arith.addf %173, %179 : vector<64x196xf32>
    %c5_185 = arith.constant 5 : index
    %c0_186 = arith.constant 0 : index
    %c0_187 = arith.constant 0 : index
    %181 = vector.load %arg6[%c5_185, %c0_186, %c0_187] : memref<9x64x64xf32, #tpu.memory_space<vmem>>, vector<1x64x64xf32>
    %182 = vector.shape_cast %181 : vector<1x64x64xf32> to vector<64x64xf32>
    %cst_188 = arith.constant dense<0.000000e+00> : vector<64x49xf32>
    %183 = tpu.matmul %182, %144, %cst_188 {dimension_numbers = #tpu.dot_dimension_numbers<[1], [0], [0], [1], [0, 0, 1, 1], [], []>} : vector<64x64xf32>, vector<64x49xf32>, vector<64x49xf32> -> vector<64x49xf32>
    %c5_189 = arith.constant 5 : index
    %c0_190 = arith.constant 0 : index
    %c0_191 = arith.constant 0 : index
    %184 = vector.load %arg3[%c5_189, %c0_190, %c0_191] : memref<9x49x196xf32, #tpu.memory_space<vmem>>, vector<1x49x196xf32>
    %185 = vector.shape_cast %184 : vector<1x49x196xf32> to vector<49x196xf32>
    %cst_192 = arith.constant dense<0.000000e+00> : vector<64x196xf32>
    %186 = tpu.matmul %183, %185, %cst_192 {dimension_numbers = #tpu.dot_dimension_numbers<[1], [0], [0], [1], [0, 0, 1, 1], [], []>} : vector<64x49xf32>, vector<49x196xf32>, vector<64x196xf32> -> vector<64x196xf32>
    %187 = arith.addf %180, %186 : vector<64x196xf32>
    %c6_193 = arith.constant 6 : index
    %c0_194 = arith.constant 0 : index
    %c0_195 = arith.constant 0 : index
    %188 = vector.load %arg6[%c6_193, %c0_194, %c0_195] : memref<9x64x64xf32, #tpu.memory_space<vmem>>, vector<1x64x64xf32>
    %189 = vector.shape_cast %188 : vector<1x64x64xf32> to vector<64x64xf32>
    %cst_196 = arith.constant dense<0.000000e+00> : vector<64x49xf32>
    %190 = tpu.matmul %189, %144, %cst_196 {dimension_numbers = #tpu.dot_dimension_numbers<[1], [0], [0], [1], [0, 0, 1, 1], [], []>} : vector<64x64xf32>, vector<64x49xf32>, vector<64x49xf32> -> vector<64x49xf32>
    %c6_197 = arith.constant 6 : index
    %c0_198 = arith.constant 0 : index
    %c0_199 = arith.constant 0 : index
    %191 = vector.load %arg3[%c6_197, %c0_198, %c0_199] : memref<9x49x196xf32, #tpu.memory_space<vmem>>, vector<1x49x196xf32>
    %192 = vector.shape_cast %191 : vector<1x49x196xf32> to vector<49x196xf32>
    %cst_200 = arith.constant dense<0.000000e+00> : vector<64x196xf32>
    %193 = tpu.matmul %190, %192, %cst_200 {dimension_numbers = #tpu.dot_dimension_numbers<[1], [0], [0], [1], [0, 0, 1, 1], [], []>} : vector<64x49xf32>, vector<49x196xf32>, vector<64x196xf32> -> vector<64x196xf32>
    %194 = arith.addf %187, %193 : vector<64x196xf32>
    %c7_201 = arith.constant 7 : index
    %c0_202 = arith.constant 0 : index
    %c0_203 = arith.constant 0 : index
    %195 = vector.load %arg6[%c7_201, %c0_202, %c0_203] : memref<9x64x64xf32, #tpu.memory_space<vmem>>, vector<1x64x64xf32>
    %196 = vector.shape_cast %195 : vector<1x64x64xf32> to vector<64x64xf32>
    %cst_204 = arith.constant dense<0.000000e+00> : vector<64x49xf32>
    %197 = tpu.matmul %196, %144, %cst_204 {dimension_numbers = #tpu.dot_dimension_numbers<[1], [0], [0], [1], [0, 0, 1, 1], [], []>} : vector<64x64xf32>, vector<64x49xf32>, vector<64x49xf32> -> vector<64x49xf32>
    %c7_205 = arith.constant 7 : index
    %c0_206 = arith.constant 0 : index
    %c0_207 = arith.constant 0 : index
    %198 = vector.load %arg3[%c7_205, %c0_206, %c0_207] : memref<9x49x196xf32, #tpu.memory_space<vmem>>, vector<1x49x196xf32>
    %199 = vector.shape_cast %198 : vector<1x49x196xf32> to vector<49x196xf32>
    %cst_208 = arith.constant dense<0.000000e+00> : vector<64x196xf32>
    %200 = tpu.matmul %197, %199, %cst_208 {dimension_numbers = #tpu.dot_dimension_numbers<[1], [0], [0], [1], [0, 0, 1, 1], [], []>} : vector<64x49xf32>, vector<49x196xf32>, vector<64x196xf32> -> vector<64x196xf32>
    %201 = arith.addf %194, %200 : vector<64x196xf32>
    %c8_209 = arith.constant 8 : index
    %c0_210 = arith.constant 0 : index
    %c0_211 = arith.constant 0 : index
    %202 = vector.load %arg6[%c8_209, %c0_210, %c0_211] : memref<9x64x64xf32, #tpu.memory_space<vmem>>, vector<1x64x64xf32>
    %203 = vector.shape_cast %202 : vector<1x64x64xf32> to vector<64x64xf32>
    %cst_212 = arith.constant dense<0.000000e+00> : vector<64x49xf32>
    %204 = tpu.matmul %203, %144, %cst_212 {dimension_numbers = #tpu.dot_dimension_numbers<[1], [0], [0], [1], [0, 0, 1, 1], [], []>} : vector<64x64xf32>, vector<64x49xf32>, vector<64x49xf32> -> vector<64x49xf32>
    %c8_213 = arith.constant 8 : index
    %c0_214 = arith.constant 0 : index
    %c0_215 = arith.constant 0 : index
    %205 = vector.load %arg3[%c8_213, %c0_214, %c0_215] : memref<9x49x196xf32, #tpu.memory_space<vmem>>, vector<1x49x196xf32>
    %206 = vector.shape_cast %205 : vector<1x49x196xf32> to vector<49x196xf32>
    %cst_216 = arith.constant dense<0.000000e+00> : vector<64x196xf32>
    %207 = tpu.matmul %204, %206, %cst_216 {dimension_numbers = #tpu.dot_dimension_numbers<[1], [0], [0], [1], [0, 0, 1, 1], [], []>} : vector<64x49xf32>, vector<49x196xf32>, vector<64x196xf32> -> vector<64x196xf32>
    %208 = arith.addf %201, %207 : vector<64x196xf32>
    %c0_217 = arith.constant 0 : index
    %c0_218 = arith.constant 0 : index
    %209 = vector.load %arg10[%c0_217, %c0_218] : memref<64x1xf32, #tpu.memory_space<vmem>>, vector<64x1xf32>
    %210 = vector.broadcast %209 : vector<64x1xf32> to vector<64x196xf32>
    %211 = arith.addf %208, %210 : vector<64x196xf32>
    %212 = arith.negf %211 : vector<64x196xf32>
    %213 = math.exp %212 : vector<64x196xf32>
    %cst_219 = arith.constant 1.000000e+00 : f32
    %214 = vector.broadcast %cst_219 : f32 to vector<64x196xf32>
    %215 = arith.addf %214, %213 : vector<64x196xf32>
    %216 = arith.divf %214, %215 : vector<64x196xf32>
    %c0_220 = arith.constant 0 : index
    %c0_221 = arith.constant 0 : index
    %217 = vector.load %arg7[%c0_220, %c0_221] : memref<18x64xf32, #tpu.memory_space<vmem>>, vector<18x64xf32>
    %cst_222 = arith.constant dense<0.000000e+00> : vector<18x196xf32>
    %218 = tpu.matmul %217, %216, %cst_222 {dimension_numbers = #tpu.dot_dimension_numbers<[1], [0], [0], [1], [0, 0, 1, 1], [], []>} : vector<18x64xf32>, vector<64x196xf32>, vector<18x196xf32> -> vector<18x196xf32>
    %cst_223 = arith.constant 0.000000e+00 : f32
    %219 = vector.broadcast %cst_223 : f32 to vector<18x224xf32>
    %c0_224 = arith.constant 0 : index
    %c0_225 = arith.constant 0 : index
    %220 = vector.load %arg14[%c0_224, %c0_225] : memref<18x224xf32, #tpu.memory_space<vmem>>, vector<18x224xf32>
    tpu.vector_store %arg14[%c0_224, %c0_225], %219 {strides = array<i32>} : memref<18x224xf32, #tpu.memory_space<vmem>>, vector<18x224xf32>,
    %c0_226 = arith.constant 0 : index
    %c0_227 = arith.constant 0 : index
    %221 = vector.load %arg14[%c0_226, %c0_227] : memref<18x224xf32, #tpu.memory_space<vmem>>, vector<18x196xf32>
    tpu.vector_store %arg14[%c0_226, %c0_227], %218 {strides = array<i32>} : memref<18x224xf32, #tpu.memory_space<vmem>>, vector<18x196xf32>,
    %c0_228 = arith.constant 0 : index
    %c0_229 = arith.constant 0 : index
    %222 = vector.load %arg12[%c0_228, %c0_229] : memref<1x196xf32, #tpu.memory_space<vmem>>, vector<1x196xf32>
    %c0_230 = arith.constant 0 : index
    %c0_231 = arith.constant 0 : index
    %223 = vector.load %arg11[%c0_230, %c0_231] : memref<1x1xf32, #tpu.memory_space<vmem>>, vector<1x1xf32>
    %c4_232 = arith.constant 4 : index
    %c0_233 = arith.constant 0 : index
    %224 = vector.load %arg14[%c4_232, %c0_233] : memref<18x224xf32, #tpu.memory_space<vmem>>, vector<1x196xf32>
    %c5_234 = arith.constant 5 : index
    %c0_235 = arith.constant 0 : index
    %225 = vector.load %arg14[%c5_234, %c0_235] : memref<18x224xf32, #tpu.memory_space<vmem>>, vector<1x196xf32>
    %c3_236 = arith.constant 3 : index
    %c1_237 = arith.constant 1 : index
    %226 = vector.load %arg14[%c3_236, %c1_237] : memref<18x224xf32, #tpu.memory_space<vmem>>, vector<1x196xf32>
    %227 = arith.mulf %226, %222 : vector<1x196xf32>
    %228 = arith.addf %225, %227 : vector<1x196xf32>
    %c7_238 = arith.constant 7 : index
    %c0_239 = arith.constant 0 : index
    %229 = vector.load %arg14[%c7_238, %c0_239] : memref<18x224xf32, #tpu.memory_space<vmem>>, vector<1x196xf32>
    %c1_240 = arith.constant 1 : index
    %c14 = arith.constant 14 : index
    %230 = vector.load %arg14[%c1_240, %c14] : memref<18x224xf32, #tpu.memory_space<vmem>>, vector<1x196xf32>
    %231 = arith.addf %229, %230 : vector<1x196xf32>
    %c8_241 = arith.constant 8 : index
    %c0_242 = arith.constant 0 : index
    %232 = vector.load %arg14[%c8_241, %c0_242] : memref<18x224xf32, #tpu.memory_space<vmem>>, vector<1x196xf32>
    %c6_243 = arith.constant 6 : index
    %c1_244 = arith.constant 1 : index
    %233 = vector.load %arg14[%c6_243, %c1_244] : memref<18x224xf32, #tpu.memory_space<vmem>>, vector<1x196xf32>
    %234 = arith.mulf %233, %222 : vector<1x196xf32>
    %235 = arith.addf %232, %234 : vector<1x196xf32>
    %c2_245 = arith.constant 2 : index
    %c14_246 = arith.constant 14 : index
    %236 = vector.load %arg14[%c2_245, %c14_246] : memref<18x224xf32, #tpu.memory_space<vmem>>, vector<1x196xf32>
    %237 = arith.addf %235, %236 : vector<1x196xf32>
    %c0_247 = arith.constant 0 : index
    %c15 = arith.constant 15 : index
    %238 = vector.load %arg14[%c0_247, %c15] : memref<18x224xf32, #tpu.memory_space<vmem>>, vector<1x196xf32>
    %239 = arith.mulf %238, %222 : vector<1x196xf32>
    %240 = arith.addf %237, %239 : vector<1x196xf32>
    %241 = vector.broadcast %223 : vector<1x1xf32> to vector<1x196xf32>
    %242 = arith.addf %224, %241 : vector<1x196xf32>
    %243 = arith.negf %242 : vector<1x196xf32>
    %244 = math.exp %243 : vector<1x196xf32>
    %cst_248 = arith.constant 1.000000e+00 : f32
    %245 = vector.broadcast %cst_248 : f32 to vector<1x196xf32>
    %246 = arith.addf %245, %244 : vector<1x196xf32>
    %247 = arith.divf %245, %246 : vector<1x196xf32>
    %c0_249 = arith.constant 0 : index
    %c0_250 = arith.constant 0 : index
    %248 = vector.load %arg13[%c0_249, %c0_250] : memref<8x196xf32, #tpu.memory_space<vmem>>, vector<1x196xf32>
    tpu.vector_store %arg13[%c0_249, %c0_250], %247 {strides = array<i32>} : memref<8x196xf32, #tpu.memory_space<vmem>>, vector<1x196xf32>,
    %249 = vector.broadcast %223 : vector<1x1xf32> to vector<1x196xf32>
    %250 = arith.addf %228, %249 : vector<1x196xf32>
    %251 = arith.negf %250 : vector<1x196xf32>
    %252 = math.exp %251 : vector<1x196xf32>
    %cst_251 = arith.constant 1.000000e+00 : f32
    %253 = vector.broadcast %cst_251 : f32 to vector<1x196xf32>
    %254 = arith.addf %253, %252 : vector<1x196xf32>
    %255 = arith.divf %253, %254 : vector<1x196xf32>
    %c1_252 = arith.constant 1 : index
    %c0_253 = arith.constant 0 : index
    %256 = vector.load %arg13[%c1_252, %c0_253] : memref<8x196xf32, #tpu.memory_space<vmem>>, vector<1x196xf32>
    tpu.vector_store %arg13[%c1_252, %c0_253], %255 {strides = array<i32>} : memref<8x196xf32, #tpu.memory_space<vmem>>, vector<1x196xf32>,
    %257 = vector.broadcast %223 : vector<1x1xf32> to vector<1x196xf32>
    %258 = arith.addf %231, %257 : vector<1x196xf32>
    %259 = arith.negf %258 : vector<1x196xf32>
    %260 = math.exp %259 : vector<1x196xf32>
    %cst_254 = arith.constant 1.000000e+00 : f32
    %261 = vector.broadcast %cst_254 : f32 to vector<1x196xf32>
    %262 = arith.addf %261, %260 : vector<1x196xf32>
    %263 = arith.divf %261, %262 : vector<1x196xf32>
    %c2_255 = arith.constant 2 : index
    %c0_256 = arith.constant 0 : index
    %264 = vector.load %arg13[%c2_255, %c0_256] : memref<8x196xf32, #tpu.memory_space<vmem>>, vector<1x196xf32>
    tpu.vector_store %arg13[%c2_255, %c0_256], %263 {strides = array<i32>} : memref<8x196xf32, #tpu.memory_space<vmem>>, vector<1x196xf32>,
    %265 = vector.broadcast %223 : vector<1x1xf32> to vector<1x196xf32>
    %266 = arith.addf %240, %265 : vector<1x196xf32>
    %267 = arith.negf %266 : vector<1x196xf32>
    %268 = math.exp %267 : vector<1x196xf32>
    %cst_257 = arith.constant 1.000000e+00 : f32
    %269 = vector.broadcast %cst_257 : f32 to vector<1x196xf32>
    %270 = arith.addf %269, %268 : vector<1x196xf32>
    %271 = arith.divf %269, %270 : vector<1x196xf32>
    %c3_258 = arith.constant 3 : index
    %c0_259 = arith.constant 0 : index
    %272 = vector.load %arg13[%c3_258, %c0_259] : memref<8x196xf32, #tpu.memory_space<vmem>>, vector<1x196xf32>
    tpu.vector_store %arg13[%c3_258, %c0_259], %271 {strides = array<i32>} : memref<8x196xf32, #tpu.memory_space<vmem>>, vector<1x196xf32>,
    %c13 = arith.constant 13 : index
    %c0_260 = arith.constant 0 : index
    %273 = vector.load %arg14[%c13, %c0_260] : memref<18x224xf32, #tpu.memory_space<vmem>>, vector<1x196xf32>
    %c14_261 = arith.constant 14 : index
    %c0_262 = arith.constant 0 : index
    %274 = vector.load %arg14[%c14_261, %c0_262] : memref<18x224xf32, #tpu.memory_space<vmem>>, vector<1x196xf32>
    %c12 = arith.constant 12 : index
    %c1_263 = arith.constant 1 : index
    %275 = vector.load %arg14[%c12, %c1_263] : memref<18x224xf32, #tpu.memory_space<vmem>>, vector<1x196xf32>
    %276 = arith.mulf %275, %222 : vector<1x196xf32>
    %277 = arith.addf %274, %276 : vector<1x196xf32>
    %c16 = arith.constant 16 : index
    %c0_264 = arith.constant 0 : index
    %278 = vector.load %arg14[%c16, %c0_264] : memref<18x224xf32, #tpu.memory_space<vmem>>, vector<1x196xf32>
    %c10 = arith.constant 10 : index
    %c14_265 = arith.constant 14 : index
    %279 = vector.load %arg14[%c10, %c14_265] : memref<18x224xf32, #tpu.memory_space<vmem>>, vector<1x196xf32>
    %280 = arith.addf %278, %279 : vector<1x196xf32>
    %c17 = arith.constant 17 : index
    %c0_266 = arith.constant 0 : index
    %281 = vector.load %arg14[%c17, %c0_266] : memref<18x224xf32, #tpu.memory_space<vmem>>, vector<1x196xf32>
    %c15_267 = arith.constant 15 : index
    %c1_268 = arith.constant 1 : index
    %282 = vector.load %arg14[%c15_267, %c1_268] : memref<18x224xf32, #tpu.memory_space<vmem>>, vector<1x196xf32>
    %283 = arith.mulf %282, %222 : vector<1x196xf32>
    %284 = arith.addf %281, %283 : vector<1x196xf32>
    %c11 = arith.constant 11 : index
    %c14_269 = arith.constant 14 : index
    %285 = vector.load %arg14[%c11, %c14_269] : memref<18x224xf32, #tpu.memory_space<vmem>>, vector<1x196xf32>
    %286 = arith.addf %284, %285 : vector<1x196xf32>
    %c9 = arith.constant 9 : index
    %c15_270 = arith.constant 15 : index
    %287 = vector.load %arg14[%c9, %c15_270] : memref<18x224xf32, #tpu.memory_space<vmem>>, vector<1x196xf32>
    %288 = arith.mulf %287, %222 : vector<1x196xf32>
    %289 = arith.addf %286, %288 : vector<1x196xf32>
    %290 = vector.broadcast %223 : vector<1x1xf32> to vector<1x196xf32>
    %291 = arith.addf %273, %290 : vector<1x196xf32>
    %292 = arith.negf %291 : vector<1x196xf32>
    %293 = math.exp %292 : vector<1x196xf32>
    %cst_271 = arith.constant 1.000000e+00 : f32
    %294 = vector.broadcast %cst_271 : f32 to vector<1x196xf32>
    %295 = arith.addf %294, %293 : vector<1x196xf32>
    %296 = arith.divf %294, %295 : vector<1x196xf32>
    %c4_272 = arith.constant 4 : index
    %c0_273 = arith.constant 0 : index
    %297 = vector.load %arg13[%c4_272, %c0_273] : memref<8x196xf32, #tpu.memory_space<vmem>>, vector<1x196xf32>
    tpu.vector_store %arg13[%c4_272, %c0_273], %296 {strides = array<i32>} : memref<8x196xf32, #tpu.memory_space<vmem>>, vector<1x196xf32>,
    %298 = vector.broadcast %223 : vector<1x1xf32> to vector<1x196xf32>
    %299 = arith.addf %277, %298 : vector<1x196xf32>
    %300 = arith.negf %299 : vector<1x196xf32>
    %301 = math.exp %300 : vector<1x196xf32>
    %cst_274 = arith.constant 1.000000e+00 : f32
    %302 = vector.broadcast %cst_274 : f32 to vector<1x196xf32>
    %303 = arith.addf %302, %301 : vector<1x196xf32>
    %304 = arith.divf %302, %303 : vector<1x196xf32>
    %c5_275 = arith.constant 5 : index
    %c0_276 = arith.constant 0 : index
    %305 = vector.load %arg13[%c5_275, %c0_276] : memref<8x196xf32, #tpu.memory_space<vmem>>, vector<1x196xf32>
    tpu.vector_store %arg13[%c5_275, %c0_276], %304 {strides = array<i32>} : memref<8x196xf32, #tpu.memory_space<vmem>>, vector<1x196xf32>,
    %306 = vector.broadcast %223 : vector<1x1xf32> to vector<1x196xf32>
    %307 = arith.addf %280, %306 : vector<1x196xf32>
    %308 = arith.negf %307 : vector<1x196xf32>
    %309 = math.exp %308 : vector<1x196xf32>
    %cst_277 = arith.constant 1.000000e+00 : f32
    %310 = vector.broadcast %cst_277 : f32 to vector<1x196xf32>
    %311 = arith.addf %310, %309 : vector<1x196xf32>
    %312 = arith.divf %310, %311 : vector<1x196xf32>
    %c6_278 = arith.constant 6 : index
    %c0_279 = arith.constant 0 : index
    %313 = vector.load %arg13[%c6_278, %c0_279] : memref<8x196xf32, #tpu.memory_space<vmem>>, vector<1x196xf32>
    tpu.vector_store %arg13[%c6_278, %c0_279], %312 {strides = array<i32>} : memref<8x196xf32, #tpu.memory_space<vmem>>, vector<1x196xf32>,
    %314 = vector.broadcast %223 : vector<1x1xf32> to vector<1x196xf32>
    %315 = arith.addf %289, %314 : vector<1x196xf32>
    %316 = arith.negf %315 : vector<1x196xf32>
    %317 = math.exp %316 : vector<1x196xf32>
    %cst_280 = arith.constant 1.000000e+00 : f32
    %318 = vector.broadcast %cst_280 : f32 to vector<1x196xf32>
    %319 = arith.addf %318, %317 : vector<1x196xf32>
    %320 = arith.divf %318, %319 : vector<1x196xf32>
    %c7_281 = arith.constant 7 : index
    %c0_282 = arith.constant 0 : index
    %321 = vector.load %arg13[%c7_281, %c0_282] : memref<8x196xf32, #tpu.memory_space<vmem>>, vector<1x196xf32>
    tpu.vector_store %arg13[%c7_281, %c0_282], %320 {strides = array<i32>} : memref<8x196xf32, #tpu.memory_space<vmem>>, vector<1x196xf32>,
    return
  }
}

</mosaic_0001>

<llo_original>
// kernel: mul.46
$region0: #{mul.46}
  %s0 = inlined_call_operand.vmem [shape: f32[3,3,32], index: 0, kind: input, shape index: {}]
  %s1 = inlined_call_operand.vmem [shape: f32[9,32], index: 1, kind: output, shape index: {}]
  $region1: #{mul.46} parent=0
    #allocation0 [shape = 'u8[12288]{0}', space=vmem, size = 0x3000, scoped, tag = 'scoped mem for input reshape']
    %s3 = ssub.s32 16, 1
    %s4 = scalar_lea.vmem %s0, 8
    %v5 = vld [vmem:[%s4] sm:%s3]
    %s6 = scalar_lea.vmem [#allocation0], 16
    %7 = vst [vmem:[%s6] sm:%s3] %v5
    %s8 = scalar_lea.vmem %s0, 4
    %v9 = vld [vmem:[%s8] sm:%s3]
    %s10 = scalar_lea.vmem [#allocation0], 8
    %11 = vst [vmem:[%s10] sm:%s3] %v9
    %v12 = vld [vmem:[%s0] sm:%s3]
    %13 = vst [vmem:[#allocation0] sm:%s3] %v12
    %v14 = vld [vmem:[#allocation0] sm:$0x7]
    %vm15 = vcmask 261120
    %16 = vst.msk [vmem:[%s1] sm:$0x7] %vm15, %v14
    %s17 = scalar_lea.vmem [#allocation0], 8
    %v18 = vld [vmem:[%s17] sm:$0x7]
    %vm19 = vcmask 261120
    %s20 = scalar_lea.vmem %s1, 3
    %21 = vst.msk [vmem:[%s20] sm:$0x7] %vm19, %v18
    %s22 = scalar_lea.vmem [#allocation0], 16
    %v23 = vld [vmem:[%s22] sm:$0x7]
    %vm24 = vcmask 261120
    %s25 = scalar_lea.vmem %s1, 6
    %26 = vst.msk [vmem:[%s25] sm:$0x7] %vm24, %v23

// kernel: conv_decoder_forward.1
$region0: #{conv_decoder_forward.1}
  #allocation0 [shape = 'u32[]', space=smem, size = 0x4, offset = 0x4, fixed_abs, tag = 'smem constant byte address 0x4 - core index']
  #allocation1 [shape = 'u32[72,128]{1,0:T(1,128)}', space=vmem, size = 0x9000, scoped, tag = 'internal scratch']
  #allocation2 [shape = 'f32[18,224]{1,0:T(8,128)}', space=vmem, size = 0x6000, scoped, tag = 'scratch operand']
  #allocation3 [shape = 'f32[1,1]{1,0:T(1,128)S(1)}', space=vmem, size = 0x200, scoped, tag = 'scoped memory for conv_decoder_forward.1']
  %s0 = inlined_call_operand.vmem [shape: f32[20,4], index: 0, kind: input, shape index: {}]
  %s1 = inlined_call_operand.vmem [shape: f32[9,4,16], index: 1, kind: input, shape index: {}]
  %s2 = inlined_call_operand.vmem [shape: f32[9,16,49], index: 2, kind: input, shape index: {}]
  %s3 = inlined_call_operand.vmem [shape: f32[9,49,196], index: 3, kind: input, shape index: {}]
  %s4 = inlined_call_operand.vmem [shape: f32[9,64,20], index: 4, kind: input, shape index: {}]
  %s5 = inlined_call_operand.vmem [shape: f32[9,64,64], index: 5, kind: input, shape index: {}]
  %s6 = inlined_call_operand.vmem [shape: f32[9,64,64], index: 6, kind: input, shape index: {}]
  %s7 = inlined_call_operand.vmem [shape: f32[18,64], index: 7, kind: input, shape index: {}]
  %s8 = inlined_call_operand.vmem [shape: f32[64,1], index: 8, kind: input, shape index: {}]
  %s9 = inlined_call_operand.vmem [shape: f32[64,1], index: 9, kind: input, shape index: {}]
  %s10 = inlined_call_operand.vmem [shape: f32[64,1], index: 10, kind: input, shape index: {}]
  %s11 = inlined_call_operand.<no memory space> [shape: f32[1,1], index: 11, kind: input, shape index: {}]
  %s12 = inlined_call_operand.vmem [shape: f32[1,196], index: 12, kind: input, shape index: {}]
  %s13 = inlined_call_operand.vmem [shape: f32[8,196], index: 13, kind: output, shape index: {}]
  %s14 = sld [smem:[#allocation0]]
  $region62: #{conv_decoder_forward.1} parent=0
    _
  %s16 = ssub.s32 1, %s14
  %s17 = scalar_select 0, %s16, %s14
  %v18 = vstv %s11
  %19 = vst [vmem:[#allocation3] sm:$0x1] %v18
  // Predicated region
  $region2: #{conv_decoder_forward.1} parent=0 // pred_check
    _
  $region3: #{conv_decoder_forward.1} parent=0 // pred_check_branch
    %21 = sbr.rel (0) target = $region5
  $region4: #{conv_decoder_forward.1} parent=0 // pred_region
    _
  $region5: #{conv_decoder_forward.1} parent=0 // pred_fallthru
    _
  // Predicated region
  $region6: #{conv_decoder_forward.1} parent=0 // pred_check
    _
  $region7: #{conv_decoder_forward.1} parent=0 // pred_check_branch
    %23 = sbr.rel (0) target = $region9
  $region8: #{conv_decoder_forward.1} parent=0 // pred_region
    _
  $region9: #{conv_decoder_forward.1} parent=0 // pred_fallthru
    _
  // Predicated region
  $region10: #{conv_decoder_forward.1} parent=0 // pred_check
    _
  $region11: #{conv_decoder_forward.1} parent=0 // pred_check_branch
    %25 = sbr.rel (0) target = $region13
  $region12: #{conv_decoder_forward.1} parent=0 // pred_region
    _
  $region13: #{conv_decoder_forward.1} parent=0 // pred_fallthru
    _
  // Predicated region
  $region14: #{conv_decoder_forward.1} parent=0 // pred_check
    _
  $region15: #{conv_decoder_forward.1} parent=0 // pred_check_branch
    %27 = sbr.rel (0) target = $region17
  $region16: #{conv_decoder_forward.1} parent=0 // pred_region
    _
  $region17: #{conv_decoder_forward.1} parent=0 // pred_fallthru
    _
  // Predicated region
  $region18: #{conv_decoder_forward.1} parent=0 // pred_check
    _
  $region19: #{conv_decoder_forward.1} parent=0 // pred_check_branch
    %29 = sbr.rel (0) target = $region21
  $region20: #{conv_decoder_forward.1} parent=0 // pred_region
    _
  $region21: #{conv_decoder_forward.1} parent=0 // pred_fallthru
    _
  // Predicated region
  $region22: #{conv_decoder_forward.1} parent=0 // pred_check
    _
  $region23: #{conv_decoder_forward.1} parent=0 // pred_check_branch
    %31 = sbr.rel (0) target = $region25
  $region24: #{conv_decoder_forward.1} parent=0 // pred_region
    _
  $region25: #{conv_decoder_forward.1} parent=0 // pred_fallthru
    _
  // Predicated region
  $region26: #{conv_decoder_forward.1} parent=0 // pred_check
    _
  $region27: #{conv_decoder_forward.1} parent=0 // pred_check_branch
    %33 = sbr.rel (0) target = $region29
  $region28: #{conv_decoder_forward.1} parent=0 // pred_region
    _
  $region29: #{conv_decoder_forward.1} parent=0 // pred_fallthru
    _
  // Predicated region
  $region30: #{conv_decoder_forward.1} parent=0 // pred_check
    _
  $region31: #{conv_decoder_forward.1} parent=0 // pred_check_branch
    %35 = sbr.rel (0) target = $region33
  $region32: #{conv_decoder_forward.1} parent=0 // pred_region
    _
  $region33: #{conv_decoder_forward.1} parent=0 // pred_fallthru
    _
  // Predicated region
  $region34: #{conv_decoder_forward.1} parent=0 // pred_check
    _
  $region35: #{conv_decoder_forward.1} parent=0 // pred_check_branch
    %37 = sbr.rel (0) target = $region37
  $region36: #{conv_decoder_forward.1} parent=0 // pred_region
    _
  $region37: #{conv_decoder_forward.1} parent=0 // pred_fallthru
    _
  // Predicated region
  $region38: #{conv_decoder_forward.1} parent=0 // pred_check
    _
  $region39: #{conv_decoder_forward.1} parent=0 // pred_check_branch
    %39 = sbr.rel (0) target = $region41
  $region40: #{conv_decoder_forward.1} parent=0 // pred_region
    _
  $region41: #{conv_decoder_forward.1} parent=0 // pred_fallthru
    _
  // Predicated region
  $region42: #{conv_decoder_forward.1} parent=0 // pred_check
    _
  $region43: #{conv_decoder_forward.1} parent=0 // pred_check_branch
    %41 = sbr.rel (0) target = $region45
  $region44: #{conv_decoder_forward.1} parent=0 // pred_region
    _
  $region45: #{conv_decoder_forward.1} parent=0 // pred_fallthru
    _
  // Predicated region
  $region46: #{conv_decoder_forward.1} parent=0 // pred_check
    _
  $region47: #{conv_decoder_forward.1} parent=0 // pred_check_branch
    %43 = sbr.rel (0) target = $region49
  $region48: #{conv_decoder_forward.1} parent=0 // pred_region
    _
  $region49: #{conv_decoder_forward.1} parent=0 // pred_fallthru
    _
  // Predicated region
  $region50: #{conv_decoder_forward.1} parent=0 // pred_check
    _
  $region51: #{conv_decoder_forward.1} parent=0 // pred_check_branch
    %45 = sbr.rel (0) target = $region53
  $region52: #{conv_decoder_forward.1} parent=0 // pred_region
    _
  $region53: #{conv_decoder_forward.1} parent=0 // pred_fallthru
    _
  %v46 = vld [vmem:[%s0] sm:$0xff]
  %v47 = vld [vmem:[%s0 + $0x8] sm:$0xff]
  %v48 = vld [vmem:[%s0 + $0x10] sm:$0xf]
  %v49 = vld [vmem:[%s4] sm:$0xff]
  %v50 = vld [vmem:[%s4 + $0x8] sm:$0xff]
  %v51 = vld [vmem:[%s4 + $0x10] sm:$0xff]
  %v52 = vld [vmem:[%s4 + $0x18] sm:$0xff]
  %v53 = vld [vmem:[%s4 + $0x20] sm:$0xff]
  %v54 = vld [vmem:[%s4 + $0x28] sm:$0xff]
  %v55 = vld [vmem:[%s4 + $0x30] sm:$0xff]
  %v56 = vld [vmem:[%s4 + $0x38] sm:$0xff]
  %vm57 = vcmask 162816
  %v59 = vsel %vm57, %v49, 0
  %v62 = vsel %vm57, %v50, 0
  %v65 = vsel %vm57, %v51, 0
  %v68 = vsel %vm57, %v52, 0
  %v71 = vsel %vm57, %v53, 0
  %v74 = vsel %vm57, %v54, 0
  %v77 = vsel %vm57, %v55, 0
  %v80 = vsel %vm57, %v56, 0
  %vm82 = vcmask 1043456
  %v84 = vsel %vm82, %v48, 0
  %86 = vmatpush.msra.mxu0 0.0
  %87 = vmatpush.msra.mxu0 0.0
  %88 = vmatpush.msra.mxu0 0.0
  %89 = vmatpush.msra.mxu0 0.0
  %90 = vmatpush.msra.mxu0 0.0
  %91 = vmatpush.msra.mxu0 0.0
  %92 = vmatpush.msra.mxu0 0.0
  %93 = vmatpush.msra.mxu0 0.0
  %94 = vmatpush.msra.mxu0 0.0
  %95 = vmatpush.msra.mxu0 0.0
  %96 = vmatpush.msra.mxu0 0.0
  %97 = vmatpush.msra.mxu0 0.0
  %98 = vmatpush.msra.mxu0 0.0
  %99 = vmatpush.msra.mxu0 %v84
  %100 = vmatpush.msra.mxu0 %v47
  %101 = vmatpush.msra.mxu0 %v46
  %102 = vmatmul.f32.gmra.mxu0 %v59
  %v103 = vpop.f32.mrf.mxu0
  %v104 = vadd.f32 0.0, %v103
  %105 = vmatmul.f32.gmra.mxu0 %v62
  %v106 = vpop.f32.mrf.mxu0
  %v107 = vadd.f32 0.0, %v106
  %108 = vmatmul.f32.gmra.mxu0 %v65
  %v109 = vpop.f32.mrf.mxu0
  %v110 = vadd.f32 0.0, %v109
  %111 = vmatmul.f32.gmra.mxu0 %v68
  %v112 = vpop.f32.mrf.mxu0
  %v113 = vadd.f32 0.0, %v112
  %114 = vmatmul.f32.gmra.mxu0 %v71
  %v115 = vpop.f32.mrf.mxu0
  %v116 = vadd.f32 0.0, %v115
  %117 = vmatmul.f32.gmra.mxu0 %v74
  %v118 = vpop.f32.mrf.mxu0
  %v119 = vadd.f32 0.0, %v118
  %120 = vmatmul.f32.gmra.mxu0 %v77
  %v121 = vpop.f32.mrf.mxu0
  %v122 = vadd.f32 0.0, %v121
  %123 = vmatmul.f32.gmra.mxu0 %v80
  %v124 = vpop.f32.mrf.mxu0
  %v125 = vadd.f32 0.0, %v124
  %126 = vdwg.mxu0
  %v127 = vld [vmem:[%s1] sm:$0xf]
  %s128 = scalar_lea.vmem %s4, 64
  %v129 = vld [vmem:[%s128] sm:$0xff]
  %v130 = vld [vmem:[%s128 + $0x8] sm:$0xff]
  %v131 = vld [vmem:[%s128 + $0x10] sm:$0xff]
  %v132 = vld [vmem:[%s128 + $0x18] sm:$0xff]
  %v133 = vld [vmem:[%s128 + $0x20] sm:$0xff]
  %v134 = vld [vmem:[%s128 + $0x28] sm:$0xff]
  %v135 = vld [vmem:[%s128 + $0x30] sm:$0xff]
  %v136 = vld [vmem:[%s128 + $0x38] sm:$0xff]
  %v138 = vsel %vm57, %v129, 0
  %v141 = vsel %vm57, %v130, 0
  %v144 = vsel %vm57, %v131, 0
  %v147 = vsel %vm57, %v132, 0
  %v150 = vsel %vm57, %v133, 0
  %v153 = vsel %vm57, %v134, 0
  %v156 = vsel %vm57, %v135, 0
  %v159 = vsel %vm57, %v136, 0
  %161 = vmatpush.msra.mxu0 0.0
  %162 = vmatpush.msra.mxu0 0.0
  %163 = vmatpush.msra.mxu0 0.0
  %164 = vmatpush.msra.mxu0 0.0
  %165 = vmatpush.msra.mxu0 0.0
  %166 = vmatpush.msra.mxu0 0.0
  %167 = vmatpush.msra.mxu0 0.0
  %168 = vmatpush.msra.mxu0 0.0
  %169 = vmatpush.msra.mxu0 0.0
  %170 = vmatpush.msra.mxu0 0.0
  %171 = vmatpush.msra.mxu0 0.0
  %172 = vmatpush.msra.mxu0 0.0
  %173 = vmatpush.msra.mxu0 0.0
  %174 = vmatpush.msra.mxu0 %v84
  %175 = vmatpush.msra.mxu0 %v47
  %176 = vmatpush.msra.mxu0 %v46
  %177 = vmatmul.f32.gmra.mxu0 %v138
  %v178 = vpop.f32.mrf.mxu0
  %v179 = vadd.f32 0.0, %v178
  %180 = vmatmul.f32.gmra.mxu0 %v141
  %v181 = vpop.f32.mrf.mxu0
  %v182 = vadd.f32 0.0, %v181
  %183 = vmatmul.f32.gmra.mxu0 %v144
  %v184 = vpop.f32.mrf.mxu0
  %v185 = vadd.f32 0.0, %v184
  %186 = vmatmul.f32.gmra.mxu0 %v147
  %v187 = vpop.f32.mrf.mxu0
  %v188 = vadd.f32 0.0, %v187
  %189 = vmatmul.f32.gmra.mxu0 %v150
  %v190 = vpop.f32.mrf.mxu0
  %v191 = vadd.f32 0.0, %v190
  %192 = vmatmul.f32.gmra.mxu0 %v153
  %v193 = vpop.f32.mrf.mxu0
  %v194 = vadd.f32 0.0, %v193
  %195 = vmatmul.f32.gmra.mxu0 %v156
  %v196 = vpop.f32.mrf.mxu0
  %v197 = vadd.f32 0.0, %v196
  %198 = vmatmul.f32.gmra.mxu0 %v159
  %v199 = vpop.f32.mrf.mxu0
  %v200 = vadd.f32 0.0, %v199
  %201 = vdwg.mxu0
  %s202 = scalar_lea.vmem %s1, 4
  %v203 = vld [vmem:[%s202] sm:$0xf]
  %vm204 = vcmask 31744
  %v206 = vsel %vm204, %v179, 0
  %v209 = vsel %vm204, %v182, 0
  %v212 = vsel %vm204, %v185, 0
  %v215 = vsel %vm204, %v188, 0
  %v218 = vsel %vm204, %v191, 0
  %v221 = vsel %vm204, %v194, 0
  %v224 = vsel %vm204, %v197, 0
  %v227 = vsel %vm204, %v200, 0
  %v230 = vsel %vm82, %v203, 0
  %232 = vmatpush.msra.mxu0 0.0
  %233 = vmatpush.msra.mxu0 0.0
  %234 = vmatpush.msra.mxu0 0.0
  %235 = vmatpush.msra.mxu0 0.0
  %236 = vmatpush.msra.mxu0 0.0
  %237 = vmatpush.msra.mxu0 0.0
  %238 = vmatpush.msra.mxu0 0.0
  %239 = vmatpush.msra.mxu0 0.0
  %240 = vmatpush.msra.mxu0 0.0
  %241 = vmatpush.msra.mxu0 0.0
  %242 = vmatpush.msra.mxu0 0.0
  %243 = vmatpush.msra.mxu0 0.0
  %244 = vmatpush.msra.mxu0 0.0
  %245 = vmatpush.msra.mxu0 0.0
  %246 = vmatpush.msra.mxu0 0.0
  %247 = vmatpush.msra.mxu0 %v230
  %248 = vmatmul.f32.gmra.mxu0 %v206
  %v249 = vpop.f32.mrf.mxu0
  %v250 = vadd.f32 0.0, %v249
  %251 = vmatmul.f32.gmra.mxu0 %v209
  %v252 = vpop.f32.mrf.mxu0
  %v253 = vadd.f32 0.0, %v252
  %254 = vmatmul.f32.gmra.mxu0 %v212
  %v255 = vpop.f32.mrf.mxu0
  %v256 = vadd.f32 0.0, %v255
  %257 = vmatmul.f32.gmra.mxu0 %v215
  %v258 = vpop.f32.mrf.mxu0
  %v259 = vadd.f32 0.0, %v258
  %260 = vmatmul.f32.gmra.mxu0 %v218
  %v261 = vpop.f32.mrf.mxu0
  %v262 = vadd.f32 0.0, %v261
  %263 = vmatmul.f32.gmra.mxu0 %v221
  %v264 = vpop.f32.mrf.mxu0
  %v265 = vadd.f32 0.0, %v264
  %266 = vmatmul.f32.gmra.mxu0 %v224
  %v267 = vpop.f32.mrf.mxu0
  %v268 = vadd.f32 0.0, %v267
  %269 = vmatmul.f32.gmra.mxu0 %v227
  %v270 = vpop.f32.mrf.mxu0
  %v271 = vadd.f32 0.0, %v270
  %272 = vdwg.mxu0
  %v274 = vsel %vm204, %v104, 0
  %v277 = vsel %vm204, %v107, 0
  %v280 = vsel %vm204, %v110, 0
  %v283 = vsel %vm204, %v113, 0
  %v286 = vsel %vm204, %v116, 0
  %v289 = vsel %vm204, %v119, 0
  %v292 = vsel %vm204, %v122, 0
  %v295 = vsel %vm204, %v125, 0
  %v298 = vsel %vm82, %v127, 0
  %300 = vmatpush.msra.mxu0 0.0
  %301 = vmatpush.msra.mxu0 0.0
  %302 = vmatpush.msra.mxu0 0.0
  %303 = vmatpush.msra.mxu0 0.0
  %304 = vmatpush.msra.mxu0 0.0
  %305 = vmatpush.msra.mxu0 0.0
  %306 = vmatpush.msra.mxu0 0.0
  %307 = vmatpush.msra.mxu0 0.0
  %308 = vmatpush.msra.mxu0 0.0
  %309 = vmatpush.msra.mxu0 0.0
  %310 = vmatpush.msra.mxu0 0.0
  %311 = vmatpush.msra.mxu0 0.0
  %312 = vmatpush.msra.mxu0 0.0
  %313 = vmatpush.msra.mxu0 0.0
  %314 = vmatpush.msra.mxu0 0.0
  %315 = vmatpush.msra.mxu0 %v298
  %316 = vmatmul.f32.gmra.mxu0 %v274
  %v317 = vpop.f32.mrf.mxu0
  %v318 = vadd.f32 %v250, %v317
  %319 = vmatmul.f32.gmra.mxu0 %v277
  %v320 = vpop.f32.mrf.mxu0
  %v321 = vadd.f32 %v253, %v320
  %322 = vmatmul.f32.gmra.mxu0 %v280
  %v323 = vpop.f32.mrf.mxu0
  %v324 = vadd.f32 %v256, %v323
  %325 = vmatmul.f32.gmra.mxu0 %v283
  %v326 = vpop.f32.mrf.mxu0
  %v327 = vadd.f32 %v259, %v326
  %328 = vmatmul.f32.gmra.mxu0 %v286
  %v329 = vpop.f32.mrf.mxu0
  %v330 = vadd.f32 %v262, %v329
  %331 = vmatmul.f32.gmra.mxu0 %v289
  %v332 = vpop.f32.mrf.mxu0
  %v333 = vadd.f32 %v265, %v332
  %334 = vmatmul.f32.gmra.mxu0 %v292
  %v335 = vpop.f32.mrf.mxu0
  %v336 = vadd.f32 %v268, %v335
  %337 = vmatmul.f32.gmra.mxu0 %v295
  %v338 = vpop.f32.mrf.mxu0
  %v339 = vadd.f32 %v271, %v338
  %340 = vdwg.mxu0
  %s341 = scalar_lea.vmem %s4, 128
  %v342 = vld [vmem:[%s341] sm:$0xff]
  %v343 = vld [vmem:[%s341 + $0x8] sm:$0xff]
  %v344 = vld [vmem:[%s341 + $0x10] sm:$0xff]
  %v345 = vld [vmem:[%s341 + $0x18] sm:$0xff]
  %v346 = vld [vmem:[%s341 + $0x20] sm:$0xff]
  %v347 = vld [vmem:[%s341 + $0x28] sm:$0xff]
  %v348 = vld [vmem:[%s341 + $0x30] sm:$0xff]
  %v349 = vld [vmem:[%s341 + $0x38] sm:$0xff]
  %v351 = vsel %vm57, %v342, 0
  %v354 = vsel %vm57, %v343, 0
  %v357 = vsel %vm57, %v344, 0
  %v360 = vsel %vm57, %v345, 0
  %v363 = vsel %vm57, %v346, 0
  %v366 = vsel %vm57, %v347, 0
  %v369 = vsel %vm57, %v348, 0
  %v372 = vsel %vm57, %v349, 0
  %374 = vmatpush.msra.mxu0 0.0
  %375 = vmatpush.msra.mxu0 0.0
  %376 = vmatpush.msra.mxu0 0.0
  %377 = vmatpush.msra.mxu0 0.0
  %378 = vmatpush.msra.mxu0 0.0
  %379 = vmatpush.msra.mxu0 0.0
  %380 = vmatpush.msra.mxu0 0.0
  %381 = vmatpush.msra.mxu0 0.0
  %382 = vmatpush.msra.mxu0 0.0
  %383 = vmatpush.msra.mxu0 0.0
  %384 = vmatpush.msra.mxu0 0.0
  %385 = vmatpush.msra.mxu0 0.0
  %386 = vmatpush.msra.mxu0 0.0
  %387 = vmatpush.msra.mxu0 %v84
  %388 = vmatpush.msra.mxu0 %v47
  %389 = vmatpush.msra.mxu0 %v46
  %390 = vmatmul.f32.gmra.mxu0 %v351
  %v391 = vpop.f32.mrf.mxu0
  %v392 = vadd.f32 0.0, %v391
  %393 = vmatmul.f32.gmra.mxu0 %v354
  %v394 = vpop.f32.mrf.mxu0
  %v395 = vadd.f32 0.0, %v394
  %396 = vmatmul.f32.gmra.mxu0 %v357
  %v397 = vpop.f32.mrf.mxu0
  %v398 = vadd.f32 0.0, %v397
  %399 = vmatmul.f32.gmra.mxu0 %v360
  %v400 = vpop.f32.mrf.mxu0
  %v401 = vadd.f32 0.0, %v400
  %402 = vmatmul.f32.gmra.mxu0 %v363
  %v403 = vpop.f32.mrf.mxu0
  %v404 = vadd.f32 0.0, %v403
  %405 = vmatmul.f32.gmra.mxu0 %v366
  %v406 = vpop.f32.mrf.mxu0
  %v407 = vadd.f32 0.0, %v406
  %408 = vmatmul.f32.gmra.mxu0 %v369
  %v409 = vpop.f32.mrf.mxu0
  %v410 = vadd.f32 0.0, %v409
  %411 = vmatmul.f32.gmra.mxu0 %v372
  %v412 = vpop.f32.mrf.mxu0
  %v413 = vadd.f32 0.0, %v412
  %414 = vdwg.mxu0
  %s415 = scalar_lea.vmem %s1, 8
  %v416 = vld [vmem:[%s415] sm:$0xf]
  %v418 = vsel %vm204, %v392, 0
  %v421 = vsel %vm204, %v395, 0
  %v424 = vsel %vm204, %v398, 0
  %v427 = vsel %vm204, %v401, 0
  %v430 = vsel %vm204, %v404, 0
  %v433 = vsel %vm204, %v407, 0
  %v436 = vsel %vm204, %v410, 0
  %v439 = vsel %vm204, %v413, 0
  %v442 = vsel %vm82, %v416, 0
  %444 = vmatpush.msra.mxu0 0.0
  %445 = vmatpush.msra.mxu0 0.0
  %446 = vmatpush.msra.mxu0 0.0
  %447 = vmatpush.msra.mxu0 0.0
  %448 = vmatpush.msra.mxu0 0.0
  %449 = vmatpush.msra.mxu0 0.0
  %450 = vmatpush.msra.mxu0 0.0
  %451 = vmatpush.msra.mxu0 0.0
  %452 = vmatpush.msra.mxu0 0.0
  %453 = vmatpush.msra.mxu0 0.0
  %454 = vmatpush.msra.mxu0 0.0
  %455 = vmatpush.msra.mxu0 0.0
  %456 = vmatpush.msra.mxu0 0.0
  %457 = vmatpush.msra.mxu0 0.0
  %458 = vmatpush.msra.mxu0 0.0
  %459 = vmatpush.msra.mxu0 %v442
  %460 = vmatmul.f32.gmra.mxu0 %v418
  %v461 = vpop.f32.mrf.mxu0
  %v462 = vadd.f32 0.0, %v461
  %463 = vmatmul.f32.gmra.mxu0 %v421
  %v464 = vpop.f32.mrf.mxu0
  %v465 = vadd.f32 0.0, %v464
  %466 = vmatmul.f32.gmra.mxu0 %v424
  %v467 = vpop.f32.mrf.mxu0
  %v468 = vadd.f32 0.0, %v467
  %469 = vmatmul.f32.gmra.mxu0 %v427
  %v470 = vpop.f32.mrf.mxu0
  %v471 = vadd.f32 0.0, %v470
  %472 = vmatmul.f32.gmra.mxu0 %v430
  %v473 = vpop.f32.mrf.mxu0
  %v474 = vadd.f32 0.0, %v473
  %475 = vmatmul.f32.gmra.mxu0 %v433
  %v476 = vpop.f32.mrf.mxu0
  %v477 = vadd.f32 0.0, %v476
  %478 = vmatmul.f32.gmra.mxu0 %v436
  %v479 = vpop.f32.mrf.mxu0
  %v480 = vadd.f32 0.0, %v479
  %481 = vmatmul.f32.gmra.mxu0 %v439
  %v482 = vpop.f32.mrf.mxu0
  %v483 = vadd.f32 0.0, %v482
  %484 = vdwg.mxu0
  %v485 = vadd.f32 %v318, %v462
  %v486 = vadd.f32 %v321, %v465
  %v487 = vadd.f32 %v324, %v468
  %v488 = vadd.f32 %v327, %v471
  %v489 = vadd.f32 %v330, %v474
  %v490 = vadd.f32 %v333, %v477
  %v491 = vadd.f32 %v336, %v480
  %v492 = vadd.f32 %v339, %v483
  %s493 = scalar_lea.vmem %s4, 192
  %v494 = vld [vmem:[%s493] sm:$0xff]
  %v495 = vld [vmem:[%s493 + $0x8] sm:$0xff]
  %v496 = vld [vmem:[%s493 + $0x10] sm:$0xff]
  %v497 = vld [vmem:[%s493 + $0x18] sm:$0xff]
  %v498 = vld [vmem:[%s493 + $0x20] sm:$0xff]
  %v499 = vld [vmem:[%s493 + $0x28] sm:$0xff]
  %v500 = vld [vmem:[%s493 + $0x30] sm:$0xff]
  %v501 = vld [vmem:[%s493 + $0x38] sm:$0xff]
  %v503 = vsel %vm57, %v494, 0
  %v506 = vsel %vm57, %v495, 0
  %v509 = vsel %vm57, %v496, 0
  %v512 = vsel %vm57, %v497, 0
  %v515 = vsel %vm57, %v498, 0
  %v518 = vsel %vm57, %v499, 0
  %v521 = vsel %vm57, %v500, 0
  %v524 = vsel %vm57, %v501, 0
  %526 = vmatpush.msra.mxu0 0.0
  %527 = vmatpush.msra.mxu0 0.0
  %528 = vmatpush.msra.mxu0 0.0
  %529 = vmatpush.msra.mxu0 0.0
  %530 = vmatpush.msra.mxu0 0.0
  %531 = vmatpush.msra.mxu0 0.0
  %532 = vmatpush.msra.mxu0 0.0
  %533 = vmatpush.msra.mxu0 0.0
  %534 = vmatpush.msra.mxu0 0.0
  %535 = vmatpush.msra.mxu0 0.0
  %536 = vmatpush.msra.mxu0 0.0
  %537 = vmatpush.msra.mxu0 0.0
  %538 = vmatpush.msra.mxu0 0.0
  %539 = vmatpush.msra.mxu0 %v84
  %540 = vmatpush.msra.mxu0 %v47
  %541 = vmatpush.msra.mxu0 %v46
  %542 = vmatmul.f32.gmra.mxu0 %v503
  %v543 = vpop.f32.mrf.mxu0
  %v544 = vadd.f32 0.0, %v543
  %545 = vmatmul.f32.gmra.mxu0 %v506
  %v546 = vpop.f32.mrf.mxu0
  %v547 = vadd.f32 0.0, %v546
  %548 = vmatmul.f32.gmra.mxu0 %v509
  %v549 = vpop.f32.mrf.mxu0
  %v550 = vadd.f32 0.0, %v549
  %551 = vmatmul.f32.gmra.mxu0 %v512
  %v552 = vpop.f32.mrf.mxu0
  %v553 = vadd.f32 0.0, %v552
  %554 = vmatmul.f32.gmra.mxu0 %v515
  %v555 = vpop.f32.mrf.mxu0
  %v556 = vadd.f32 0.0, %v555
  %557 = vmatmul.f32.gmra.mxu0 %v518
  %v558 = vpop.f32.mrf.mxu0
  %v559 = vadd.f32 0.0, %v558
  %560 = vmatmul.f32.gmra.mxu0 %v521
  %v561 = vpop.f32.mrf.mxu0
  %v562 = vadd.f32 0.0, %v561
  %563 = vmatmul.f32.gmra.mxu0 %v524
  %v564 = vpop.f32.mrf.mxu0
  %v565 = vadd.f32 0.0, %v564
  %566 = vdwg.mxu0
  %s567 = scalar_lea.vmem %s1, 12
  %v568 = vld [vmem:[%s567] sm:$0xf]
  %v570 = vsel %vm204, %v544, 0
  %v573 = vsel %vm204, %v547, 0
  %v576 = vsel %vm204, %v550, 0
  %v579 = vsel %vm204, %v553, 0
  %v582 = vsel %vm204, %v556, 0
  %v585 = vsel %vm204, %v559, 0
  %v588 = vsel %vm204, %v562, 0
  %v591 = vsel %vm204, %v565, 0
  %v594 = vsel %vm82, %v568, 0
  %596 = vmatpush.msra.mxu0 0.0
  %597 = vmatpush.msra.mxu0 0.0
  %598 = vmatpush.msra.mxu0 0.0
  %599 = vmatpush.msra.mxu0 0.0
  %600 = vmatpush.msra.mxu0 0.0
  %601 = vmatpush.msra.mxu0 0.0
  %602 = vmatpush.msra.mxu0 0.0
  %603 = vmatpush.msra.mxu0 0.0
  %604 = vmatpush.msra.mxu0 0.0
  %605 = vmatpush.msra.mxu0 0.0
  %606 = vmatpush.msra.mxu0 0.0
  %607 = vmatpush.msra.mxu0 0.0
  %608 = vmatpush.msra.mxu0 0.0
  %609 = vmatpush.msra.mxu0 0.0
  %610 = vmatpush.msra.mxu0 0.0
  %611 = vmatpush.msra.mxu0 %v594
  %612 = vmatmul.f32.gmra.mxu0 %v570
  %v613 = vpop.f32.mrf.mxu0
  %v614 = vadd.f32 0.0, %v613
  %615 = vmatmul.f32.gmra.mxu0 %v573
  %v616 = vpop.f32.mrf.mxu0
  %v617 = vadd.f32 0.0, %v616
  %618 = vmatmul.f32.gmra.mxu0 %v576
  %v619 = vpop.f32.mrf.mxu0
  %v620 = vadd.f32 0.0, %v619
  %621 = vmatmul.f32.gmra.mxu0 %v579
  %v622 = vpop.f32.mrf.mxu0
  %v623 = vadd.f32 0.0, %v622
  %624 = vmatmul.f32.gmra.mxu0 %v582
  %v625 = vpop.f32.mrf.mxu0
  %v626 = vadd.f32 0.0, %v625
  %627 = vmatmul.f32.gmra.mxu0 %v585
  %v628 = vpop.f32.mrf.mxu0
  %v629 = vadd.f32 0.0, %v628
  %630 = vmatmul.f32.gmra.mxu0 %v588
  %v631 = vpop.f32.mrf.mxu0
  %v632 = vadd.f32 0.0, %v631
  %633 = vmatmul.f32.gmra.mxu0 %v591
  %v634 = vpop.f32.mrf.mxu0
  %v635 = vadd.f32 0.0, %v634
  %636 = vdwg.mxu0
  %v637 = vadd.f32 %v485, %v614
  %v638 = vadd.f32 %v486, %v617
  %v639 = vadd.f32 %v487, %v620
  %v640 = vadd.f32 %v488, %v623
  %v641 = vadd.f32 %v489, %v626
  %v642 = vadd.f32 %v490, %v629
  %v643 = vadd.f32 %v491, %v632
  %v644 = vadd.f32 %v492, %v635
  %s645 = scalar_lea.vmem %s4, 256
  %v646 = vld [vmem:[%s645] sm:$0xff]
  %v647 = vld [vmem:[%s645 + $0x8] sm:$0xff]
  %v648 = vld [vmem:[%s645 + $0x10] sm:$0xff]
  %v649 = vld [vmem:[%s645 + $0x18] sm:$0xff]
  %v650 = vld [vmem:[%s645 + $0x20] sm:$0xff]
  %v651 = vld [vmem:[%s645 + $0x28] sm:$0xff]
  %v652 = vld [vmem:[%s645 + $0x30] sm:$0xff]
  %v653 = vld [vmem:[%s645 + $0x38] sm:$0xff]
  %v655 = vsel %vm57, %v646, 0
  %v658 = vsel %vm57, %v647, 0
  %v661 = vsel %vm57, %v648, 0
  %v664 = vsel %vm57, %v649, 0
  %v667 = vsel %vm57, %v650, 0
  %v670 = vsel %vm57, %v651, 0
  %v673 = vsel %vm57, %v652, 0
  %v676 = vsel %vm57, %v653, 0
  %678 = vmatpush.msra.mxu0 0.0
  %679 = vmatpush.msra.mxu0 0.0
  %680 = vmatpush.msra.mxu0 0.0
  %681 = vmatpush.msra.mxu0 0.0
  %682 = vmatpush.msra.mxu0 0.0
  %683 = vmatpush.msra.mxu0 0.0
  %684 = vmatpush.msra.mxu0 0.0
  %685 = vmatpush.msra.mxu0 0.0
  %686 = vmatpush.msra.mxu0 0.0
  %687 = vmatpush.msra.mxu0 0.0
  %688 = vmatpush.msra.mxu0 0.0
  %689 = vmatpush.msra.mxu0 0.0
  %690 = vmatpush.msra.mxu0 0.0
  %691 = vmatpush.msra.mxu0 %v84
  %692 = vmatpush.msra.mxu0 %v47
  %693 = vmatpush.msra.mxu0 %v46
  %694 = vmatmul.f32.gmra.mxu0 %v655
  %v695 = vpop.f32.mrf.mxu0
  %v696 = vadd.f32 0.0, %v695
  %697 = vmatmul.f32.gmra.mxu0 %v658
  %v698 = vpop.f32.mrf.mxu0
  %v699 = vadd.f32 0.0, %v698
  %700 = vmatmul.f32.gmra.mxu0 %v661
  %v701 = vpop.f32.mrf.mxu0
  %v702 = vadd.f32 0.0, %v701
  %703 = vmatmul.f32.gmra.mxu0 %v664
  %v704 = vpop.f32.mrf.mxu0
  %v705 = vadd.f32 0.0, %v704
  %706 = vmatmul.f32.gmra.mxu0 %v667
  %v707 = vpop.f32.mrf.mxu0
  %v708 = vadd.f32 0.0, %v707
  %709 = vmatmul.f32.gmra.mxu0 %v670
  %v710 = vpop.f32.mrf.mxu0
  %v711 = vadd.f32 0.0, %v710
  %712 = vmatmul.f32.gmra.mxu0 %v673
  %v713 = vpop.f32.mrf.mxu0
  %v714 = vadd.f32 0.0, %v713
  %715 = vmatmul.f32.gmra.mxu0 %v676
  %v716 = vpop.f32.mrf.mxu0
  %v717 = vadd.f32 0.0, %v716
  %718 = vdwg.mxu0
  %s719 = scalar_lea.vmem %s1, 16
  %v720 = vld [vmem:[%s719] sm:$0xf]
  %v722 = vsel %vm204, %v696, 0
  %v725 = vsel %vm204, %v699, 0
  %v728 = vsel %vm204, %v702, 0
  %v731 = vsel %vm204, %v705, 0
  %v734 = vsel %vm204, %v708, 0
  %v737 = vsel %vm204, %v711, 0
  %v740 = vsel %vm204, %v714, 0
  %v743 = vsel %vm204, %v717, 0
  %v746 = vsel %vm82, %v720, 0
  %748 = vmatpush.msra.mxu0 0.0
  %749 = vmatpush.msra.mxu0 0.0
  %750 = vmatpush.msra.mxu0 0.0
  %751 = vmatpush.msra.mxu0 0.0
  %752 = vmatpush.msra.mxu0 0.0
  %753 = vmatpush.msra.mxu0 0.0
  %754 = vmatpush.msra.mxu0 0.0
  %755 = vmatpush.msra.mxu0 0.0
  %756 = vmatpush.msra.mxu0 0.0
  %757 = vmatpush.msra.mxu0 0.0
  %758 = vmatpush.msra.mxu0 0.0
  %759 = vmatpush.msra.mxu0 0.0
  %760 = vmatpush.msra.mxu0 0.0
  %761 = vmatpush.msra.mxu0 0.0
  %762 = vmatpush.msra.mxu0 0.0
  %763 = vmatpush.msra.mxu0 %v746
  %764 = vmatmul.f32.gmra.mxu0 %v722
  %v765 = vpop.f32.mrf.mxu0
  %v766 = vadd.f32 0.0, %v765
  %767 = vmatmul.f32.gmra.mxu0 %v725
  %v768 = vpop.f32.mrf.mxu0
  %v769 = vadd.f32 0.0, %v768
  %770 = vmatmul.f32.gmra.mxu0 %v728
  %v771 = vpop.f32.mrf.mxu0
  %v772 = vadd.f32 0.0, %v771
  %773 = vmatmul.f32.gmra.mxu0 %v731
  %v774 = vpop.f32.mrf.mxu0
  %v775 = vadd.f32 0.0, %v774
  %776 = vmatmul.f32.gmra.mxu0 %v734
  %v777 = vpop.f32.mrf.mxu0
  %v778 = vadd.f32 0.0, %v777
  %779 = vmatmul.f32.gmra.mxu0 %v737
  %v780 = vpop.f32.mrf.mxu0
  %v781 = vadd.f32 0.0, %v780
  %782 = vmatmul.f32.gmra.mxu0 %v740
  %v783 = vpop.f32.mrf.mxu0
  %v784 = vadd.f32 0.0, %v783
  %785 = vmatmul.f32.gmra.mxu0 %v743
  %v786 = vpop.f32.mrf.mxu0
  %v787 = vadd.f32 0.0, %v786
  %788 = vdwg.mxu0
  %v789 = vadd.f32 %v637, %v766
  %v790 = vadd.f32 %v638, %v769
  %v791 = vadd.f32 %v639, %v772
  %v792 = vadd.f32 %v640, %v775
  %v793 = vadd.f32 %v641, %v778
  %v794 = vadd.f32 %v642, %v781
  %v795 = vadd.f32 %v643, %v784
  %v796 = vadd.f32 %v644, %v787
  %s797 = scalar_lea.vmem %s4, 320
  %v798 = vld [vmem:[%s797] sm:$0xff]
  %v799 = vld [vmem:[%s797 + $0x8] sm:$0xff]
  %v800 = vld [vmem:[%s797 + $0x10] sm:$0xff]
  %v801 = vld [vmem:[%s797 + $0x18] sm:$0xff]
  %v802 = vld [vmem:[%s797 + $0x20] sm:$0xff]
  %v803 = vld [vmem:[%s797 + $0x28] sm:$0xff]
  %v804 = vld [vmem:[%s797 + $0x30] sm:$0xff]
  %v805 = vld [vmem:[%s797 + $0x38] sm:$0xff]
  %v807 = vsel %vm57, %v798, 0
  %v810 = vsel %vm57, %v799, 0
  %v813 = vsel %vm57, %v800, 0
  %v816 = vsel %vm57, %v801, 0
  %v819 = vsel %vm57, %v802, 0
  %v822 = vsel %vm57, %v803, 0
  %v825 = vsel %vm57, %v804, 0
  %v828 = vsel %vm57, %v805, 0
  %830 = vmatpush.msra.mxu0 0.0
  %831 = vmatpush.msra.mxu0 0.0
  %832 = vmatpush.msra.mxu0 0.0
  %833 = vmatpush.msra.mxu0 0.0
  %834 = vmatpush.msra.mxu0 0.0
  %835 = vmatpush.msra.mxu0 0.0
  %836 = vmatpush.msra.mxu0 0.0
  %837 = vmatpush.msra.mxu0 0.0
  %838 = vmatpush.msra.mxu0 0.0
  %839 = vmatpush.msra.mxu0 0.0
  %840 = vmatpush.msra.mxu0 0.0
  %841 = vmatpush.msra.mxu0 0.0
  %842 = vmatpush.msra.mxu0 0.0
  %843 = vmatpush.msra.mxu0 %v84
  %844 = vmatpush.msra.mxu0 %v47
  %845 = vmatpush.msra.mxu0 %v46
  %846 = vmatmul.f32.gmra.mxu0 %v807
  %v847 = vpop.f32.mrf.mxu0
  %v848 = vadd.f32 0.0, %v847
  %849 = vmatmul.f32.gmra.mxu0 %v810
  %v850 = vpop.f32.mrf.mxu0
  %v851 = vadd.f32 0.0, %v850
  %852 = vmatmul.f32.gmra.mxu0 %v813
  %v853 = vpop.f32.mrf.mxu0
  %v854 = vadd.f32 0.0, %v853
  %855 = vmatmul.f32.gmra.mxu0 %v816
  %v856 = vpop.f32.mrf.mxu0
  %v857 = vadd.f32 0.0, %v856
  %858 = vmatmul.f32.gmra.mxu0 %v819
  %v859 = vpop.f32.mrf.mxu0
  %v860 = vadd.f32 0.0, %v859
  %861 = vmatmul.f32.gmra.mxu0 %v822
  %v862 = vpop.f32.mrf.mxu0
  %v863 = vadd.f32 0.0, %v862
  %864 = vmatmul.f32.gmra.mxu0 %v825
  %v865 = vpop.f32.mrf.mxu0
  %v866 = vadd.f32 0.0, %v865
  %867 = vmatmul.f32.gmra.mxu0 %v828
  %v868 = vpop.f32.mrf.mxu0
  %v869 = vadd.f32 0.0, %v868
  %870 = vdwg.mxu0
  %s871 = scalar_lea.vmem %s1, 20
  %v872 = vld [vmem:[%s871] sm:$0xf]
  %v874 = vsel %vm204, %v848, 0
  %v877 = vsel %vm204, %v851, 0
  %v880 = vsel %vm204, %v854, 0
  %v883 = vsel %vm204, %v857, 0
  %v886 = vsel %vm204, %v860, 0
  %v889 = vsel %vm204, %v863, 0
  %v892 = vsel %vm204, %v866, 0
  %v895 = vsel %vm204, %v869, 0
  %v898 = vsel %vm82, %v872, 0
  %900 = vmatpush.msra.mxu0 0.0
  %901 = vmatpush.msra.mxu0 0.0
  %902 = vmatpush.msra.mxu0 0.0
  %903 = vmatpush.msra.mxu0 0.0
  %904 = vmatpush.msra.mxu0 0.0
  %905 = vmatpush.msra.mxu0 0.0
  %906 = vmatpush.msra.mxu0 0.0
  %907 = vmatpush.msra.mxu0 0.0
  %908 = vmatpush.msra.mxu0 0.0
  %909 = vmatpush.msra.mxu0 0.0
  %910 = vmatpush.msra.mxu0 0.0
  %911 = vmatpush.msra.mxu0 0.0
  %912 = vmatpush.msra.mxu0 0.0
  %913 = vmatpush.msra.mxu0 0.0
  %914 = vmatpush.msra.mxu0 0.0
  %915 = vmatpush.msra.mxu0 %v898
  %916 = vmatmul.f32.gmra.mxu0 %v874
  %v917 = vpop.f32.mrf.mxu0
  %v918 = vadd.f32 0.0, %v917
  %919 = vmatmul.f32.gmra.mxu0 %v877
  %v920 = vpop.f32.mrf.mxu0
  %v921 = vadd.f32 0.0, %v920
  %922 = vmatmul.f32.gmra.mxu0 %v880
  %v923 = vpop.f32.mrf.mxu0
  %v924 = vadd.f32 0.0, %v923
  %925 = vmatmul.f32.gmra.mxu0 %v883
  %v926 = vpop.f32.mrf.mxu0
  %v927 = vadd.f32 0.0, %v926
  %928 = vmatmul.f32.gmra.mxu0 %v886
  %v929 = vpop.f32.mrf.mxu0
  %v930 = vadd.f32 0.0, %v929
  %931 = vmatmul.f32.gmra.mxu0 %v889
  %v932 = vpop.f32.mrf.mxu0
  %v933 = vadd.f32 0.0, %v932
  %934 = vmatmul.f32.gmra.mxu0 %v892
  %v935 = vpop.f32.mrf.mxu0
  %v936 = vadd.f32 0.0, %v935
  %937 = vmatmul.f32.gmra.mxu0 %v895
  %v938 = vpop.f32.mrf.mxu0
  %v939 = vadd.f32 0.0, %v938
  %940 = vdwg.mxu0
  %v941 = vadd.f32 %v789, %v918
  %v942 = vadd.f32 %v790, %v921
  %v943 = vadd.f32 %v791, %v924
  %v944 = vadd.f32 %v792, %v927
  %v945 = vadd.f32 %v793, %v930
  %v946 = vadd.f32 %v794, %v933
  %v947 = vadd.f32 %v795, %v936
  %v948 = vadd.f32 %v796, %v939
  %s949 = scalar_lea.vmem %s4, 384
  %v950 = vld [vmem:[%s949] sm:$0xff]
  %v951 = vld [vmem:[%s949 + $0x8] sm:$0xff]
  %v952 = vld [vmem:[%s949 + $0x10] sm:$0xff]
  %v953 = vld [vmem:[%s949 + $0x18] sm:$0xff]
  %v954 = vld [vmem:[%s949 + $0x20] sm:$0xff]
  %v955 = vld [vmem:[%s949 + $0x28] sm:$0xff]
  %v956 = vld [vmem:[%s949 + $0x30] sm:$0xff]
  %v957 = vld [vmem:[%s949 + $0x38] sm:$0xff]
  %v959 = vsel %vm57, %v950, 0
  %v962 = vsel %vm57, %v951, 0
  %v965 = vsel %vm57, %v952, 0
  %v968 = vsel %vm57, %v953, 0
  %v971 = vsel %vm57, %v954, 0
  %v974 = vsel %vm57, %v955, 0
  %v977 = vsel %vm57, %v956, 0
  %v980 = vsel %vm57, %v957, 0
  %982 = vmatpush.msra.mxu0 0.0
  %983 = vmatpush.msra.mxu0 0.0
  %984 = vmatpush.msra.mxu0 0.0
  %985 = vmatpush.msra.mxu0 0.0
  %986 = vmatpush.msra.mxu0 0.0
  %987 = vmatpush.msra.mxu0 0.0
  %988 = vmatpush.msra.mxu0 0.0
  %989 = vmatpush.msra.mxu0 0.0
  %990 = vmatpush.msra.mxu0 0.0
  %991 = vmatpush.msra.mxu0 0.0
  %992 = vmatpush.msra.mxu0 0.0
  %993 = vmatpush.msra.mxu0 0.0
  %994 = vmatpush.msra.mxu0 0.0
  %995 = vmatpush.msra.mxu0 %v84
  %996 = vmatpush.msra.mxu0 %v47
  %997 = vmatpush.msra.mxu0 %v46
  %998 = vmatmul.f32.gmra.mxu0 %v959
  %v999 = vpop.f32.mrf.mxu0
  %v1000 = vadd.f32 0.0, %v999
  %1001 = vmatmul.f32.gmra.mxu0 %v962
  %v1002 = vpop.f32.mrf.mxu0
  %v1003 = vadd.f32 0.0, %v1002
  %1004 = vmatmul.f32.gmra.mxu0 %v965
  %v1005 = vpop.f32.mrf.mxu0
  %v1006 = vadd.f32 0.0, %v1005
  %1007 = vmatmul.f32.gmra.mxu0 %v968
  %v1008 = vpop.f32.mrf.mxu0
  %v1009 = vadd.f32 0.0, %v1008
  %1010 = vmatmul.f32.gmra.mxu0 %v971
  %v1011 = vpop.f32.mrf.mxu0
  %v1012 = vadd.f32 0.0, %v1011
  %1013 = vmatmul.f32.gmra.mxu0 %v974
  %v1014 = vpop.f32.mrf.mxu0
  %v1015 = vadd.f32 0.0, %v1014
  %1016 = vmatmul.f32.gmra.mxu0 %v977
  %v1017 = vpop.f32.mrf.mxu0
  %v1018 = vadd.f32 0.0, %v1017
  %1019 = vmatmul.f32.gmra.mxu0 %v980
  %v1020 = vpop.f32.mrf.mxu0
  %v1021 = vadd.f32 0.0, %v1020
  %1022 = vdwg.mxu0
  %s1023 = scalar_lea.vmem %s1, 24
  %v1024 = vld [vmem:[%s1023] sm:$0xf]
  %v1026 = vsel %vm204, %v1000, 0
  %v1029 = vsel %vm204, %v1003, 0
  %v1032 = vsel %vm204, %v1006, 0
  %v1035 = vsel %vm204, %v1009, 0
  %v1038 = vsel %vm204, %v1012, 0
  %v1041 = vsel %vm204, %v1015, 0
  %v1044 = vsel %vm204, %v1018, 0
  %v1047 = vsel %vm204, %v1021, 0
  %v1050 = vsel %vm82, %v1024, 0
  %1052 = vmatpush.msra.mxu0 0.0
  %1053 = vmatpush.msra.mxu0 0.0
  %1054 = vmatpush.msra.mxu0 0.0
  %1055 = vmatpush.msra.mxu0 0.0
  %1056 = vmatpush.msra.mxu0 0.0
  %1057 = vmatpush.msra.mxu0 0.0
  %1058 = vmatpush.msra.mxu0 0.0
  %1059 = vmatpush.msra.mxu0 0.0
  %1060 = vmatpush.msra.mxu0 0.0
  %1061 = vmatpush.msra.mxu0 0.0
  %1062 = vmatpush.msra.mxu0 0.0
  %1063 = vmatpush.msra.mxu0 0.0
  %1064 = vmatpush.msra.mxu0 0.0
  %1065 = vmatpush.msra.mxu0 0.0
  %1066 = vmatpush.msra.mxu0 0.0
  %1067 = vmatpush.msra.mxu0 %v1050
  %1068 = vmatmul.f32.gmra.mxu0 %v1026
  %v1069 = vpop.f32.mrf.mxu0
  %v1070 = vadd.f32 0.0, %v1069
  %1071 = vmatmul.f32.gmra.mxu0 %v1029
  %v1072 = vpop.f32.mrf.mxu0
  %v1073 = vadd.f32 0.0, %v1072
  %1074 = vmatmul.f32.gmra.mxu0 %v1032
  %v1075 = vpop.f32.mrf.mxu0
  %v1076 = vadd.f32 0.0, %v1075
  %1077 = vmatmul.f32.gmra.mxu0 %v1035
  %v1078 = vpop.f32.mrf.mxu0
  %v1079 = vadd.f32 0.0, %v1078
  %1080 = vmatmul.f32.gmra.mxu0 %v1038
  %v1081 = vpop.f32.mrf.mxu0
  %v1082 = vadd.f32 0.0, %v1081
  %1083 = vmatmul.f32.gmra.mxu0 %v1041
  %v1084 = vpop.f32.mrf.mxu0
  %v1085 = vadd.f32 0.0, %v1084
  %1086 = vmatmul.f32.gmra.mxu0 %v1044
  %v1087 = vpop.f32.mrf.mxu0
  %v1088 = vadd.f32 0.0, %v1087
  %1089 = vmatmul.f32.gmra.mxu0 %v1047
  %v1090 = vpop.f32.mrf.mxu0
  %v1091 = vadd.f32 0.0, %v1090
  %1092 = vdwg.mxu0
  %v1093 = vadd.f32 %v941, %v1070
  %v1094 = vadd.f32 %v942, %v1073
  %v1095 = vadd.f32 %v943, %v1076
  %v1096 = vadd.f32 %v944, %v1079
  %v1097 = vadd.f32 %v945, %v1082
  %v1098 = vadd.f32 %v946, %v1085
  %v1099 = vadd.f32 %v947, %v1088
  %v1100 = vadd.f32 %v948, %v1091
  %s1101 = scalar_lea.vmem %s4, 448
  %v1102 = vld [vmem:[%s1101] sm:$0xff]
  %v1103 = vld [vmem:[%s1101 + $0x8] sm:$0xff]
  %v1104 = vld [vmem:[%s1101 + $0x10] sm:$0xff]
  %v1105 = vld [vmem:[%s1101 + $0x18] sm:$0xff]
  %v1106 = vld [vmem:[%s1101 + $0x20] sm:$0xff]
  %v1107 = vld [vmem:[%s1101 + $0x28] sm:$0xff]
  %v1108 = vld [vmem:[%s1101 + $0x30] sm:$0xff]
  %v1109 = vld [vmem:[%s1101 + $0x38] sm:$0xff]
  %v1111 = vsel %vm57, %v1102, 0
  %v1114 = vsel %vm57, %v1103, 0
  %v1117 = vsel %vm57, %v1104, 0
  %v1120 = vsel %vm57, %v1105, 0
  %v1123 = vsel %vm57, %v1106, 0
  %v1126 = vsel %vm57, %v1107, 0
  %v1129 = vsel %vm57, %v1108, 0
  %v1132 = vsel %vm57, %v1109, 0
  %1134 = vmatpush.msra.mxu0 0.0
  %1135 = vmatpush.msra.mxu0 0.0
  %1136 = vmatpush.msra.mxu0 0.0
  %1137 = vmatpush.msra.mxu0 0.0
  %1138 = vmatpush.msra.mxu0 0.0
  %1139 = vmatpush.msra.mxu0 0.0
  %1140 = vmatpush.msra.mxu0 0.0
  %1141 = vmatpush.msra.mxu0 0.0
  %1142 = vmatpush.msra.mxu0 0.0
  %1143 = vmatpush.msra.mxu0 0.0
  %1144 = vmatpush.msra.mxu0 0.0
  %1145 = vmatpush.msra.mxu0 0.0
  %1146 = vmatpush.msra.mxu0 0.0
  %1147 = vmatpush.msra.mxu0 %v84
  %1148 = vmatpush.msra.mxu0 %v47
  %1149 = vmatpush.msra.mxu0 %v46
  %1150 = vmatmul.f32.gmra.mxu0 %v1111
  %v1151 = vpop.f32.mrf.mxu0
  %v1152 = vadd.f32 0.0, %v1151
  %1153 = vmatmul.f32.gmra.mxu0 %v1114
  %v1154 = vpop.f32.mrf.mxu0
  %v1155 = vadd.f32 0.0, %v1154
  %1156 = vmatmul.f32.gmra.mxu0 %v1117
  %v1157 = vpop.f32.mrf.mxu0
  %v1158 = vadd.f32 0.0, %v1157
  %1159 = vmatmul.f32.gmra.mxu0 %v1120
  %v1160 = vpop.f32.mrf.mxu0
  %v1161 = vadd.f32 0.0, %v1160
  %1162 = vmatmul.f32.gmra.mxu0 %v1123
  %v1163 = vpop.f32.mrf.mxu0
  %v1164 = vadd.f32 0.0, %v1163
  %1165 = vmatmul.f32.gmra.mxu0 %v1126
  %v1166 = vpop.f32.mrf.mxu0
  %v1167 = vadd.f32 0.0, %v1166
  %1168 = vmatmul.f32.gmra.mxu0 %v1129
  %v1169 = vpop.f32.mrf.mxu0
  %v1170 = vadd.f32 0.0, %v1169
  %1171 = vmatmul.f32.gmra.mxu0 %v1132
  %v1172 = vpop.f32.mrf.mxu0
  %v1173 = vadd.f32 0.0, %v1172
  %1174 = vdwg.mxu0
  %s1175 = scalar_lea.vmem %s1, 28
  %v1176 = vld [vmem:[%s1175] sm:$0xf]
  %v1178 = vsel %vm204, %v1152, 0
  %v1181 = vsel %vm204, %v1155, 0
  %v1184 = vsel %vm204, %v1158, 0
  %v1187 = vsel %vm204, %v1161, 0
  %v1190 = vsel %vm204, %v1164, 0
  %v1193 = vsel %vm204, %v1167, 0
  %v1196 = vsel %vm204, %v1170, 0
  %v1199 = vsel %vm204, %v1173, 0
  %v1202 = vsel %vm82, %v1176, 0
  %1204 = vmatpush.msra.mxu0 0.0
  %1205 = vmatpush.msra.mxu0 0.0
  %1206 = vmatpush.msra.mxu0 0.0
  %1207 = vmatpush.msra.mxu0 0.0
  %1208 = vmatpush.msra.mxu0 0.0
  %1209 = vmatpush.msra.mxu0 0.0
  %1210 = vmatpush.msra.mxu0 0.0
  %1211 = vmatpush.msra.mxu0 0.0
  %1212 = vmatpush.msra.mxu0 0.0
  %1213 = vmatpush.msra.mxu0 0.0
  %1214 = vmatpush.msra.mxu0 0.0
  %1215 = vmatpush.msra.mxu0 0.0
  %1216 = vmatpush.msra.mxu0 0.0
  %1217 = vmatpush.msra.mxu0 0.0
  %1218 = vmatpush.msra.mxu0 0.0
  %1219 = vmatpush.msra.mxu0 %v1202
  %1220 = vmatmul.f32.gmra.mxu0 %v1178
  %v1221 = vpop.f32.mrf.mxu0
  %v1222 = vadd.f32 0.0, %v1221
  %1223 = vmatmul.f32.gmra.mxu0 %v1181
  %v1224 = vpop.f32.mrf.mxu0
  %v1225 = vadd.f32 0.0, %v1224
  %1226 = vmatmul.f32.gmra.mxu0 %v1184
  %v1227 = vpop.f32.mrf.mxu0
  %v1228 = vadd.f32 0.0, %v1227
  %1229 = vmatmul.f32.gmra.mxu0 %v1187
  %v1230 = vpop.f32.mrf.mxu0
  %v1231 = vadd.f32 0.0, %v1230
  %1232 = vmatmul.f32.gmra.mxu0 %v1190
  %v1233 = vpop.f32.mrf.mxu0
  %v1234 = vadd.f32 0.0, %v1233
  %1235 = vmatmul.f32.gmra.mxu0 %v1193
  %v1236 = vpop.f32.mrf.mxu0
  %v1237 = vadd.f32 0.0, %v1236
  %1238 = vmatmul.f32.gmra.mxu0 %v1196
  %v1239 = vpop.f32.mrf.mxu0
  %v1240 = vadd.f32 0.0, %v1239
  %1241 = vmatmul.f32.gmra.mxu0 %v1199
  %v1242 = vpop.f32.mrf.mxu0
  %v1243 = vadd.f32 0.0, %v1242
  %1244 = vdwg.mxu0
  %v1245 = vadd.f32 %v1093, %v1222
  %v1246 = vadd.f32 %v1094, %v1225
  %v1247 = vadd.f32 %v1095, %v1228
  %v1248 = vadd.f32 %v1096, %v1231
  %v1249 = vadd.f32 %v1097, %v1234
  %v1250 = vadd.f32 %v1098, %v1237
  %v1251 = vadd.f32 %v1099, %v1240
  %v1252 = vadd.f32 %v1100, %v1243
  %s1253 = scalar_lea.vmem %s4, 512
  %v1254 = vld [vmem:[%s1253] sm:$0xff]
  %v1255 = vld [vmem:[%s1253 + $0x8] sm:$0xff]
  %v1256 = vld [vmem:[%s1253 + $0x10] sm:$0xff]
  %v1257 = vld [vmem:[%s1253 + $0x18] sm:$0xff]
  %v1258 = vld [vmem:[%s1253 + $0x20] sm:$0xff]
  %v1259 = vld [vmem:[%s1253 + $0x28] sm:$0xff]
  %v1260 = vld [vmem:[%s1253 + $0x30] sm:$0xff]
  %v1261 = vld [vmem:[%s1253 + $0x38] sm:$0xff]
  %v1263 = vsel %vm57, %v1254, 0
  %v1266 = vsel %vm57, %v1255, 0
  %v1269 = vsel %vm57, %v1256, 0
  %v1272 = vsel %vm57, %v1257, 0
  %v1275 = vsel %vm57, %v1258, 0
  %v1278 = vsel %vm57, %v1259, 0
  %v1281 = vsel %vm57, %v1260, 0
  %v1284 = vsel %vm57, %v1261, 0
  %1286 = vmatpush.msra.mxu0 0.0
  %1287 = vmatpush.msra.mxu0 0.0
  %1288 = vmatpush.msra.mxu0 0.0
  %1289 = vmatpush.msra.mxu0 0.0
  %1290 = vmatpush.msra.mxu0 0.0
  %1291 = vmatpush.msra.mxu0 0.0
  %1292 = vmatpush.msra.mxu0 0.0
  %1293 = vmatpush.msra.mxu0 0.0
  %1294 = vmatpush.msra.mxu0 0.0
  %1295 = vmatpush.msra.mxu0 0.0
  %1296 = vmatpush.msra.mxu0 0.0
  %1297 = vmatpush.msra.mxu0 0.0
  %1298 = vmatpush.msra.mxu0 0.0
  %1299 = vmatpush.msra.mxu0 %v84
  %1300 = vmatpush.msra.mxu0 %v47
  %1301 = vmatpush.msra.mxu0 %v46
  %1302 = vmatmul.f32.gmra.mxu0 %v1263
  %v1303 = vpop.f32.mrf.mxu0
  %v1304 = vadd.f32 0.0, %v1303
  %1305 = vmatmul.f32.gmra.mxu0 %v1266
  %v1306 = vpop.f32.mrf.mxu0
  %v1307 = vadd.f32 0.0, %v1306
  %1308 = vmatmul.f32.gmra.mxu0 %v1269
  %v1309 = vpop.f32.mrf.mxu0
  %v1310 = vadd.f32 0.0, %v1309
  %1311 = vmatmul.f32.gmra.mxu0 %v1272
  %v1312 = vpop.f32.mrf.mxu0
  %v1313 = vadd.f32 0.0, %v1312
  %1314 = vmatmul.f32.gmra.mxu0 %v1275
  %v1315 = vpop.f32.mrf.mxu0
  %v1316 = vadd.f32 0.0, %v1315
  %1317 = vmatmul.f32.gmra.mxu0 %v1278
  %v1318 = vpop.f32.mrf.mxu0
  %v1319 = vadd.f32 0.0, %v1318
  %1320 = vmatmul.f32.gmra.mxu0 %v1281
  %v1321 = vpop.f32.mrf.mxu0
  %v1322 = vadd.f32 0.0, %v1321
  %1323 = vmatmul.f32.gmra.mxu0 %v1284
  %v1324 = vpop.f32.mrf.mxu0
  %v1325 = vadd.f32 0.0, %v1324
  %1326 = vdwg.mxu0
  %s1327 = scalar_lea.vmem %s1, 32
  %v1328 = vld [vmem:[%s1327] sm:$0xf]
  %v1330 = vsel %vm204, %v1304, 0
  %v1333 = vsel %vm204, %v1307, 0
  %v1336 = vsel %vm204, %v1310, 0
  %v1339 = vsel %vm204, %v1313, 0
  %v1342 = vsel %vm204, %v1316, 0
  %v1345 = vsel %vm204, %v1319, 0
  %v1348 = vsel %vm204, %v1322, 0
  %v1351 = vsel %vm204, %v1325, 0
  %v1354 = vsel %vm82, %v1328, 0
  %1356 = vmatpush.msra.mxu0 0.0
  %1357 = vmatpush.msra.mxu0 0.0
  %1358 = vmatpush.msra.mxu0 0.0
  %1359 = vmatpush.msra.mxu0 0.0
  %1360 = vmatpush.msra.mxu0 0.0
  %1361 = vmatpush.msra.mxu0 0.0
  %1362 = vmatpush.msra.mxu0 0.0
  %1363 = vmatpush.msra.mxu0 0.0
  %1364 = vmatpush.msra.mxu0 0.0
  %1365 = vmatpush.msra.mxu0 0.0
  %1366 = vmatpush.msra.mxu0 0.0
  %1367 = vmatpush.msra.mxu0 0.0
  %1368 = vmatpush.msra.mxu0 0.0
  %1369 = vmatpush.msra.mxu0 0.0
  %1370 = vmatpush.msra.mxu0 0.0
  %1371 = vmatpush.msra.mxu0 %v1354
  %1372 = vmatmul.f32.gmra.mxu0 %v1330
  %v1373 = vpop.f32.mrf.mxu0
  %v1374 = vadd.f32 0.0, %v1373
  %1375 = vmatmul.f32.gmra.mxu0 %v1333
  %v1376 = vpop.f32.mrf.mxu0
  %v1377 = vadd.f32 0.0, %v1376
  %1378 = vmatmul.f32.gmra.mxu0 %v1336
  %v1379 = vpop.f32.mrf.mxu0
  %v1380 = vadd.f32 0.0, %v1379
  %1381 = vmatmul.f32.gmra.mxu0 %v1339
  %v1382 = vpop.f32.mrf.mxu0
  %v1383 = vadd.f32 0.0, %v1382
  %1384 = vmatmul.f32.gmra.mxu0 %v1342
  %v1385 = vpop.f32.mrf.mxu0
  %v1386 = vadd.f32 0.0, %v1385
  %1387 = vmatmul.f32.gmra.mxu0 %v1345
  %v1388 = vpop.f32.mrf.mxu0
  %v1389 = vadd.f32 0.0, %v1388
  %1390 = vmatmul.f32.gmra.mxu0 %v1348
  %v1391 = vpop.f32.mrf.mxu0
  %v1392 = vadd.f32 0.0, %v1391
  %1393 = vmatmul.f32.gmra.mxu0 %v1351
  %v1394 = vpop.f32.mrf.mxu0
  %v1395 = vadd.f32 0.0, %v1394
  %1396 = vdwg.mxu0
  %v1397 = vadd.f32 %v1245, %v1374
  %v1398 = vadd.f32 %v1246, %v1377
  %v1399 = vadd.f32 %v1247, %v1380
  %v1400 = vadd.f32 %v1248, %v1383
  %v1401 = vadd.f32 %v1249, %v1386
  %v1402 = vadd.f32 %v1250, %v1389
  %v1403 = vadd.f32 %v1251, %v1392
  %v1404 = vadd.f32 %v1252, %v1395
  %v1405 = vld [vmem:[%s8] sm:$0xff]
  %v1406 = vld [vmem:[%s8 + $0x8] sm:$0xff]
  %v1407 = vld [vmem:[%s8 + $0x10] sm:$0xff]
  %v1408 = vld [vmem:[%s8 + $0x18] sm:$0xff]
  %v1409 = vld [vmem:[%s8 + $0x20] sm:$0xff]
  %v1410 = vld [vmem:[%s8 + $0x28] sm:$0xff]
  %v1411 = vld [vmem:[%s8 + $0x30] sm:$0xff]
  %v1412 = vld [vmem:[%s8 + $0x38] sm:$0xff]
  %1414 = vset.pattern.permute.xlu0 0
  %1415 = vperm.xlu0 %1414, %v1405
  %v1416 = vpop.permute.xlu0 %1415
  %1419 = vset.pattern.permute.xlu0 0
  %1420 = vperm.xlu0 %1419, %v1406
  %v1421 = vpop.permute.xlu0 %1420
  %1424 = vset.pattern.permute.xlu0 0
  %1425 = vperm.xlu0 %1424, %v1407
  %v1426 = vpop.permute.xlu0 %1425
  %1429 = vset.pattern.permute.xlu0 0
  %1430 = vperm.xlu0 %1429, %v1408
  %v1431 = vpop.permute.xlu0 %1430
  %1434 = vset.pattern.permute.xlu0 0
  %1435 = vperm.xlu0 %1434, %v1409
  %v1436 = vpop.permute.xlu0 %1435
  %1439 = vset.pattern.permute.xlu0 0
  %1440 = vperm.xlu0 %1439, %v1410
  %v1441 = vpop.permute.xlu0 %1440
  %1444 = vset.pattern.permute.xlu0 0
  %1445 = vperm.xlu0 %1444, %v1411
  %v1446 = vpop.permute.xlu0 %1445
  %1449 = vset.pattern.permute.xlu0 0
  %1450 = vperm.xlu0 %1449, %v1412
  %v1451 = vpop.permute.xlu0 %1450
  %v1453 = vadd.f32 %v1397, %v1416
  %v1454 = vadd.f32 %v1398, %v1421
  %v1455 = vadd.f32 %v1399, %v1426
  %v1456 = vadd.f32 %v1400, %v1431
  %v1457 = vadd.f32 %v1401, %v1436
  %v1458 = vadd.f32 %v1402, %v1441
  %v1459 = vadd.f32 %v1403, %v1446
  %v1460 = vadd.f32 %v1404, %v1451
  %v1461 = vxor.u32 %v1453, 2147483648
  %v1462 = vxor.u32 %v1454, 2147483648
  %v1463 = vxor.u32 %v1455, 2147483648
  %v1464 = vxor.u32 %v1456, 2147483648
  %v1465 = vxor.u32 %v1457, 2147483648
  %v1466 = vxor.u32 %v1458, 2147483648
  %v1467 = vxor.u32 %v1459, 2147483648
  %v1468 = vxor.u32 %v1460, 2147483648
  %v1469 = vmul.f32 %v1461, 1.442695
  %v1470 = vpow.pop %v1469
  %v1471 = vmul.f32 %v1462, 1.442695
  %v1472 = vpow.pop %v1471
  %v1473 = vmul.f32 %v1463, 1.442695
  %v1474 = vpow.pop %v1473
  %v1475 = vmul.f32 %v1464, 1.442695
  %v1476 = vpow.pop %v1475
  %v1477 = vmul.f32 %v1465, 1.442695
  %v1478 = vpow.pop %v1477
  %v1479 = vmul.f32 %v1466, 1.442695
  %v1480 = vpow.pop %v1479
  %v1481 = vmul.f32 %v1467, 1.442695
  %v1482 = vpow.pop %v1481
  %v1483 = vmul.f32 %v1468, 1.442695
  %v1484 = vpow.pop %v1483
  %v1485 = vadd.f32 %v1470, 1.0
  %v1486 = vadd.f32 %v1472, 1.0
  %v1487 = vadd.f32 %v1474, 1.0
  %v1488 = vadd.f32 %v1476, 1.0
  %v1489 = vadd.f32 %v1478, 1.0
  %v1490 = vadd.f32 %v1480, 1.0
  %v1491 = vadd.f32 %v1482, 1.0
  %v1492 = vadd.f32 %v1484, 1.0
  %v1493 = vrcp.pop %v1485
  %v1494 = vmul.f32 %v1485, %v1493
  %v1495 = vsub.f32 1.0, %v1494
  %v1496 = vmul.f32 %v1493, %v1495
  %v1497 = vadd.f32 %v1493, %v1496
  %vm1498 = vweird.f32 %v1485
  %vm1499 = vweird.f32 %v1493
  %vm1500 = vmor %vm1498, %vm1499
  %v1501 = vsel %vm1500, %v1493, %v1497
  %v1502 = vand.u32 2147483647, %v1485
  %vm1503 = vcmp.eq.f32.partialorder %v1502, 8.507059e+37
  %v1504 = vand.u32 %v1485, 2147483648
  %v1505 = vor.u32 1.1754944e-38, %v1504
  %v1506 = vsel %vm1503, %v1505, %v1501
  %v1507 = vmul.f32 1.0, %v1506
  %v1508 = vrcp.pop %v1486
  %v1509 = vmul.f32 %v1486, %v1508
  %v1510 = vsub.f32 1.0, %v1509
  %v1511 = vmul.f32 %v1508, %v1510
  %v1512 = vadd.f32 %v1508, %v1511
  %vm1513 = vweird.f32 %v1486
  %vm1514 = vweird.f32 %v1508
  %vm1515 = vmor %vm1513, %vm1514
  %v1516 = vsel %vm1515, %v1508, %v1512
  %v1517 = vand.u32 2147483647, %v1486
  %vm1518 = vcmp.eq.f32.partialorder %v1517, 8.507059e+37
  %v1519 = vand.u32 %v1486, 2147483648
  %v1520 = vor.u32 1.1754944e-38, %v1519
  %v1521 = vsel %vm1518, %v1520, %v1516
  %v1522 = vmul.f32 1.0, %v1521
  %v1523 = vrcp.pop %v1487
  %v1524 = vmul.f32 %v1487, %v1523
  %v1525 = vsub.f32 1.0, %v1524
  %v1526 = vmul.f32 %v1523, %v1525
  %v1527 = vadd.f32 %v1523, %v1526
  %vm1528 = vweird.f32 %v1487
  %vm1529 = vweird.f32 %v1523
  %vm1530 = vmor %vm1528, %vm1529
  %v1531 = vsel %vm1530, %v1523, %v1527
  %v1532 = vand.u32 2147483647, %v1487
  %vm1533 = vcmp.eq.f32.partialorder %v1532, 8.507059e+37
  %v1534 = vand.u32 %v1487, 2147483648
  %v1535 = vor.u32 1.1754944e-38, %v1534
  %v1536 = vsel %vm1533, %v1535, %v1531
  %v1537 = vmul.f32 1.0, %v1536
  %v1538 = vrcp.pop %v1488
  %v1539 = vmul.f32 %v1488, %v1538
  %v1540 = vsub.f32 1.0, %v1539
  %v1541 = vmul.f32 %v1538, %v1540
  %v1542 = vadd.f32 %v1538, %v1541
  %vm1543 = vweird.f32 %v1488
  %vm1544 = vweird.f32 %v1538
  %vm1545 = vmor %vm1543, %vm1544
  %v1546 = vsel %vm1545, %v1538, %v1542
  %v1547 = vand.u32 2147483647, %v1488
  %vm1548 = vcmp.eq.f32.partialorder %v1547, 8.507059e+37
  %v1549 = vand.u32 %v1488, 2147483648
  %v1550 = vor.u32 1.1754944e-38, %v1549
  %v1551 = vsel %vm1548, %v1550, %v1546
  %v1552 = vmul.f32 1.0, %v1551
  %v1553 = vrcp.pop %v1489
  %v1554 = vmul.f32 %v1489, %v1553
  %v1555 = vsub.f32 1.0, %v1554
  %v1556 = vmul.f32 %v1553, %v1555
  %v1557 = vadd.f32 %v1553, %v1556
  %vm1558 = vweird.f32 %v1489
  %vm1559 = vweird.f32 %v1553
  %vm1560 = vmor %vm1558, %vm1559
  %v1561 = vsel %vm1560, %v1553, %v1557
  %v1562 = vand.u32 2147483647, %v1489
  %vm1563 = vcmp.eq.f32.partialorder %v1562, 8.507059e+37
  %v1564 = vand.u32 %v1489, 2147483648
  %v1565 = vor.u32 1.1754944e-38, %v1564
  %v1566 = vsel %vm1563, %v1565, %v1561
  %v1567 = vmul.f32 1.0, %v1566
  %v1568 = vrcp.pop %v1490
  %v1569 = vmul.f32 %v1490, %v1568
  %v1570 = vsub.f32 1.0, %v1569
  %v1571 = vmul.f32 %v1568, %v1570
  %v1572 = vadd.f32 %v1568, %v1571
  %vm1573 = vweird.f32 %v1490
  %vm1574 = vweird.f32 %v1568
  %vm1575 = vmor %vm1573, %vm1574
  %v1576 = vsel %vm1575, %v1568, %v1572
  %v1577 = vand.u32 2147483647, %v1490
  %vm1578 = vcmp.eq.f32.partialorder %v1577, 8.507059e+37
  %v1579 = vand.u32 %v1490, 2147483648
  %v1580 = vor.u32 1.1754944e-38, %v1579
  %v1581 = vsel %vm1578, %v1580, %v1576
  %v1582 = vmul.f32 1.0, %v1581
  %v1583 = vrcp.pop %v1491
  %v1584 = vmul.f32 %v1491, %v1583
  %v1585 = vsub.f32 1.0, %v1584
  %v1586 = vmul.f32 %v1583, %v1585
  %v1587 = vadd.f32 %v1583, %v1586
  %vm1588 = vweird.f32 %v1491
  %vm1589 = vweird.f32 %v1583
  %vm1590 = vmor %vm1588, %vm1589
  %v1591 = vsel %vm1590, %v1583, %v1587
  %v1592 = vand.u32 2147483647, %v1491
  %vm1593 = vcmp.eq.f32.partialorder %v1592, 8.507059e+37
  %v1594 = vand.u32 %v1491, 2147483648
  %v1595 = vor.u32 1.1754944e-38, %v1594
  %v1596 = vsel %vm1593, %v1595, %v1591
  %v1597 = vmul.f32 1.0, %v1596
  %v1598 = vrcp.pop %v1492
  %v1599 = vmul.f32 %v1492, %v1598
  %v1600 = vsub.f32 1.0, %v1599
  %v1601 = vmul.f32 %v1598, %v1600
  %v1602 = vadd.f32 %v1598, %v1601
  %vm1603 = vweird.f32 %v1492
  %vm1604 = vweird.f32 %v1598
  %vm1605 = vmor %vm1603, %vm1604
  %v1606 = vsel %vm1605, %v1598, %v1602
  %v1607 = vand.u32 2147483647, %v1492
  %vm1608 = vcmp.eq.f32.partialorder %v1607, 8.507059e+37
  %v1609 = vand.u32 %v1492, 2147483648
  %v1610 = vor.u32 1.1754944e-38, %v1609
  %v1611 = vsel %vm1608, %v1610, %v1606
  %v1612 = vmul.f32 1.0, %v1611
  %v1613 = vld [vmem:[%s5] sm:$0xff]
  %v1614 = vld [vmem:[%s5 + $0x8] sm:$0xff]
  %v1615 = vld [vmem:[%s5 + $0x10] sm:$0xff]
  %v1616 = vld [vmem:[%s5 + $0x18] sm:$0xff]
  %v1617 = vld [vmem:[%s5 + $0x20] sm:$0xff]
  %v1618 = vld [vmem:[%s5 + $0x28] sm:$0xff]
  %v1619 = vld [vmem:[%s5 + $0x30] sm:$0xff]
  %v1620 = vld [vmem:[%s5 + $0x38] sm:$0xff]
  %vm1621 = vcmask 523264
  %v1623 = vsel %vm1621, %v1613, 0
  %v1626 = vsel %vm1621, %v1614, 0
  %v1629 = vsel %vm1621, %v1615, 0
  %v1632 = vsel %vm1621, %v1616, 0
  %v1635 = vsel %vm1621, %v1617, 0
  %v1638 = vsel %vm1621, %v1618, 0
  %v1641 = vsel %vm1621, %v1619, 0
  %v1644 = vsel %vm1621, %v1620, 0
  %1646 = vmatpush.msra.mxu0 0.0
  %1647 = vmatpush.msra.mxu0 0.0
  %1648 = vmatpush.msra.mxu0 0.0
  %1649 = vmatpush.msra.mxu0 0.0
  %1650 = vmatpush.msra.mxu0 0.0
  %1651 = vmatpush.msra.mxu0 0.0
  %1652 = vmatpush.msra.mxu0 0.0
  %1653 = vmatpush.msra.mxu0 0.0
  %1654 = vmatpush.msra.mxu0 %v1612
  %1655 = vmatpush.msra.mxu0 %v1597
  %1656 = vmatpush.msra.mxu0 %v1582
  %1657 = vmatpush.msra.mxu0 %v1567
  %1658 = vmatpush.msra.mxu0 %v1552
  %1659 = vmatpush.msra.mxu0 %v1537
  %1660 = vmatpush.msra.mxu0 %v1522
  %1661 = vmatpush.msra.mxu0 %v1507
  %1662 = vmatmul.f32.gmra.mxu0 %v1623
  %v1663 = vpop.f32.mrf.mxu0
  %v1664 = vadd.f32 0.0, %v1663
  %1665 = vmatmul.f32.gmra.mxu0 %v1626
  %v1666 = vpop.f32.mrf.mxu0
  %v1667 = vadd.f32 0.0, %v1666
  %1668 = vmatmul.f32.gmra.mxu0 %v1629
  %v1669 = vpop.f32.mrf.mxu0
  %v1670 = vadd.f32 0.0, %v1669
  %1671 = vmatmul.f32.gmra.mxu0 %v1632
  %v1672 = vpop.f32.mrf.mxu0
  %v1673 = vadd.f32 0.0, %v1672
  %1674 = vmatmul.f32.gmra.mxu0 %v1635
  %v1675 = vpop.f32.mrf.mxu0
  %v1676 = vadd.f32 0.0, %v1675
  %1677 = vmatmul.f32.gmra.mxu0 %v1638
  %v1678 = vpop.f32.mrf.mxu0
  %v1679 = vadd.f32 0.0, %v1678
  %1680 = vmatmul.f32.gmra.mxu0 %v1641
  %v1681 = vpop.f32.mrf.mxu0
  %v1682 = vadd.f32 0.0, %v1681
  %1683 = vmatmul.f32.gmra.mxu0 %v1644
  %v1684 = vpop.f32.mrf.mxu0
  %v1685 = vadd.f32 0.0, %v1684
  %1686 = vdwg.mxu0
  %v1687 = vld [vmem:[%s2] sm:$0xff]
  %v1688 = vld [vmem:[%s2 + $0x8] sm:$0xff]
  %s1689 = scalar_lea.vmem %s5, 64
  %v1690 = vld [vmem:[%s1689] sm:$0xff]
  %v1691 = vld [vmem:[%s1689 + $0x8] sm:$0xff]
  %v1692 = vld [vmem:[%s1689 + $0x10] sm:$0xff]
  %v1693 = vld [vmem:[%s1689 + $0x18] sm:$0xff]
  %v1694 = vld [vmem:[%s1689 + $0x20] sm:$0xff]
  %v1695 = vld [vmem:[%s1689 + $0x28] sm:$0xff]
  %v1696 = vld [vmem:[%s1689 + $0x30] sm:$0xff]
  %v1697 = vld [vmem:[%s1689 + $0x38] sm:$0xff]
  %v1699 = vsel %vm1621, %v1690, 0
  %v1702 = vsel %vm1621, %v1691, 0
  %v1705 = vsel %vm1621, %v1692, 0
  %v1708 = vsel %vm1621, %v1693, 0
  %v1711 = vsel %vm1621, %v1694, 0
  %v1714 = vsel %vm1621, %v1695, 0
  %v1717 = vsel %vm1621, %v1696, 0
  %v1720 = vsel %vm1621, %v1697, 0
  %1722 = vmatpush.msra.mxu0 0.0
  %1723 = vmatpush.msra.mxu0 0.0
  %1724 = vmatpush.msra.mxu0 0.0
  %1725 = vmatpush.msra.mxu0 0.0
  %1726 = vmatpush.msra.mxu0 0.0
  %1727 = vmatpush.msra.mxu0 0.0
  %1728 = vmatpush.msra.mxu0 0.0
  %1729 = vmatpush.msra.mxu0 0.0
  %1730 = vmatpush.msra.mxu0 %v1612
  %1731 = vmatpush.msra.mxu0 %v1597
  %1732 = vmatpush.msra.mxu0 %v1582
  %1733 = vmatpush.msra.mxu0 %v1567
  %1734 = vmatpush.msra.mxu0 %v1552
  %1735 = vmatpush.msra.mxu0 %v1537
  %1736 = vmatpush.msra.mxu0 %v1522
  %1737 = vmatpush.msra.mxu0 %v1507
  %1738 = vmatmul.f32.gmra.mxu0 %v1699
  %v1739 = vpop.f32.mrf.mxu0
  %v1740 = vadd.f32 0.0, %v1739
  %1741 = vmatmul.f32.gmra.mxu0 %v1702
  %v1742 = vpop.f32.mrf.mxu0
  %v1743 = vadd.f32 0.0, %v1742
  %1744 = vmatmul.f32.gmra.mxu0 %v1705
  %v1745 = vpop.f32.mrf.mxu0
  %v1746 = vadd.f32 0.0, %v1745
  %1747 = vmatmul.f32.gmra.mxu0 %v1708
  %v1748 = vpop.f32.mrf.mxu0
  %v1749 = vadd.f32 0.0, %v1748
  %1750 = vmatmul.f32.gmra.mxu0 %v1711
  %v1751 = vpop.f32.mrf.mxu0
  %v1752 = vadd.f32 0.0, %v1751
  %1753 = vmatmul.f32.gmra.mxu0 %v1714
  %v1754 = vpop.f32.mrf.mxu0
  %v1755 = vadd.f32 0.0, %v1754
  %1756 = vmatmul.f32.gmra.mxu0 %v1717
  %v1757 = vpop.f32.mrf.mxu0
  %v1758 = vadd.f32 0.0, %v1757
  %1759 = vmatmul.f32.gmra.mxu0 %v1720
  %v1760 = vpop.f32.mrf.mxu0
  %v1761 = vadd.f32 0.0, %v1760
  %1762 = vdwg.mxu0
  %s1763 = scalar_lea.vmem %s2, 16
  %v1764 = vld [vmem:[%s1763] sm:$0xff]
  %v1765 = vld [vmem:[%s1763 + $0x8] sm:$0xff]
  %vm1766 = vcmask 130048
  %v1768 = vsel %vm1766, %v1740, 0
  %v1771 = vsel %vm1766, %v1743, 0
  %v1774 = vsel %vm1766, %v1746, 0
  %v1777 = vsel %vm1766, %v1749, 0
  %v1780 = vsel %vm1766, %v1752, 0
  %v1783 = vsel %vm1766, %v1755, 0
  %v1786 = vsel %vm1766, %v1758, 0
  %v1789 = vsel %vm1766, %v1761, 0
  %1791 = vmatpush.msra.mxu0 0.0
  %1792 = vmatpush.msra.mxu0 0.0
  %1793 = vmatpush.msra.mxu0 0.0
  %1794 = vmatpush.msra.mxu0 0.0
  %1795 = vmatpush.msra.mxu0 0.0
  %1796 = vmatpush.msra.mxu0 0.0
  %1797 = vmatpush.msra.mxu0 0.0
  %1798 = vmatpush.msra.mxu0 0.0
  %1799 = vmatpush.msra.mxu0 0.0
  %1800 = vmatpush.msra.mxu0 0.0
  %1801 = vmatpush.msra.mxu0 0.0
  %1802 = vmatpush.msra.mxu0 0.0
  %1803 = vmatpush.msra.mxu0 0.0
  %1804 = vmatpush.msra.mxu0 0.0
  %1805 = vmatpush.msra.mxu0 %v1765
  %1806 = vmatpush.msra.mxu0 %v1764
  %1807 = vmatmul.f32.gmra.mxu0 %v1768
  %v1808 = vpop.f32.mrf.mxu0
  %v1809 = vadd.f32 0.0, %v1808
  %1810 = vmatmul.f32.gmra.mxu0 %v1771
  %v1811 = vpop.f32.mrf.mxu0
  %v1812 = vadd.f32 0.0, %v1811
  %1813 = vmatmul.f32.gmra.mxu0 %v1774
  %v1814 = vpop.f32.mrf.mxu0
  %v1815 = vadd.f32 0.0, %v1814
  %1816 = vmatmul.f32.gmra.mxu0 %v1777
  %v1817 = vpop.f32.mrf.mxu0
  %v1818 = vadd.f32 0.0, %v1817
  %1819 = vmatmul.f32.gmra.mxu0 %v1780
  %v1820 = vpop.f32.mrf.mxu0
  %v1821 = vadd.f32 0.0, %v1820
  %1822 = vmatmul.f32.gmra.mxu0 %v1783
  %v1823 = vpop.f32.mrf.mxu0
  %v1824 = vadd.f32 0.0, %v1823
  %1825 = vmatmul.f32.gmra.mxu0 %v1786
  %v1826 = vpop.f32.mrf.mxu0
  %v1827 = vadd.f32 0.0, %v1826
  %1828 = vmatmul.f32.gmra.mxu0 %v1789
  %v1829 = vpop.f32.mrf.mxu0
  %v1830 = vadd.f32 0.0, %v1829
  %1831 = vdwg.mxu0
  %v1833 = vsel %vm1766, %v1664, 0
  %v1836 = vsel %vm1766, %v1667, 0
  %v1839 = vsel %vm1766, %v1670, 0
  %v1842 = vsel %vm1766, %v1673, 0
  %v1845 = vsel %vm1766, %v1676, 0
  %v1848 = vsel %vm1766, %v1679, 0
  %v1851 = vsel %vm1766, %v1682, 0
  %v1854 = vsel %vm1766, %v1685, 0
  %1856 = vmatpush.msra.mxu0 0.0
  %1857 = vmatpush.msra.mxu0 0.0
  %1858 = vmatpush.msra.mxu0 0.0
  %1859 = vmatpush.msra.mxu0 0.0
  %1860 = vmatpush.msra.mxu0 0.0
  %1861 = vmatpush.msra.mxu0 0.0
  %1862 = vmatpush.msra.mxu0 0.0
  %1863 = vmatpush.msra.mxu0 0.0
  %1864 = vmatpush.msra.mxu0 0.0
  %1865 = vmatpush.msra.mxu0 0.0
  %1866 = vmatpush.msra.mxu0 0.0
  %1867 = vmatpush.msra.mxu0 0.0
  %1868 = vmatpush.msra.mxu0 0.0
  %1869 = vmatpush.msra.mxu0 0.0
  %1870 = vmatpush.msra.mxu0 %v1688
  %1871 = vmatpush.msra.mxu0 %v1687
  %1872 = vmatmul.f32.gmra.mxu0 %v1833
  %v1873 = vpop.f32.mrf.mxu0
  %v1874 = vadd.f32 %v1809, %v1873
  %1875 = vmatmul.f32.gmra.mxu0 %v1836
  %v1876 = vpop.f32.mrf.mxu0
  %v1877 = vadd.f32 %v1812, %v1876
  %1878 = vmatmul.f32.gmra.mxu0 %v1839
  %v1879 = vpop.f32.mrf.mxu0
  %v1880 = vadd.f32 %v1815, %v1879
  %1881 = vmatmul.f32.gmra.mxu0 %v1842
  %v1882 = vpop.f32.mrf.mxu0
  %v1883 = vadd.f32 %v1818, %v1882
  %1884 = vmatmul.f32.gmra.mxu0 %v1845
  %v1885 = vpop.f32.mrf.mxu0
  %v1886 = vadd.f32 %v1821, %v1885
  %1887 = vmatmul.f32.gmra.mxu0 %v1848
  %v1888 = vpop.f32.mrf.mxu0
  %v1889 = vadd.f32 %v1824, %v1888
  %1890 = vmatmul.f32.gmra.mxu0 %v1851
  %v1891 = vpop.f32.mrf.mxu0
  %v1892 = vadd.f32 %v1827, %v1891
  %1893 = vmatmul.f32.gmra.mxu0 %v1854
  %v1894 = vpop.f32.mrf.mxu0
  %v1895 = vadd.f32 %v1830, %v1894
  %1896 = vdwg.mxu0
  %s1897 = scalar_lea.vmem %s5, 128
  %v1898 = vld [vmem:[%s1897] sm:$0xff]
  %v1899 = vld [vmem:[%s1897 + $0x8] sm:$0xff]
  %v1900 = vld [vmem:[%s1897 + $0x10] sm:$0xff]
  %v1901 = vld [vmem:[%s1897 + $0x18] sm:$0xff]
  %v1902 = vld [vmem:[%s1897 + $0x20] sm:$0xff]
  %v1903 = vld [vmem:[%s1897 + $0x28] sm:$0xff]
  %v1904 = vld [vmem:[%s1897 + $0x30] sm:$0xff]
  %v1905 = vld [vmem:[%s1897 + $0x38] sm:$0xff]
  %v1907 = vsel %vm1621, %v1898, 0
  %v1910 = vsel %vm1621, %v1899, 0
  %v1913 = vsel %vm1621, %v1900, 0
  %v1916 = vsel %vm1621, %v1901, 0
  %v1919 = vsel %vm1621, %v1902, 0
  %v1922 = vsel %vm1621, %v1903, 0
  %v1925 = vsel %vm1621, %v1904, 0
  %v1928 = vsel %vm1621, %v1905, 0
  %1930 = vmatpush.msra.mxu0 0.0
  %1931 = vmatpush.msra.mxu0 0.0
  %1932 = vmatpush.msra.mxu0 0.0
  %1933 = vmatpush.msra.mxu0 0.0
  %1934 = vmatpush.msra.mxu0 0.0
  %1935 = vmatpush.msra.mxu0 0.0
  %1936 = vmatpush.msra.mxu0 0.0
  %1937 = vmatpush.msra.mxu0 0.0
  %1938 = vmatpush.msra.mxu0 %v1612
  %1939 = vmatpush.msra.mxu0 %v1597
  %1940 = vmatpush.msra.mxu0 %v1582
  %1941 = vmatpush.msra.mxu0 %v1567
  %1942 = vmatpush.msra.mxu0 %v1552
  %1943 = vmatpush.msra.mxu0 %v1537
  %1944 = vmatpush.msra.mxu0 %v1522
  %1945 = vmatpush.msra.mxu0 %v1507
  %1946 = vmatmul.f32.gmra.mxu0 %v1907
  %v1947 = vpop.f32.mrf.mxu0
  %v1948 = vadd.f32 0.0, %v1947
  %1949 = vmatmul.f32.gmra.mxu0 %v1910
  %v1950 = vpop.f32.mrf.mxu0
  %v1951 = vadd.f32 0.0, %v1950
  %1952 = vmatmul.f32.gmra.mxu0 %v1913
  %v1953 = vpop.f32.mrf.mxu0
  %v1954 = vadd.f32 0.0, %v1953
  %1955 = vmatmul.f32.gmra.mxu0 %v1916
  %v1956 = vpop.f32.mrf.mxu0
  %v1957 = vadd.f32 0.0, %v1956
  %1958 = vmatmul.f32.gmra.mxu0 %v1919
  %v1959 = vpop.f32.mrf.mxu0
  %v1960 = vadd.f32 0.0, %v1959
  %1961 = vmatmul.f32.gmra.mxu0 %v1922
  %v1962 = vpop.f32.mrf.mxu0
  %v1963 = vadd.f32 0.0, %v1962
  %1964 = vmatmul.f32.gmra.mxu0 %v1925
  %v1965 = vpop.f32.mrf.mxu0
  %v1966 = vadd.f32 0.0, %v1965
  %1967 = vmatmul.f32.gmra.mxu0 %v1928
  %v1968 = vpop.f32.mrf.mxu0
  %v1969 = vadd.f32 0.0, %v1968
  %1970 = vdwg.mxu0
  %s1971 = scalar_lea.vmem %s2, 32
  %v1972 = vld [vmem:[%s1971] sm:$0xff]
  %v1973 = vld [vmem:[%s1971 + $0x8] sm:$0xff]
  %v1975 = vsel %vm1766, %v1948, 0
  %v1978 = vsel %vm1766, %v1951, 0
  %v1981 = vsel %vm1766, %v1954, 0
  %v1984 = vsel %vm1766, %v1957, 0
  %v1987 = vsel %vm1766, %v1960, 0
  %v1990 = vsel %vm1766, %v1963, 0
  %v1993 = vsel %vm1766, %v1966, 0
  %v1996 = vsel %vm1766, %v1969, 0
  %1998 = vmatpush.msra.mxu0 0.0
  %1999 = vmatpush.msra.mxu0 0.0
  %2000 = vmatpush.msra.mxu0 0.0
  %2001 = vmatpush.msra.mxu0 0.0
  %2002 = vmatpush.msra.mxu0 0.0
  %2003 = vmatpush.msra.mxu0 0.0
  %2004 = vmatpush.msra.mxu0 0.0
  %2005 = vmatpush.msra.mxu0 0.0
  %2006 = vmatpush.msra.mxu0 0.0
  %2007 = vmatpush.msra.mxu0 0.0
  %2008 = vmatpush.msra.mxu0 0.0
  %2009 = vmatpush.msra.mxu0 0.0
  %2010 = vmatpush.msra.mxu0 0.0
  %2011 = vmatpush.msra.mxu0 0.0
  %2012 = vmatpush.msra.mxu0 %v1973
  %2013 = vmatpush.msra.mxu0 %v1972
  %2014 = vmatmul.f32.gmra.mxu0 %v1975
  %v2015 = vpop.f32.mrf.mxu0
  %v2016 = vadd.f32 0.0, %v2015
  %2017 = vmatmul.f32.gmra.mxu0 %v1978
  %v2018 = vpop.f32.mrf.mxu0
  %v2019 = vadd.f32 0.0, %v2018
  %2020 = vmatmul.f32.gmra.mxu0 %v1981
  %v2021 = vpop.f32.mrf.mxu0
  %v2022 = vadd.f32 0.0, %v2021
  %2023 = vmatmul.f32.gmra.mxu0 %v1984
  %v2024 = vpop.f32.mrf.mxu0
  %v2025 = vadd.f32 0.0, %v2024
  %2026 = vmatmul.f32.gmra.mxu0 %v1987
  %v2027 = vpop.f32.mrf.mxu0
  %v2028 = vadd.f32 0.0, %v2027
  %2029 = vmatmul.f32.gmra.mxu0 %v1990
  %v2030 = vpop.f32.mrf.mxu0
  %v2031 = vadd.f32 0.0, %v2030
  %2032 = vmatmul.f32.gmra.mxu0 %v1993
  %v2033 = vpop.f32.mrf.mxu0
  %v2034 = vadd.f32 0.0, %v2033
  %2035 = vmatmul.f32.gmra.mxu0 %v1996
  %v2036 = vpop.f32.mrf.mxu0
  %v2037 = vadd.f32 0.0, %v2036
  %2038 = vdwg.mxu0
  %v2039 = vadd.f32 %v1874, %v2016
  %v2040 = vadd.f32 %v1877, %v2019
  %v2041 = vadd.f32 %v1880, %v2022
  %v2042 = vadd.f32 %v1883, %v2025
  %v2043 = vadd.f32 %v1886, %v2028
  %v2044 = vadd.f32 %v1889, %v2031
  %v2045 = vadd.f32 %v1892, %v2034
  %v2046 = vadd.f32 %v1895, %v2037
  %s2047 = scalar_lea.vmem %s5, 192
  %v2048 = vld [vmem:[%s2047] sm:$0xff]
  %v2049 = vld [vmem:[%s2047 + $0x8] sm:$0xff]
  %v2050 = vld [vmem:[%s2047 + $0x10] sm:$0xff]
  %v2051 = vld [vmem:[%s2047 + $0x18] sm:$0xff]
  %v2052 = vld [vmem:[%s2047 + $0x20] sm:$0xff]
  %v2053 = vld [vmem:[%s2047 + $0x28] sm:$0xff]
  %v2054 = vld [vmem:[%s2047 + $0x30] sm:$0xff]
  %v2055 = vld [vmem:[%s2047 + $0x38] sm:$0xff]
  %v2057 = vsel %vm1621, %v2048, 0
  %v2060 = vsel %vm1621, %v2049, 0
  %v2063 = vsel %vm1621, %v2050, 0
  %v2066 = vsel %vm1621, %v2051, 0
  %v2069 = vsel %vm1621, %v2052, 0
  %v2072 = vsel %vm1621, %v2053, 0
  %v2075 = vsel %vm1621, %v2054, 0
  %v2078 = vsel %vm1621, %v2055, 0
  %2080 = vmatpush.msra.mxu0 0.0
  %2081 = vmatpush.msra.mxu0 0.0
  %2082 = vmatpush.msra.mxu0 0.0
  %2083 = vmatpush.msra.mxu0 0.0
  %2084 = vmatpush.msra.mxu0 0.0
  %2085 = vmatpush.msra.mxu0 0.0
  %2086 = vmatpush.msra.mxu0 0.0
  %2087 = vmatpush.msra.mxu0 0.0
  %2088 = vmatpush.msra.mxu0 %v1612
  %2089 = vmatpush.msra.mxu0 %v1597
  %2090 = vmatpush.msra.mxu0 %v1582
  %2091 = vmatpush.msra.mxu0 %v1567
  %2092 = vmatpush.msra.mxu0 %v1552
  %2093 = vmatpush.msra.mxu0 %v1537
  %2094 = vmatpush.msra.mxu0 %v1522
  %2095 = vmatpush.msra.mxu0 %v1507
  %2096 = vmatmul.f32.gmra.mxu0 %v2057
  %v2097 = vpop.f32.mrf.mxu0
  %v2098 = vadd.f32 0.0, %v2097
  %2099 = vmatmul.f32.gmra.mxu0 %v2060
  %v2100 = vpop.f32.mrf.mxu0
  %v2101 = vadd.f32 0.0, %v2100
  %2102 = vmatmul.f32.gmra.mxu0 %v2063
  %v2103 = vpop.f32.mrf.mxu0
  %v2104 = vadd.f32 0.0, %v2103
  %2105 = vmatmul.f32.gmra.mxu0 %v2066
  %v2106 = vpop.f32.mrf.mxu0
  %v2107 = vadd.f32 0.0, %v2106
  %2108 = vmatmul.f32.gmra.mxu0 %v2069
  %v2109 = vpop.f32.mrf.mxu0
  %v2110 = vadd.f32 0.0, %v2109
  %2111 = vmatmul.f32.gmra.mxu0 %v2072
  %v2112 = vpop.f32.mrf.mxu0
  %v2113 = vadd.f32 0.0, %v2112
  %2114 = vmatmul.f32.gmra.mxu0 %v2075
  %v2115 = vpop.f32.mrf.mxu0
  %v2116 = vadd.f32 0.0, %v2115
  %2117 = vmatmul.f32.gmra.mxu0 %v2078
  %v2118 = vpop.f32.mrf.mxu0
  %v2119 = vadd.f32 0.0, %v2118
  %2120 = vdwg.mxu0
  %s2121 = scalar_lea.vmem %s2, 48
  %v2122 = vld [vmem:[%s2121] sm:$0xff]
  %v2123 = vld [vmem:[%s2121 + $0x8] sm:$0xff]
  %v2125 = vsel %vm1766, %v2098, 0
  %v2128 = vsel %vm1766, %v2101, 0
  %v2131 = vsel %vm1766, %v2104, 0
  %v2134 = vsel %vm1766, %v2107, 0
  %v2137 = vsel %vm1766, %v2110, 0
  %v2140 = vsel %vm1766, %v2113, 0
  %v2143 = vsel %vm1766, %v2116, 0
  %v2146 = vsel %vm1766, %v2119, 0
  %2148 = vmatpush.msra.mxu0 0.0
  %2149 = vmatpush.msra.mxu0 0.0
  %2150 = vmatpush.msra.mxu0 0.0
  %2151 = vmatpush.msra.mxu0 0.0
  %2152 = vmatpush.msra.mxu0 0.0
  %2153 = vmatpush.msra.mxu0 0.0
  %2154 = vmatpush.msra.mxu0 0.0
  %2155 = vmatpush.msra.mxu0 0.0
  %2156 = vmatpush.msra.mxu0 0.0
  %2157 = vmatpush.msra.mxu0 0.0
  %2158 = vmatpush.msra.mxu0 0.0
  %2159 = vmatpush.msra.mxu0 0.0
  %2160 = vmatpush.msra.mxu0 0.0
  %2161 = vmatpush.msra.mxu0 0.0
  %2162 = vmatpush.msra.mxu0 %v2123
  %2163 = vmatpush.msra.mxu0 %v2122
  %2164 = vmatmul.f32.gmra.mxu0 %v2125
  %v2165 = vpop.f32.mrf.mxu0
  %v2166 = vadd.f32 0.0, %v2165
  %2167 = vmatmul.f32.gmra.mxu0 %v2128
  %v2168 = vpop.f32.mrf.mxu0
  %v2169 = vadd.f32 0.0, %v2168
  %2170 = vmatmul.f32.gmra.mxu0 %v2131
  %v2171 = vpop.f32.mrf.mxu0
  %v2172 = vadd.f32 0.0, %v2171
  %2173 = vmatmul.f32.gmra.mxu0 %v2134
  %v2174 = vpop.f32.mrf.mxu0
  %v2175 = vadd.f32 0.0, %v2174
  %2176 = vmatmul.f32.gmra.mxu0 %v2137
  %v2177 = vpop.f32.mrf.mxu0
  %v2178 = vadd.f32 0.0, %v2177
  %2179 = vmatmul.f32.gmra.mxu0 %v2140
  %v2180 = vpop.f32.mrf.mxu0
  %v2181 = vadd.f32 0.0, %v2180
  %2182 = vmatmul.f32.gmra.mxu0 %v2143
  %v2183 = vpop.f32.mrf.mxu0
  %v2184 = vadd.f32 0.0, %v2183
  %2185 = vmatmul.f32.gmra.mxu0 %v2146
  %v2186 = vpop.f32.mrf.mxu0
  %v2187 = vadd.f32 0.0, %v2186
  %2188 = vdwg.mxu0
  %v2189 = vadd.f32 %v2039, %v2166
  %v2190 = vadd.f32 %v2040, %v2169
  %v2191 = vadd.f32 %v2041, %v2172
  %v2192 = vadd.f32 %v2042, %v2175
  %v2193 = vadd.f32 %v2043, %v2178
  %v2194 = vadd.f32 %v2044, %v2181
  %v2195 = vadd.f32 %v2045, %v2184
  %v2196 = vadd.f32 %v2046, %v2187
  %s2197 = scalar_lea.vmem %s5, 256
  %v2198 = vld [vmem:[%s2197] sm:$0xff]
  %v2199 = vld [vmem:[%s2197 + $0x8] sm:$0xff]
  %v2200 = vld [vmem:[%s2197 + $0x10] sm:$0xff]
  %v2201 = vld [vmem:[%s2197 + $0x18] sm:$0xff]
  %v2202 = vld [vmem:[%s2197 + $0x20] sm:$0xff]
  %v2203 = vld [vmem:[%s2197 + $0x28] sm:$0xff]
  %v2204 = vld [vmem:[%s2197 + $0x30] sm:$0xff]
  %v2205 = vld [vmem:[%s2197 + $0x38] sm:$0xff]
  %v2207 = vsel %vm1621, %v2198, 0
  %v2210 = vsel %vm1621, %v2199, 0
  %v2213 = vsel %vm1621, %v2200, 0
  %v2216 = vsel %vm1621, %v2201, 0
  %v2219 = vsel %vm1621, %v2202, 0
  %v2222 = vsel %vm1621, %v2203, 0
  %v2225 = vsel %vm1621, %v2204, 0
  %v2228 = vsel %vm1621, %v2205, 0
  %2230 = vmatpush.msra.mxu0 0.0
  %2231 = vmatpush.msra.mxu0 0.0
  %2232 = vmatpush.msra.mxu0 0.0
  %2233 = vmatpush.msra.mxu0 0.0
  %2234 = vmatpush.msra.mxu0 0.0
  %2235 = vmatpush.msra.mxu0 0.0
  %2236 = vmatpush.msra.mxu0 0.0
  %2237 = vmatpush.msra.mxu0 0.0
  %2238 = vmatpush.msra.mxu0 %v1612
  %2239 = vmatpush.msra.mxu0 %v1597
  %2240 = vmatpush.msra.mxu0 %v1582
  %2241 = vmatpush.msra.mxu0 %v1567
  %2242 = vmatpush.msra.mxu0 %v1552
  %2243 = vmatpush.msra.mxu0 %v1537
  %2244 = vmatpush.msra.mxu0 %v1522
  %2245 = vmatpush.msra.mxu0 %v1507
  %2246 = vmatmul.f32.gmra.mxu0 %v2207
  %v2247 = vpop.f32.mrf.mxu0
  %v2248 = vadd.f32 0.0, %v2247
  %2249 = vmatmul.f32.gmra.mxu0 %v2210
  %v2250 = vpop.f32.mrf.mxu0
  %v2251 = vadd.f32 0.0, %v2250
  %2252 = vmatmul.f32.gmra.mxu0 %v2213
  %v2253 = vpop.f32.mrf.mxu0
  %v2254 = vadd.f32 0.0, %v2253
  %2255 = vmatmul.f32.gmra.mxu0 %v2216
  %v2256 = vpop.f32.mrf.mxu0
  %v2257 = vadd.f32 0.0, %v2256
  %2258 = vmatmul.f32.gmra.mxu0 %v2219
  %v2259 = vpop.f32.mrf.mxu0
  %v2260 = vadd.f32 0.0, %v2259
  %2261 = vmatmul.f32.gmra.mxu0 %v2222
  %v2262 = vpop.f32.mrf.mxu0
  %v2263 = vadd.f32 0.0, %v2262
  %2264 = vmatmul.f32.gmra.mxu0 %v2225
  %v2265 = vpop.f32.mrf.mxu0
  %v2266 = vadd.f32 0.0, %v2265
  %2267 = vmatmul.f32.gmra.mxu0 %v2228
  %v2268 = vpop.f32.mrf.mxu0
  %v2269 = vadd.f32 0.0, %v2268
  %2270 = vdwg.mxu0
  %s2271 = scalar_lea.vmem %s2, 64
  %v2272 = vld [vmem:[%s2271] sm:$0xff]
  %v2273 = vld [vmem:[%s2271 + $0x8] sm:$0xff]
  %v2275 = vsel %vm1766, %v2248, 0
  %v2278 = vsel %vm1766, %v2251, 0
  %v2281 = vsel %vm1766, %v2254, 0
  %v2284 = vsel %vm1766, %v2257, 0
  %v2287 = vsel %vm1766, %v2260, 0
  %v2290 = vsel %vm1766, %v2263, 0
  %v2293 = vsel %vm1766, %v2266, 0
  %v2296 = vsel %vm1766, %v2269, 0
  %2298 = vmatpush.msra.mxu0 0.0
  %2299 = vmatpush.msra.mxu0 0.0
  %2300 = vmatpush.msra.mxu0 0.0
  %2301 = vmatpush.msra.mxu0 0.0
  %2302 = vmatpush.msra.mxu0 0.0
  %2303 = vmatpush.msra.mxu0 0.0
  %2304 = vmatpush.msra.mxu0 0.0
  %2305 = vmatpush.msra.mxu0 0.0
  %2306 = vmatpush.msra.mxu0 0.0
  %2307 = vmatpush.msra.mxu0 0.0
  %2308 = vmatpush.msra.mxu0 0.0
  %2309 = vmatpush.msra.mxu0 0.0
  %2310 = vmatpush.msra.mxu0 0.0
  %2311 = vmatpush.msra.mxu0 0.0
  %2312 = vmatpush.msra.mxu0 %v2273
  %2313 = vmatpush.msra.mxu0 %v2272
  %2314 = vmatmul.f32.gmra.mxu0 %v2275
  %v2315 = vpop.f32.mrf.mxu0
  %v2316 = vadd.f32 0.0, %v2315
  %2317 = vmatmul.f32.gmra.mxu0 %v2278
  %v2318 = vpop.f32.mrf.mxu0
  %v2319 = vadd.f32 0.0, %v2318
  %2320 = vmatmul.f32.gmra.mxu0 %v2281
  %v2321 = vpop.f32.mrf.mxu0
  %v2322 = vadd.f32 0.0, %v2321
  %2323 = vmatmul.f32.gmra.mxu0 %v2284
  %v2324 = vpop.f32.mrf.mxu0
  %v2325 = vadd.f32 0.0, %v2324
  %2326 = vmatmul.f32.gmra.mxu0 %v2287
  %v2327 = vpop.f32.mrf.mxu0
  %v2328 = vadd.f32 0.0, %v2327
  %2329 = vmatmul.f32.gmra.mxu0 %v2290
  %v2330 = vpop.f32.mrf.mxu0
  %v2331 = vadd.f32 0.0, %v2330
  %2332 = vmatmul.f32.gmra.mxu0 %v2293
  %v2333 = vpop.f32.mrf.mxu0
  %v2334 = vadd.f32 0.0, %v2333
  %2335 = vmatmul.f32.gmra.mxu0 %v2296
  %v2336 = vpop.f32.mrf.mxu0
  %v2337 = vadd.f32 0.0, %v2336
  %2338 = vdwg.mxu0
  %v2339 = vadd.f32 %v2189, %v2316
  %v2340 = vadd.f32 %v2190, %v2319
  %v2341 = vadd.f32 %v2191, %v2322
  %v2342 = vadd.f32 %v2192, %v2325
  %v2343 = vadd.f32 %v2193, %v2328
  %v2344 = vadd.f32 %v2194, %v2331
  %v2345 = vadd.f32 %v2195, %v2334
  %v2346 = vadd.f32 %v2196, %v2337
  %s2347 = scalar_lea.vmem %s5, 320
  %v2348 = vld [vmem:[%s2347] sm:$0xff]
  %v2349 = vld [vmem:[%s2347 + $0x8] sm:$0xff]
  %v2350 = vld [vmem:[%s2347 + $0x10] sm:$0xff]
  %v2351 = vld [vmem:[%s2347 + $0x18] sm:$0xff]
  %v2352 = vld [vmem:[%s2347 + $0x20] sm:$0xff]
  %v2353 = vld [vmem:[%s2347 + $0x28] sm:$0xff]
  %v2354 = vld [vmem:[%s2347 + $0x30] sm:$0xff]
  %v2355 = vld [vmem:[%s2347 + $0x38] sm:$0xff]
  %v2357 = vsel %vm1621, %v2348, 0
  %v2360 = vsel %vm1621, %v2349, 0
  %v2363 = vsel %vm1621, %v2350, 0
  %v2366 = vsel %vm1621, %v2351, 0
  %v2369 = vsel %vm1621, %v2352, 0
  %v2372 = vsel %vm1621, %v2353, 0
  %v2375 = vsel %vm1621, %v2354, 0
  %v2378 = vsel %vm1621, %v2355, 0
  %2380 = vmatpush.msra.mxu0 0.0
  %2381 = vmatpush.msra.mxu0 0.0
  %2382 = vmatpush.msra.mxu0 0.0
  %2383 = vmatpush.msra.mxu0 0.0
  %2384 = vmatpush.msra.mxu0 0.0
  %2385 = vmatpush.msra.mxu0 0.0
  %2386 = vmatpush.msra.mxu0 0.0
  %2387 = vmatpush.msra.mxu0 0.0
  %2388 = vmatpush.msra.mxu0 %v1612
  %2389 = vmatpush.msra.mxu0 %v1597
  %2390 = vmatpush.msra.mxu0 %v1582
  %2391 = vmatpush.msra.mxu0 %v1567
  %2392 = vmatpush.msra.mxu0 %v1552
  %2393 = vmatpush.msra.mxu0 %v1537
  %2394 = vmatpush.msra.mxu0 %v1522
  %2395 = vmatpush.msra.mxu0 %v1507
  %2396 = vmatmul.f32.gmra.mxu0 %v2357
  %v2397 = vpop.f32.mrf.mxu0
  %v2398 = vadd.f32 0.0, %v2397
  %2399 = vmatmul.f32.gmra.mxu0 %v2360
  %v2400 = vpop.f32.mrf.mxu0
  %v2401 = vadd.f32 0.0, %v2400
  %2402 = vmatmul.f32.gmra.mxu0 %v2363
  %v2403 = vpop.f32.mrf.mxu0
  %v2404 = vadd.f32 0.0, %v2403
  %2405 = vmatmul.f32.gmra.mxu0 %v2366
  %v2406 = vpop.f32.mrf.mxu0
  %v2407 = vadd.f32 0.0, %v2406
  %2408 = vmatmul.f32.gmra.mxu0 %v2369
  %v2409 = vpop.f32.mrf.mxu0
  %v2410 = vadd.f32 0.0, %v2409
  %2411 = vmatmul.f32.gmra.mxu0 %v2372
  %v2412 = vpop.f32.mrf.mxu0
  %v2413 = vadd.f32 0.0, %v2412
  %2414 = vmatmul.f32.gmra.mxu0 %v2375
  %v2415 = vpop.f32.mrf.mxu0
  %v2416 = vadd.f32 0.0, %v2415
  %2417 = vmatmul.f32.gmra.mxu0 %v2378
  %v2418 = vpop.f32.mrf.mxu0
  %v2419 = vadd.f32 0.0, %v2418
  %2420 = vdwg.mxu0
  %s2421 = scalar_lea.vmem %s2, 80
  %v2422 = vld [vmem:[%s2421] sm:$0xff]
  %v2423 = vld [vmem:[%s2421 + $0x8] sm:$0xff]
  %v2425 = vsel %vm1766, %v2398, 0
  %v2428 = vsel %vm1766, %v2401, 0
  %v2431 = vsel %vm1766, %v2404, 0
  %v2434 = vsel %vm1766, %v2407, 0
  %v2437 = vsel %vm1766, %v2410, 0
  %v2440 = vsel %vm1766, %v2413, 0
  %v2443 = vsel %vm1766, %v2416, 0
  %v2446 = vsel %vm1766, %v2419, 0
  %2448 = vmatpush.msra.mxu0 0.0
  %2449 = vmatpush.msra.mxu0 0.0
  %2450 = vmatpush.msra.mxu0 0.0
  %2451 = vmatpush.msra.mxu0 0.0
  %2452 = vmatpush.msra.mxu0 0.0
  %2453 = vmatpush.msra.mxu0 0.0
  %2454 = vmatpush.msra.mxu0 0.0
  %2455 = vmatpush.msra.mxu0 0.0
  %2456 = vmatpush.msra.mxu0 0.0
  %2457 = vmatpush.msra.mxu0 0.0
  %2458 = vmatpush.msra.mxu0 0.0
  %2459 = vmatpush.msra.mxu0 0.0
  %2460 = vmatpush.msra.mxu0 0.0
  %2461 = vmatpush.msra.mxu0 0.0
  %2462 = vmatpush.msra.mxu0 %v2423
  %2463 = vmatpush.msra.mxu0 %v2422
  %2464 = vmatmul.f32.gmra.mxu0 %v2425
  %v2465 = vpop.f32.mrf.mxu0
  %v2466 = vadd.f32 0.0, %v2465
  %2467 = vmatmul.f32.gmra.mxu0 %v2428
  %v2468 = vpop.f32.mrf.mxu0
  %v2469 = vadd.f32 0.0, %v2468
  %2470 = vmatmul.f32.gmra.mxu0 %v2431
  %v2471 = vpop.f32.mrf.mxu0
  %v2472 = vadd.f32 0.0, %v2471
  %2473 = vmatmul.f32.gmra.mxu0 %v2434
  %v2474 = vpop.f32.mrf.mxu0
  %v2475 = vadd.f32 0.0, %v2474
  %2476 = vmatmul.f32.gmra.mxu0 %v2437
  %v2477 = vpop.f32.mrf.mxu0
  %v2478 = vadd.f32 0.0, %v2477
  %2479 = vmatmul.f32.gmra.mxu0 %v2440
  %v2480 = vpop.f32.mrf.mxu0
  %v2481 = vadd.f32 0.0, %v2480
  %2482 = vmatmul.f32.gmra.mxu0 %v2443
  %v2483 = vpop.f32.mrf.mxu0
  %v2484 = vadd.f32 0.0, %v2483
  %2485 = vmatmul.f32.gmra.mxu0 %v2446
  %v2486 = vpop.f32.mrf.mxu0
  %v2487 = vadd.f32 0.0, %v2486
  %2488 = vdwg.mxu0
  %v2489 = vadd.f32 %v2339, %v2466
  %v2490 = vadd.f32 %v2340, %v2469
  %v2491 = vadd.f32 %v2341, %v2472
  %v2492 = vadd.f32 %v2342, %v2475
  %v2493 = vadd.f32 %v2343, %v2478
  %v2494 = vadd.f32 %v2344, %v2481
  %v2495 = vadd.f32 %v2345, %v2484
  %v2496 = vadd.f32 %v2346, %v2487
  %s2497 = scalar_lea.vmem %s5, 384
  %v2498 = vld [vmem:[%s2497] sm:$0xff]
  %v2499 = vld [vmem:[%s2497 + $0x8] sm:$0xff]
  %v2500 = vld [vmem:[%s2497 + $0x10] sm:$0xff]
  %v2501 = vld [vmem:[%s2497 + $0x18] sm:$0xff]
  %v2502 = vld [vmem:[%s2497 + $0x20] sm:$0xff]
  %v2503 = vld [vmem:[%s2497 + $0x28] sm:$0xff]
  %v2504 = vld [vmem:[%s2497 + $0x30] sm:$0xff]
  %v2505 = vld [vmem:[%s2497 + $0x38] sm:$0xff]
  %v2507 = vsel %vm1621, %v2498, 0
  %v2510 = vsel %vm1621, %v2499, 0
  %v2513 = vsel %vm1621, %v2500, 0
  %v2516 = vsel %vm1621, %v2501, 0
  %v2519 = vsel %vm1621, %v2502, 0
  %v2522 = vsel %vm1621, %v2503, 0
  %v2525 = vsel %vm1621, %v2504, 0
  %v2528 = vsel %vm1621, %v2505, 0
  %2530 = vmatpush.msra.mxu0 0.0
  %2531 = vmatpush.msra.mxu0 0.0
  %2532 = vmatpush.msra.mxu0 0.0
  %2533 = vmatpush.msra.mxu0 0.0
  %2534 = vmatpush.msra.mxu0 0.0
  %2535 = vmatpush.msra.mxu0 0.0
  %2536 = vmatpush.msra.mxu0 0.0
  %2537 = vmatpush.msra.mxu0 0.0
  %2538 = vmatpush.msra.mxu0 %v1612
  %2539 = vmatpush.msra.mxu0 %v1597
  %2540 = vmatpush.msra.mxu0 %v1582
  %2541 = vmatpush.msra.mxu0 %v1567
  %2542 = vmatpush.msra.mxu0 %v1552
  %2543 = vmatpush.msra.mxu0 %v1537
  %2544 = vmatpush.msra.mxu0 %v1522
  %2545 = vmatpush.msra.mxu0 %v1507
  %2546 = vmatmul.f32.gmra.mxu0 %v2507
  %v2547 = vpop.f32.mrf.mxu0
  %v2548 = vadd.f32 0.0, %v2547
  %2549 = vmatmul.f32.gmra.mxu0 %v2510
  %v2550 = vpop.f32.mrf.mxu0
  %v2551 = vadd.f32 0.0, %v2550
  %2552 = vmatmul.f32.gmra.mxu0 %v2513
  %v2553 = vpop.f32.mrf.mxu0
  %v2554 = vadd.f32 0.0, %v2553
  %2555 = vmatmul.f32.gmra.mxu0 %v2516
  %v2556 = vpop.f32.mrf.mxu0
  %v2557 = vadd.f32 0.0, %v2556
  %2558 = vmatmul.f32.gmra.mxu0 %v2519
  %v2559 = vpop.f32.mrf.mxu0
  %v2560 = vadd.f32 0.0, %v2559
  %2561 = vmatmul.f32.gmra.mxu0 %v2522
  %v2562 = vpop.f32.mrf.mxu0
  %v2563 = vadd.f32 0.0, %v2562
  %2564 = vmatmul.f32.gmra.mxu0 %v2525
  %v2565 = vpop.f32.mrf.mxu0
  %v2566 = vadd.f32 0.0, %v2565
  %2567 = vmatmul.f32.gmra.mxu0 %v2528
  %v2568 = vpop.f32.mrf.mxu0
  %v2569 = vadd.f32 0.0, %v2568
  %2570 = vdwg.mxu0
  %s2571 = scalar_lea.vmem %s2, 96
  %v2572 = vld [vmem:[%s2571] sm:$0xff]
  %v2573 = vld [vmem:[%s2571 + $0x8] sm:$0xff]
  %v2575 = vsel %vm1766, %v2548, 0
  %v2578 = vsel %vm1766, %v2551, 0
  %v2581 = vsel %vm1766, %v2554, 0
  %v2584 = vsel %vm1766, %v2557, 0
  %v2587 = vsel %vm1766, %v2560, 0
  %v2590 = vsel %vm1766, %v2563, 0
  %v2593 = vsel %vm1766, %v2566, 0
  %v2596 = vsel %vm1766, %v2569, 0
  %2598 = vmatpush.msra.mxu0 0.0
  %2599 = vmatpush.msra.mxu0 0.0
  %2600 = vmatpush.msra.mxu0 0.0
  %2601 = vmatpush.msra.mxu0 0.0
  %2602 = vmatpush.msra.mxu0 0.0
  %2603 = vmatpush.msra.mxu0 0.0
  %2604 = vmatpush.msra.mxu0 0.0
  %2605 = vmatpush.msra.mxu0 0.0
  %2606 = vmatpush.msra.mxu0 0.0
  %2607 = vmatpush.msra.mxu0 0.0
  %2608 = vmatpush.msra.mxu0 0.0
  %2609 = vmatpush.msra.mxu0 0.0
  %2610 = vmatpush.msra.mxu0 0.0
  %2611 = vmatpush.msra.mxu0 0.0
  %2612 = vmatpush.msra.mxu0 %v2573
  %2613 = vmatpush.msra.mxu0 %v2572
  %2614 = vmatmul.f32.gmra.mxu0 %v2575
  %v2615 = vpop.f32.mrf.mxu0
  %v2616 = vadd.f32 0.0, %v2615
  %2617 = vmatmul.f32.gmra.mxu0 %v2578
  %v2618 = vpop.f32.mrf.mxu0
  %v2619 = vadd.f32 0.0, %v2618
  %2620 = vmatmul.f32.gmra.mxu0 %v2581
  %v2621 = vpop.f32.mrf.mxu0
  %v2622 = vadd.f32 0.0, %v2621
  %2623 = vmatmul.f32.gmra.mxu0 %v2584
  %v2624 = vpop.f32.mrf.mxu0
  %v2625 = vadd.f32 0.0, %v2624
  %2626 = vmatmul.f32.gmra.mxu0 %v2587
  %v2627 = vpop.f32.mrf.mxu0
  %v2628 = vadd.f32 0.0, %v2627
  %2629 = vmatmul.f32.gmra.mxu0 %v2590
  %v2630 = vpop.f32.mrf.mxu0
  %v2631 = vadd.f32 0.0, %v2630
  %2632 = vmatmul.f32.gmra.mxu0 %v2593
  %v2633 = vpop.f32.mrf.mxu0
  %v2634 = vadd.f32 0.0, %v2633
  %2635 = vmatmul.f32.gmra.mxu0 %v2596
  %v2636 = vpop.f32.mrf.mxu0
  %v2637 = vadd.f32 0.0, %v2636
  %2638 = vdwg.mxu0
  %v2639 = vadd.f32 %v2489, %v2616
  %v2640 = vadd.f32 %v2490, %v2619
  %v2641 = vadd.f32 %v2491, %v2622
  %v2642 = vadd.f32 %v2492, %v2625
  %v2643 = vadd.f32 %v2493, %v2628
  %v2644 = vadd.f32 %v2494, %v2631
  %v2645 = vadd.f32 %v2495, %v2634
  %v2646 = vadd.f32 %v2496, %v2637
  %s2647 = scalar_lea.vmem %s5, 448
  %v2648 = vld [vmem:[%s2647] sm:$0xff]
  %v2649 = vld [vmem:[%s2647 + $0x8] sm:$0xff]
  %v2650 = vld [vmem:[%s2647 + $0x10] sm:$0xff]
  %v2651 = vld [vmem:[%s2647 + $0x18] sm:$0xff]
  %v2652 = vld [vmem:[%s2647 + $0x20] sm:$0xff]
  %v2653 = vld [vmem:[%s2647 + $0x28] sm:$0xff]
  %v2654 = vld [vmem:[%s2647 + $0x30] sm:$0xff]
  %v2655 = vld [vmem:[%s2647 + $0x38] sm:$0xff]
  %v2657 = vsel %vm1621, %v2648, 0
  %v2660 = vsel %vm1621, %v2649, 0
  %v2663 = vsel %vm1621, %v2650, 0
  %v2666 = vsel %vm1621, %v2651, 0
  %v2669 = vsel %vm1621, %v2652, 0
  %v2672 = vsel %vm1621, %v2653, 0
  %v2675 = vsel %vm1621, %v2654, 0
  %v2678 = vsel %vm1621, %v2655, 0
  %2680 = vmatpush.msra.mxu0 0.0
  %2681 = vmatpush.msra.mxu0 0.0
  %2682 = vmatpush.msra.mxu0 0.0
  %2683 = vmatpush.msra.mxu0 0.0
  %2684 = vmatpush.msra.mxu0 0.0
  %2685 = vmatpush.msra.mxu0 0.0
  %2686 = vmatpush.msra.mxu0 0.0
  %2687 = vmatpush.msra.mxu0 0.0
  %2688 = vmatpush.msra.mxu0 %v1612
  %2689 = vmatpush.msra.mxu0 %v1597
  %2690 = vmatpush.msra.mxu0 %v1582
  %2691 = vmatpush.msra.mxu0 %v1567
  %2692 = vmatpush.msra.mxu0 %v1552
  %2693 = vmatpush.msra.mxu0 %v1537
  %2694 = vmatpush.msra.mxu0 %v1522
  %2695 = vmatpush.msra.mxu0 %v1507
  %2696 = vmatmul.f32.gmra.mxu0 %v2657
  %v2697 = vpop.f32.mrf.mxu0
  %v2698 = vadd.f32 0.0, %v2697
  %2699 = vmatmul.f32.gmra.mxu0 %v2660
  %v2700 = vpop.f32.mrf.mxu0
  %v2701 = vadd.f32 0.0, %v2700
  %2702 = vmatmul.f32.gmra.mxu0 %v2663
  %v2703 = vpop.f32.mrf.mxu0
  %v2704 = vadd.f32 0.0, %v2703
  %2705 = vmatmul.f32.gmra.mxu0 %v2666
  %v2706 = vpop.f32.mrf.mxu0
  %v2707 = vadd.f32 0.0, %v2706
  %2708 = vmatmul.f32.gmra.mxu0 %v2669
  %v2709 = vpop.f32.mrf.mxu0
  %v2710 = vadd.f32 0.0, %v2709
  %2711 = vmatmul.f32.gmra.mxu0 %v2672
  %v2712 = vpop.f32.mrf.mxu0
  %v2713 = vadd.f32 0.0, %v2712
  %2714 = vmatmul.f32.gmra.mxu0 %v2675
  %v2715 = vpop.f32.mrf.mxu0
  %v2716 = vadd.f32 0.0, %v2715
  %2717 = vmatmul.f32.gmra.mxu0 %v2678
  %v2718 = vpop.f32.mrf.mxu0
  %v2719 = vadd.f32 0.0, %v2718
  %2720 = vdwg.mxu0
  %s2721 = scalar_lea.vmem %s2, 112
  %v2722 = vld [vmem:[%s2721] sm:$0xff]
  %v2723 = vld [vmem:[%s2721 + $0x8] sm:$0xff]
  %v2725 = vsel %vm1766, %v2698, 0
  %v2728 = vsel %vm1766, %v2701, 0
  %v2731 = vsel %vm1766, %v2704, 0
  %v2734 = vsel %vm1766, %v2707, 0
  %v2737 = vsel %vm1766, %v2710, 0
  %v2740 = vsel %vm1766, %v2713, 0
  %v2743 = vsel %vm1766, %v2716, 0
  %v2746 = vsel %vm1766, %v2719, 0
  %2748 = vmatpush.msra.mxu0 0.0
  %2749 = vmatpush.msra.mxu0 0.0
  %2750 = vmatpush.msra.mxu0 0.0
  %2751 = vmatpush.msra.mxu0 0.0
  %2752 = vmatpush.msra.mxu0 0.0
  %2753 = vmatpush.msra.mxu0 0.0
  %2754 = vmatpush.msra.mxu0 0.0
  %2755 = vmatpush.msra.mxu0 0.0
  %2756 = vmatpush.msra.mxu0 0.0
  %2757 = vmatpush.msra.mxu0 0.0
  %2758 = vmatpush.msra.mxu0 0.0
  %2759 = vmatpush.msra.mxu0 0.0
  %2760 = vmatpush.msra.mxu0 0.0
  %2761 = vmatpush.msra.mxu0 0.0
  %2762 = vmatpush.msra.mxu0 %v2723
  %2763 = vmatpush.msra.mxu0 %v2722
  %2764 = vmatmul.f32.gmra.mxu0 %v2725
  %v2765 = vpop.f32.mrf.mxu0
  %v2766 = vadd.f32 0.0, %v2765
  %2767 = vmatmul.f32.gmra.mxu0 %v2728
  %v2768 = vpop.f32.mrf.mxu0
  %v2769 = vadd.f32 0.0, %v2768
  %2770 = vmatmul.f32.gmra.mxu0 %v2731
  %v2771 = vpop.f32.mrf.mxu0
  %v2772 = vadd.f32 0.0, %v2771
  %2773 = vmatmul.f32.gmra.mxu0 %v2734
  %v2774 = vpop.f32.mrf.mxu0
  %v2775 = vadd.f32 0.0, %v2774
  %2776 = vmatmul.f32.gmra.mxu0 %v2737
  %v2777 = vpop.f32.mrf.mxu0
  %v2778 = vadd.f32 0.0, %v2777
  %2779 = vmatmul.f32.gmra.mxu0 %v2740
  %v2780 = vpop.f32.mrf.mxu0
  %v2781 = vadd.f32 0.0, %v2780
  %2782 = vmatmul.f32.gmra.mxu0 %v2743
  %v2783 = vpop.f32.mrf.mxu0
  %v2784 = vadd.f32 0.0, %v2783
  %2785 = vmatmul.f32.gmra.mxu0 %v2746
  %v2786 = vpop.f32.mrf.mxu0
  %v2787 = vadd.f32 0.0, %v2786
  %2788 = vdwg.mxu0
  %v2789 = vadd.f32 %v2639, %v2766
  %v2790 = vadd.f32 %v2640, %v2769
  %v2791 = vadd.f32 %v2641, %v2772
  %v2792 = vadd.f32 %v2642, %v2775
  %v2793 = vadd.f32 %v2643, %v2778
  %v2794 = vadd.f32 %v2644, %v2781
  %v2795 = vadd.f32 %v2645, %v2784
  %v2796 = vadd.f32 %v2646, %v2787
  %s2797 = scalar_lea.vmem %s5, 512
  %v2798 = vld [vmem:[%s2797] sm:$0xff]
  %v2799 = vld [vmem:[%s2797 + $0x8] sm:$0xff]
  %v2800 = vld [vmem:[%s2797 + $0x10] sm:$0xff]
  %v2801 = vld [vmem:[%s2797 + $0x18] sm:$0xff]
  %v2802 = vld [vmem:[%s2797 + $0x20] sm:$0xff]
  %v2803 = vld [vmem:[%s2797 + $0x28] sm:$0xff]
  %v2804 = vld [vmem:[%s2797 + $0x30] sm:$0xff]
  %v2805 = vld [vmem:[%s2797 + $0x38] sm:$0xff]
  %v2807 = vsel %vm1621, %v2798, 0
  %v2810 = vsel %vm1621, %v2799, 0
  %v2813 = vsel %vm1621, %v2800, 0
  %v2816 = vsel %vm1621, %v2801, 0
  %v2819 = vsel %vm1621, %v2802, 0
  %v2822 = vsel %vm1621, %v2803, 0
  %v2825 = vsel %vm1621, %v2804, 0
  %v2828 = vsel %vm1621, %v2805, 0
  %2830 = vmatpush.msra.mxu0 0.0
  %2831 = vmatpush.msra.mxu0 0.0
  %2832 = vmatpush.msra.mxu0 0.0
  %2833 = vmatpush.msra.mxu0 0.0
  %2834 = vmatpush.msra.mxu0 0.0
  %2835 = vmatpush.msra.mxu0 0.0
  %2836 = vmatpush.msra.mxu0 0.0
  %2837 = vmatpush.msra.mxu0 0.0
  %2838 = vmatpush.msra.mxu0 %v1612
  %2839 = vmatpush.msra.mxu0 %v1597
  %2840 = vmatpush.msra.mxu0 %v1582
  %2841 = vmatpush.msra.mxu0 %v1567
  %2842 = vmatpush.msra.mxu0 %v1552
  %2843 = vmatpush.msra.mxu0 %v1537
  %2844 = vmatpush.msra.mxu0 %v1522
  %2845 = vmatpush.msra.mxu0 %v1507
  %2846 = vmatmul.f32.gmra.mxu0 %v2807
  %v2847 = vpop.f32.mrf.mxu0
  %v2848 = vadd.f32 0.0, %v2847
  %2849 = vmatmul.f32.gmra.mxu0 %v2810
  %v2850 = vpop.f32.mrf.mxu0
  %v2851 = vadd.f32 0.0, %v2850
  %2852 = vmatmul.f32.gmra.mxu0 %v2813
  %v2853 = vpop.f32.mrf.mxu0
  %v2854 = vadd.f32 0.0, %v2853
  %2855 = vmatmul.f32.gmra.mxu0 %v2816
  %v2856 = vpop.f32.mrf.mxu0
  %v2857 = vadd.f32 0.0, %v2856
  %2858 = vmatmul.f32.gmra.mxu0 %v2819
  %v2859 = vpop.f32.mrf.mxu0
  %v2860 = vadd.f32 0.0, %v2859
  %2861 = vmatmul.f32.gmra.mxu0 %v2822
  %v2862 = vpop.f32.mrf.mxu0
  %v2863 = vadd.f32 0.0, %v2862
  %2864 = vmatmul.f32.gmra.mxu0 %v2825
  %v2865 = vpop.f32.mrf.mxu0
  %v2866 = vadd.f32 0.0, %v2865
  %2867 = vmatmul.f32.gmra.mxu0 %v2828
  %v2868 = vpop.f32.mrf.mxu0
  %v2869 = vadd.f32 0.0, %v2868
  %2870 = vdwg.mxu0
  %s2871 = scalar_lea.vmem %s2, 128
  %v2872 = vld [vmem:[%s2871] sm:$0xff]
  %v2873 = vld [vmem:[%s2871 + $0x8] sm:$0xff]
  %v2875 = vsel %vm1766, %v2848, 0
  %v2878 = vsel %vm1766, %v2851, 0
  %v2881 = vsel %vm1766, %v2854, 0
  %v2884 = vsel %vm1766, %v2857, 0
  %v2887 = vsel %vm1766, %v2860, 0
  %v2890 = vsel %vm1766, %v2863, 0
  %v2893 = vsel %vm1766, %v2866, 0
  %v2896 = vsel %vm1766, %v2869, 0
  %2898 = vmatpush.msra.mxu0 0.0
  %2899 = vmatpush.msra.mxu0 0.0
  %2900 = vmatpush.msra.mxu0 0.0
  %2901 = vmatpush.msra.mxu0 0.0
  %2902 = vmatpush.msra.mxu0 0.0
  %2903 = vmatpush.msra.mxu0 0.0
  %2904 = vmatpush.msra.mxu0 0.0
  %2905 = vmatpush.msra.mxu0 0.0
  %2906 = vmatpush.msra.mxu0 0.0
  %2907 = vmatpush.msra.mxu0 0.0
  %2908 = vmatpush.msra.mxu0 0.0
  %2909 = vmatpush.msra.mxu0 0.0
  %2910 = vmatpush.msra.mxu0 0.0
  %2911 = vmatpush.msra.mxu0 0.0
  %2912 = vmatpush.msra.mxu0 %v2873
  %2913 = vmatpush.msra.mxu0 %v2872
  %2914 = vmatmul.f32.gmra.mxu0 %v2875
  %v2915 = vpop.f32.mrf.mxu0
  %v2916 = vadd.f32 0.0, %v2915
  %2917 = vmatmul.f32.gmra.mxu0 %v2878
  %v2918 = vpop.f32.mrf.mxu0
  %v2919 = vadd.f32 0.0, %v2918
  %2920 = vmatmul.f32.gmra.mxu0 %v2881
  %v2921 = vpop.f32.mrf.mxu0
  %v2922 = vadd.f32 0.0, %v2921
  %2923 = vmatmul.f32.gmra.mxu0 %v2884
  %v2924 = vpop.f32.mrf.mxu0
  %v2925 = vadd.f32 0.0, %v2924
  %2926 = vmatmul.f32.gmra.mxu0 %v2887
  %v2927 = vpop.f32.mrf.mxu0
  %v2928 = vadd.f32 0.0, %v2927
  %2929 = vmatmul.f32.gmra.mxu0 %v2890
  %v2930 = vpop.f32.mrf.mxu0
  %v2931 = vadd.f32 0.0, %v2930
  %2932 = vmatmul.f32.gmra.mxu0 %v2893
  %v2933 = vpop.f32.mrf.mxu0
  %v2934 = vadd.f32 0.0, %v2933
  %2935 = vmatmul.f32.gmra.mxu0 %v2896
  %v2936 = vpop.f32.mrf.mxu0
  %v2937 = vadd.f32 0.0, %v2936
  %2938 = vdwg.mxu0
  %v2939 = vadd.f32 %v2789, %v2916
  %v2940 = vadd.f32 %v2790, %v2919
  %v2941 = vadd.f32 %v2791, %v2922
  %v2942 = vadd.f32 %v2792, %v2925
  %v2943 = vadd.f32 %v2793, %v2928
  %v2944 = vadd.f32 %v2794, %v2931
  %v2945 = vadd.f32 %v2795, %v2934
  %v2946 = vadd.f32 %v2796, %v2937
  %v2947 = vld [vmem:[%s9] sm:$0xff]
  %v2948 = vld [vmem:[%s9 + $0x8] sm:$0xff]
  %v2949 = vld [vmem:[%s9 + $0x10] sm:$0xff]
  %v2950 = vld [vmem:[%s9 + $0x18] sm:$0xff]
  %v2951 = vld [vmem:[%s9 + $0x20] sm:$0xff]
  %v2952 = vld [vmem:[%s9 + $0x28] sm:$0xff]
  %v2953 = vld [vmem:[%s9 + $0x30] sm:$0xff]
  %v2954 = vld [vmem:[%s9 + $0x38] sm:$0xff]
  %2956 = vset.pattern.permute.xlu0 0
  %2957 = vperm.xlu0 %2956, %v2947
  %v2958 = vpop.permute.xlu0 %2957
  %2961 = vset.pattern.permute.xlu0 0
  %2962 = vperm.xlu0 %2961, %v2948
  %v2963 = vpop.permute.xlu0 %2962
  %2966 = vset.pattern.permute.xlu0 0
  %2967 = vperm.xlu0 %2966, %v2949
  %v2968 = vpop.permute.xlu0 %2967
  %2971 = vset.pattern.permute.xlu0 0
  %2972 = vperm.xlu0 %2971, %v2950
  %v2973 = vpop.permute.xlu0 %2972
  %2976 = vset.pattern.permute.xlu0 0
  %2977 = vperm.xlu0 %2976, %v2951
  %v2978 = vpop.permute.xlu0 %2977
  %2981 = vset.pattern.permute.xlu0 0
  %2982 = vperm.xlu0 %2981, %v2952
  %v2983 = vpop.permute.xlu0 %2982
  %2986 = vset.pattern.permute.xlu0 0
  %2987 = vperm.xlu0 %2986, %v2953
  %v2988 = vpop.permute.xlu0 %2987
  %2991 = vset.pattern.permute.xlu0 0
  %2992 = vperm.xlu0 %2991, %v2954
  %v2993 = vpop.permute.xlu0 %2992
  %v2995 = vadd.f32 %v2939, %v2958
  %v2996 = vadd.f32 %v2940, %v2963
  %v2997 = vadd.f32 %v2941, %v2968
  %v2998 = vadd.f32 %v2942, %v2973
  %v2999 = vadd.f32 %v2943, %v2978
  %v3000 = vadd.f32 %v2944, %v2983
  %v3001 = vadd.f32 %v2945, %v2988
  %v3002 = vadd.f32 %v2946, %v2993
  %v3003 = vxor.u32 %v2995, 2147483648
  %v3004 = vxor.u32 %v2996, 2147483648
  %v3005 = vxor.u32 %v2997, 2147483648
  %v3006 = vxor.u32 %v2998, 2147483648
  %v3007 = vxor.u32 %v2999, 2147483648
  %v3008 = vxor.u32 %v3000, 2147483648
  %v3009 = vxor.u32 %v3001, 2147483648
  %v3010 = vxor.u32 %v3002, 2147483648
  %v3011 = vmul.f32 %v3003, 1.442695
  %v3012 = vpow.pop %v3011
  %v3013 = vmul.f32 %v3004, 1.442695
  %v3014 = vpow.pop %v3013
  %v3015 = vmul.f32 %v3005, 1.442695
  %v3016 = vpow.pop %v3015
  %v3017 = vmul.f32 %v3006, 1.442695
  %v3018 = vpow.pop %v3017
  %v3019 = vmul.f32 %v3007, 1.442695
  %v3020 = vpow.pop %v3019
  %v3021 = vmul.f32 %v3008, 1.442695
  %v3022 = vpow.pop %v3021
  %v3023 = vmul.f32 %v3009, 1.442695
  %v3024 = vpow.pop %v3023
  %v3025 = vmul.f32 %v3010, 1.442695
  %v3026 = vpow.pop %v3025
  %v3027 = vadd.f32 %v3012, 1.0
  %v3028 = vadd.f32 %v3014, 1.0
  %v3029 = vadd.f32 %v3016, 1.0
  %v3030 = vadd.f32 %v3018, 1.0
  %v3031 = vadd.f32 %v3020, 1.0
  %v3032 = vadd.f32 %v3022, 1.0
  %v3033 = vadd.f32 %v3024, 1.0
  %v3034 = vadd.f32 %v3026, 1.0
  %v3035 = vrcp.pop %v3027
  %v3036 = vmul.f32 %v3027, %v3035
  %v3037 = vsub.f32 1.0, %v3036
  %v3038 = vmul.f32 %v3035, %v3037
  %v3039 = vadd.f32 %v3035, %v3038
  %vm3040 = vweird.f32 %v3027
  %vm3041 = vweird.f32 %v3035
  %vm3042 = vmor %vm3040, %vm3041
  %v3043 = vsel %vm3042, %v3035, %v3039
  %v3044 = vand.u32 2147483647, %v3027
  %vm3045 = vcmp.eq.f32.partialorder %v3044, 8.507059e+37
  %v3046 = vand.u32 %v3027, 2147483648
  %v3047 = vor.u32 1.1754944e-38, %v3046
  %v3048 = vsel %vm3045, %v3047, %v3043
  %v3049 = vmul.f32 1.0, %v3048
  %v3050 = vrcp.pop %v3028
  %v3051 = vmul.f32 %v3028, %v3050
  %v3052 = vsub.f32 1.0, %v3051
  %v3053 = vmul.f32 %v3050, %v3052
  %v3054 = vadd.f32 %v3050, %v3053
  %vm3055 = vweird.f32 %v3028
  %vm3056 = vweird.f32 %v3050
  %vm3057 = vmor %vm3055, %vm3056
  %v3058 = vsel %vm3057, %v3050, %v3054
  %v3059 = vand.u32 2147483647, %v3028
  %vm3060 = vcmp.eq.f32.partialorder %v3059, 8.507059e+37
  %v3061 = vand.u32 %v3028, 2147483648
  %v3062 = vor.u32 1.1754944e-38, %v3061
  %v3063 = vsel %vm3060, %v3062, %v3058
  %v3064 = vmul.f32 1.0, %v3063
  %v3065 = vrcp.pop %v3029
  %v3066 = vmul.f32 %v3029, %v3065
  %v3067 = vsub.f32 1.0, %v3066
  %v3068 = vmul.f32 %v3065, %v3067
  %v3069 = vadd.f32 %v3065, %v3068
  %vm3070 = vweird.f32 %v3029
  %vm3071 = vweird.f32 %v3065
  %vm3072 = vmor %vm3070, %vm3071
  %v3073 = vsel %vm3072, %v3065, %v3069
  %v3074 = vand.u32 2147483647, %v3029
  %vm3075 = vcmp.eq.f32.partialorder %v3074, 8.507059e+37
  %v3076 = vand.u32 %v3029, 2147483648
  %v3077 = vor.u32 1.1754944e-38, %v3076
  %v3078 = vsel %vm3075, %v3077, %v3073
  %v3079 = vmul.f32 1.0, %v3078
  %v3080 = vrcp.pop %v3030
  %v3081 = vmul.f32 %v3030, %v3080
  %v3082 = vsub.f32 1.0, %v3081
  %v3083 = vmul.f32 %v3080, %v3082
  %v3084 = vadd.f32 %v3080, %v3083
  %vm3085 = vweird.f32 %v3030
  %vm3086 = vweird.f32 %v3080
  %vm3087 = vmor %vm3085, %vm3086
  %v3088 = vsel %vm3087, %v3080, %v3084
  %v3089 = vand.u32 2147483647, %v3030
  %vm3090 = vcmp.eq.f32.partialorder %v3089, 8.507059e+37
  %v3091 = vand.u32 %v3030, 2147483648
  %v3092 = vor.u32 1.1754944e-38, %v3091
  %v3093 = vsel %vm3090, %v3092, %v3088
  %v3094 = vmul.f32 1.0, %v3093
  %v3095 = vrcp.pop %v3031
  %v3096 = vmul.f32 %v3031, %v3095
  %v3097 = vsub.f32 1.0, %v3096
  %v3098 = vmul.f32 %v3095, %v3097
  %v3099 = vadd.f32 %v3095, %v3098
  %vm3100 = vweird.f32 %v3031
  %vm3101 = vweird.f32 %v3095
  %vm3102 = vmor %vm3100, %vm3101
  %v3103 = vsel %vm3102, %v3095, %v3099
  %v3104 = vand.u32 2147483647, %v3031
  %vm3105 = vcmp.eq.f32.partialorder %v3104, 8.507059e+37
  %v3106 = vand.u32 %v3031, 2147483648
  %v3107 = vor.u32 1.1754944e-38, %v3106
  %v3108 = vsel %vm3105, %v3107, %v3103
  %v3109 = vmul.f32 1.0, %v3108
  %v3110 = vrcp.pop %v3032
  %v3111 = vmul.f32 %v3032, %v3110
  %v3112 = vsub.f32 1.0, %v3111
  %v3113 = vmul.f32 %v3110, %v3112
  %v3114 = vadd.f32 %v3110, %v3113
  %vm3115 = vweird.f32 %v3032
  %vm3116 = vweird.f32 %v3110
  %vm3117 = vmor %vm3115, %vm3116
  %v3118 = vsel %vm3117, %v3110, %v3114
  %v3119 = vand.u32 2147483647, %v3032
  %vm3120 = vcmp.eq.f32.partialorder %v3119, 8.507059e+37
  %v3121 = vand.u32 %v3032, 2147483648
  %v3122 = vor.u32 1.1754944e-38, %v3121
  %v3123 = vsel %vm3120, %v3122, %v3118
  %v3124 = vmul.f32 1.0, %v3123
  %v3125 = vrcp.pop %v3033
  %v3126 = vmul.f32 %v3033, %v3125
  %v3127 = vsub.f32 1.0, %v3126
  %v3128 = vmul.f32 %v3125, %v3127
  %v3129 = vadd.f32 %v3125, %v3128
  %vm3130 = vweird.f32 %v3033
  %vm3131 = vweird.f32 %v3125
  %vm3132 = vmor %vm3130, %vm3131
  %v3133 = vsel %vm3132, %v3125, %v3129
  %v3134 = vand.u32 2147483647, %v3033
  %vm3135 = vcmp.eq.f32.partialorder %v3134, 8.507059e+37
  %v3136 = vand.u32 %v3033, 2147483648
  %v3137 = vor.u32 1.1754944e-38, %v3136
  %v3138 = vsel %vm3135, %v3137, %v3133
  %v3139 = vmul.f32 1.0, %v3138
  %v3140 = vrcp.pop %v3034
  %v3141 = vmul.f32 %v3034, %v3140
  %v3142 = vsub.f32 1.0, %v3141
  %v3143 = vmul.f32 %v3140, %v3142
  %v3144 = vadd.f32 %v3140, %v3143
  %vm3145 = vweird.f32 %v3034
  %vm3146 = vweird.f32 %v3140
  %vm3147 = vmor %vm3145, %vm3146
  %v3148 = vsel %vm3147, %v3140, %v3144
  %v3149 = vand.u32 2147483647, %v3034
  %vm3150 = vcmp.eq.f32.partialorder %v3149, 8.507059e+37
  %v3151 = vand.u32 %v3034, 2147483648
  %v3152 = vor.u32 1.1754944e-38, %v3151
  %v3153 = vsel %vm3150, %v3152, %v3148
  %v3154 = vmul.f32 1.0, %v3153
  %v3155 = vld [vmem:[%s6] sm:$0xff]
  %v3156 = vld [vmem:[%s6 + $0x8] sm:$0xff]
  %v3157 = vld [vmem:[%s6 + $0x10] sm:$0xff]
  %v3158 = vld [vmem:[%s6 + $0x18] sm:$0xff]
  %v3159 = vld [vmem:[%s6 + $0x20] sm:$0xff]
  %v3160 = vld [vmem:[%s6 + $0x28] sm:$0xff]
  %v3161 = vld [vmem:[%s6 + $0x30] sm:$0xff]
  %v3162 = vld [vmem:[%s6 + $0x38] sm:$0xff]
  %v3164 = vsel %vm1621, %v3155, 0
  %v3167 = vsel %vm1621, %v3156, 0
  %v3170 = vsel %vm1621, %v3157, 0
  %v3173 = vsel %vm1621, %v3158, 0
  %v3176 = vsel %vm1621, %v3159, 0
  %v3179 = vsel %vm1621, %v3160, 0
  %v3182 = vsel %vm1621, %v3161, 0
  %v3185 = vsel %vm1621, %v3162, 0
  %3187 = vmatpush.msra.mxu0 0.0
  %3188 = vmatpush.msra.mxu0 0.0
  %3189 = vmatpush.msra.mxu0 0.0
  %3190 = vmatpush.msra.mxu0 0.0
  %3191 = vmatpush.msra.mxu0 0.0
  %3192 = vmatpush.msra.mxu0 0.0
  %3193 = vmatpush.msra.mxu0 0.0
  %3194 = vmatpush.msra.mxu0 0.0
  %3195 = vmatpush.msra.mxu0 %v3154
  %3196 = vmatpush.msra.mxu0 %v3139
  %3197 = vmatpush.msra.mxu0 %v3124
  %3198 = vmatpush.msra.mxu0 %v3109
  %3199 = vmatpush.msra.mxu0 %v3094
  %3200 = vmatpush.msra.mxu0 %v3079
  %3201 = vmatpush.msra.mxu0 %v3064
  %3202 = vmatpush.msra.mxu0 %v3049
  %3203 = vmatmul.f32.gmra.mxu0 %v3164
  %v3204 = vpop.f32.mrf.mxu0
  %v3205 = vadd.f32 0.0, %v3204
  %3206 = vmatmul.f32.gmra.mxu0 %v3167
  %v3207 = vpop.f32.mrf.mxu0
  %v3208 = vadd.f32 0.0, %v3207
  %3209 = vmatmul.f32.gmra.mxu0 %v3170
  %v3210 = vpop.f32.mrf.mxu0
  %v3211 = vadd.f32 0.0, %v3210
  %3212 = vmatmul.f32.gmra.mxu0 %v3173
  %v3213 = vpop.f32.mrf.mxu0
  %v3214 = vadd.f32 0.0, %v3213
  %3215 = vmatmul.f32.gmra.mxu0 %v3176
  %v3216 = vpop.f32.mrf.mxu0
  %v3217 = vadd.f32 0.0, %v3216
  %3218 = vmatmul.f32.gmra.mxu0 %v3179
  %v3219 = vpop.f32.mrf.mxu0
  %v3220 = vadd.f32 0.0, %v3219
  %3221 = vmatmul.f32.gmra.mxu0 %v3182
  %v3222 = vpop.f32.mrf.mxu0
  %v3223 = vadd.f32 0.0, %v3222
  %3224 = vmatmul.f32.gmra.mxu0 %v3185
  %v3225 = vpop.f32.mrf.mxu0
  %v3226 = vadd.f32 0.0, %v3225
  %3227 = vdwg.mxu0
  %v3228 = vld [vmem:[%s3] sm:$0xff]
  %v3229 = vld [vmem:[%s3 + $0x8] sm:$0xff]
  %v3230 = vld [vmem:[%s3 + $0x10] sm:$0xff]
  %v3231 = vld [vmem:[%s3 + $0x18] sm:$0xff]
  %v3232 = vld [vmem:[%s3 + $0x20] sm:$0xff]
  %v3233 = vld [vmem:[%s3 + $0x28] sm:$0xff]
  %v3234 = vld [vmem:[%s3 + $0x30] sm:$0xff]
  %v3235 = vld [vmem:[%s3 + $0x38] sm:$0xff]
  %v3236 = vld [vmem:[%s3 + $0x40] sm:$0xff]
  %v3237 = vld [vmem:[%s3 + $0x48] sm:$0xff]
  %v3238 = vld [vmem:[%s3 + $0x50] sm:$0xff]
  %v3239 = vld [vmem:[%s3 + $0x58] sm:$0xff]
  %v3240 = vld [vmem:[%s3 + $0x60] sm:$0x1]
  %v3241 = vld [vmem:[%s3 + $0x68] sm:$0x1]
  %s3242 = scalar_lea.vmem %s6, 64
  %v3243 = vld [vmem:[%s3242] sm:$0xff]
  %v3244 = vld [vmem:[%s3242 + $0x8] sm:$0xff]
  %v3245 = vld [vmem:[%s3242 + $0x10] sm:$0xff]
  %v3246 = vld [vmem:[%s3242 + $0x18] sm:$0xff]
  %v3247 = vld [vmem:[%s3242 + $0x20] sm:$0xff]
  %v3248 = vld [vmem:[%s3242 + $0x28] sm:$0xff]
  %v3249 = vld [vmem:[%s3242 + $0x30] sm:$0xff]
  %v3250 = vld [vmem:[%s3242 + $0x38] sm:$0xff]
  %v3252 = vsel %vm1621, %v3243, 0
  %v3255 = vsel %vm1621, %v3244, 0
  %v3258 = vsel %vm1621, %v3245, 0
  %v3261 = vsel %vm1621, %v3246, 0
  %v3264 = vsel %vm1621, %v3247, 0
  %v3267 = vsel %vm1621, %v3248, 0
  %v3270 = vsel %vm1621, %v3249, 0
  %v3273 = vsel %vm1621, %v3250, 0
  %3275 = vmatpush.msra.mxu0 0.0
  %3276 = vmatpush.msra.mxu0 0.0
  %3277 = vmatpush.msra.mxu0 0.0
  %3278 = vmatpush.msra.mxu0 0.0
  %3279 = vmatpush.msra.mxu0 0.0
  %3280 = vmatpush.msra.mxu0 0.0
  %3281 = vmatpush.msra.mxu0 0.0
  %3282 = vmatpush.msra.mxu0 0.0
  %3283 = vmatpush.msra.mxu0 %v3154
  %3284 = vmatpush.msra.mxu0 %v3139
  %3285 = vmatpush.msra.mxu0 %v3124
  %3286 = vmatpush.msra.mxu0 %v3109
  %3287 = vmatpush.msra.mxu0 %v3094
  %3288 = vmatpush.msra.mxu0 %v3079
  %3289 = vmatpush.msra.mxu0 %v3064
  %3290 = vmatpush.msra.mxu0 %v3049
  %3291 = vmatmul.f32.gmra.mxu0 %v3252
  %v3292 = vpop.f32.mrf.mxu0
  %v3293 = vadd.f32 0.0, %v3292
  %3294 = vmatmul.f32.gmra.mxu0 %v3255
  %v3295 = vpop.f32.mrf.mxu0
  %v3296 = vadd.f32 0.0, %v3295
  %3297 = vmatmul.f32.gmra.mxu0 %v3258
  %v3298 = vpop.f32.mrf.mxu0
  %v3299 = vadd.f32 0.0, %v3298
  %3300 = vmatmul.f32.gmra.mxu0 %v3261
  %v3301 = vpop.f32.mrf.mxu0
  %v3302 = vadd.f32 0.0, %v3301
  %3303 = vmatmul.f32.gmra.mxu0 %v3264
  %v3304 = vpop.f32.mrf.mxu0
  %v3305 = vadd.f32 0.0, %v3304
  %3306 = vmatmul.f32.gmra.mxu0 %v3267
  %v3307 = vpop.f32.mrf.mxu0
  %v3308 = vadd.f32 0.0, %v3307
  %3309 = vmatmul.f32.gmra.mxu0 %v3270
  %v3310 = vpop.f32.mrf.mxu0
  %v3311 = vadd.f32 0.0, %v3310
  %3312 = vmatmul.f32.gmra.mxu0 %v3273
  %v3313 = vpop.f32.mrf.mxu0
  %v3314 = vadd.f32 0.0, %v3313
  %3315 = vdwg.mxu0
  %s3316 = scalar_lea.vmem %s3, 112
  %v3317 = vld [vmem:[%s3316] sm:$0xff]
  %v3318 = vld [vmem:[%s3316 + $0x8] sm:$0xff]
  %v3319 = vld [vmem:[%s3316 + $0x10] sm:$0xff]
  %v3320 = vld [vmem:[%s3316 + $0x18] sm:$0xff]
  %v3321 = vld [vmem:[%s3316 + $0x20] sm:$0xff]
  %v3322 = vld [vmem:[%s3316 + $0x28] sm:$0xff]
  %v3323 = vld [vmem:[%s3316 + $0x30] sm:$0xff]
  %v3324 = vld [vmem:[%s3316 + $0x38] sm:$0xff]
  %v3325 = vld [vmem:[%s3316 + $0x40] sm:$0xff]
  %v3326 = vld [vmem:[%s3316 + $0x48] sm:$0xff]
  %v3327 = vld [vmem:[%s3316 + $0x50] sm:$0xff]
  %v3328 = vld [vmem:[%s3316 + $0x58] sm:$0xff]
  %v3329 = vld [vmem:[%s3316 + $0x60] sm:$0x1]
  %v3330 = vld [vmem:[%s3316 + $0x68] sm:$0x1]
  %vm3331 = vcmask 400384
  %v3333 = vsel %vm3331, %v3293, 0
  %v3336 = vsel %vm3331, %v3296, 0
  %v3339 = vsel %vm3331, %v3299, 0
  %v3342 = vsel %vm3331, %v3302, 0
  %v3345 = vsel %vm3331, %v3305, 0
  %v3348 = vsel %vm3331, %v3308, 0
  %v3351 = vsel %vm3331, %v3311, 0
  %v3354 = vsel %vm3331, %v3314, 0
  %vm3356 = vcmask 1040384
  %v3358 = vsel %vm3356, %v3329, 0
  %v3361 = vsel %vm3356, %v3330, 0
  %3363 = vmatpush.msra.mxu0 0.0
  %3364 = vmatpush.msra.mxu0 0.0
  %3365 = vmatpush.msra.mxu0 0.0
  %3366 = vmatpush.msra.mxu0 0.0
  %3367 = vmatpush.msra.mxu0 0.0
  %3368 = vmatpush.msra.mxu0 0.0
  %3369 = vmatpush.msra.mxu0 0.0
  %3370 = vmatpush.msra.mxu0 0.0
  %3371 = vmatpush.msra.mxu0 0.0
  %3372 = vmatpush.msra.mxu0 %v3358
  %3373 = vmatpush.msra.mxu0 %v3327
  %3374 = vmatpush.msra.mxu0 %v3325
  %3375 = vmatpush.msra.mxu0 %v3323
  %3376 = vmatpush.msra.mxu0 %v3321
  %3377 = vmatpush.msra.mxu0 %v3319
  %3378 = vmatpush.msra.mxu0 %v3317
  %3379 = vmatmul.f32.gmra.mxu0 %v3333
  %v3380 = vpop.f32.mrf.mxu0
  %v3381 = vadd.f32 0.0, %v3380
  %3382 = vmatmul.f32.gmra.mxu0 %v3336
  %v3383 = vpop.f32.mrf.mxu0
  %v3384 = vadd.f32 0.0, %v3383
  %3385 = vmatmul.f32.gmra.mxu0 %v3339
  %v3386 = vpop.f32.mrf.mxu0
  %v3387 = vadd.f32 0.0, %v3386
  %3388 = vmatmul.f32.gmra.mxu0 %v3342
  %v3389 = vpop.f32.mrf.mxu0
  %v3390 = vadd.f32 0.0, %v3389
  %3391 = vmatmul.f32.gmra.mxu0 %v3345
  %v3392 = vpop.f32.mrf.mxu0
  %v3393 = vadd.f32 0.0, %v3392
  %3394 = vmatmul.f32.gmra.mxu0 %v3348
  %v3395 = vpop.f32.mrf.mxu0
  %v3396 = vadd.f32 0.0, %v3395
  %3397 = vmatmul.f32.gmra.mxu0 %v3351
  %v3398 = vpop.f32.mrf.mxu0
  %v3399 = vadd.f32 0.0, %v3398
  %3400 = vmatmul.f32.gmra.mxu0 %v3354
  %v3401 = vpop.f32.mrf.mxu0
  %v3402 = vadd.f32 0.0, %v3401
  %3403 = vdwg.mxu0
  %3404 = vmatpush.msra.mxu0 0.0
  %3405 = vmatpush.msra.mxu0 0.0
  %3406 = vmatpush.msra.mxu0 0.0
  %3407 = vmatpush.msra.mxu0 0.0
  %3408 = vmatpush.msra.mxu0 0.0
  %3409 = vmatpush.msra.mxu0 0.0
  %3410 = vmatpush.msra.mxu0 0.0
  %3411 = vmatpush.msra.mxu0 0.0
  %3412 = vmatpush.msra.mxu0 0.0
  %3413 = vmatpush.msra.mxu0 %v3361
  %3414 = vmatpush.msra.mxu0 %v3328
  %3415 = vmatpush.msra.mxu0 %v3326
  %3416 = vmatpush.msra.mxu0 %v3324
  %3417 = vmatpush.msra.mxu0 %v3322
  %3418 = vmatpush.msra.mxu0 %v3320
  %3419 = vmatpush.msra.mxu0 %v3318
  %3420 = vmatmul.f32.gmra.mxu0 %v3333
  %v3421 = vpop.f32.mrf.mxu0
  %v3422 = vadd.f32 0.0, %v3421
  %3423 = vmatmul.f32.gmra.mxu0 %v3336
  %v3424 = vpop.f32.mrf.mxu0
  %v3425 = vadd.f32 0.0, %v3424
  %3426 = vmatmul.f32.gmra.mxu0 %v3339
  %v3427 = vpop.f32.mrf.mxu0
  %v3428 = vadd.f32 0.0, %v3427
  %3429 = vmatmul.f32.gmra.mxu0 %v3342
  %v3430 = vpop.f32.mrf.mxu0
  %v3431 = vadd.f32 0.0, %v3430
  %3432 = vmatmul.f32.gmra.mxu0 %v3345
  %v3433 = vpop.f32.mrf.mxu0
  %v3434 = vadd.f32 0.0, %v3433
  %3435 = vmatmul.f32.gmra.mxu0 %v3348
  %v3436 = vpop.f32.mrf.mxu0
  %v3437 = vadd.f32 0.0, %v3436
  %3438 = vmatmul.f32.gmra.mxu0 %v3351
  %v3439 = vpop.f32.mrf.mxu0
  %v3440 = vadd.f32 0.0, %v3439
  %3441 = vmatmul.f32.gmra.mxu0 %v3354
  %v3442 = vpop.f32.mrf.mxu0
  %v3443 = vadd.f32 0.0, %v3442
  %3444 = vdwg.mxu0
  %v3446 = vsel %vm3331, %v3205, 0
  %v3449 = vsel %vm3331, %v3208, 0
  %v3452 = vsel %vm3331, %v3211, 0
  %v3455 = vsel %vm3331, %v3214, 0
  %v3458 = vsel %vm3331, %v3217, 0
  %v3461 = vsel %vm3331, %v3220, 0
  %v3464 = vsel %vm3331, %v3223, 0
  %v3467 = vsel %vm3331, %v3226, 0
  %v3470 = vsel %vm3356, %v3240, 0
  %v3473 = vsel %vm3356, %v3241, 0
  %3475 = vmatpush.msra.mxu0 0.0
  %3476 = vmatpush.msra.mxu0 0.0
  %3477 = vmatpush.msra.mxu0 0.0
  %3478 = vmatpush.msra.mxu0 0.0
  %3479 = vmatpush.msra.mxu0 0.0
  %3480 = vmatpush.msra.mxu0 0.0
  %3481 = vmatpush.msra.mxu0 0.0
  %3482 = vmatpush.msra.mxu0 0.0
  %3483 = vmatpush.msra.mxu0 0.0
  %3484 = vmatpush.msra.mxu0 %v3470
  %3485 = vmatpush.msra.mxu0 %v3238
  %3486 = vmatpush.msra.mxu0 %v3236
  %3487 = vmatpush.msra.mxu0 %v3234
  %3488 = vmatpush.msra.mxu0 %v3232
  %3489 = vmatpush.msra.mxu0 %v3230
  %3490 = vmatpush.msra.mxu0 %v3228
  %3491 = vmatmul.f32.gmra.mxu0 %v3446
  %v3492 = vpop.f32.mrf.mxu0
  %v3493 = vadd.f32 %v3381, %v3492
  %3494 = vmatmul.f32.gmra.mxu0 %v3449
  %v3495 = vpop.f32.mrf.mxu0
  %v3496 = vadd.f32 %v3384, %v3495
  %3497 = vmatmul.f32.gmra.mxu0 %v3452
  %v3498 = vpop.f32.mrf.mxu0
  %v3499 = vadd.f32 %v3387, %v3498
  %3500 = vmatmul.f32.gmra.mxu0 %v3455
  %v3501 = vpop.f32.mrf.mxu0
  %v3502 = vadd.f32 %v3390, %v3501
  %3503 = vmatmul.f32.gmra.mxu0 %v3458
  %v3504 = vpop.f32.mrf.mxu0
  %v3505 = vadd.f32 %v3393, %v3504
  %3506 = vmatmul.f32.gmra.mxu0 %v3461
  %v3507 = vpop.f32.mrf.mxu0
  %v3508 = vadd.f32 %v3396, %v3507
  %3509 = vmatmul.f32.gmra.mxu0 %v3464
  %v3510 = vpop.f32.mrf.mxu0
  %v3511 = vadd.f32 %v3399, %v3510
  %3512 = vmatmul.f32.gmra.mxu0 %v3467
  %v3513 = vpop.f32.mrf.mxu0
  %v3514 = vadd.f32 %v3402, %v3513
  %3515 = vdwg.mxu0
  %3516 = vmatpush.msra.mxu0 0.0
  %3517 = vmatpush.msra.mxu0 0.0
  %3518 = vmatpush.msra.mxu0 0.0
  %3519 = vmatpush.msra.mxu0 0.0
  %3520 = vmatpush.msra.mxu0 0.0
  %3521 = vmatpush.msra.mxu0 0.0
  %3522 = vmatpush.msra.mxu0 0.0
  %3523 = vmatpush.msra.mxu0 0.0
  %3524 = vmatpush.msra.mxu0 0.0
  %3525 = vmatpush.msra.mxu0 %v3473
  %3526 = vmatpush.msra.mxu0 %v3239
  %3527 = vmatpush.msra.mxu0 %v3237
  %3528 = vmatpush.msra.mxu0 %v3235
  %3529 = vmatpush.msra.mxu0 %v3233
  %3530 = vmatpush.msra.mxu0 %v3231
  %3531 = vmatpush.msra.mxu0 %v3229
  %3532 = vmatmul.f32.gmra.mxu0 %v3446
  %v3533 = vpop.f32.mrf.mxu0
  %v3534 = vadd.f32 %v3422, %v3533
  %3535 = vmatmul.f32.gmra.mxu0 %v3449
  %v3536 = vpop.f32.mrf.mxu0
  %v3537 = vadd.f32 %v3425, %v3536
  %3538 = vmatmul.f32.gmra.mxu0 %v3452
  %v3539 = vpop.f32.mrf.mxu0
  %v3540 = vadd.f32 %v3428, %v3539
  %3541 = vmatmul.f32.gmra.mxu0 %v3455
  %v3542 = vpop.f32.mrf.mxu0
  %v3543 = vadd.f32 %v3431, %v3542
  %3544 = vmatmul.f32.gmra.mxu0 %v3458
  %v3545 = vpop.f32.mrf.mxu0
  %v3546 = vadd.f32 %v3434, %v3545
  %3547 = vmatmul.f32.gmra.mxu0 %v3461
  %v3548 = vpop.f32.mrf.mxu0
  %v3549 = vadd.f32 %v3437, %v3548
  %3550 = vmatmul.f32.gmra.mxu0 %v3464
  %v3551 = vpop.f32.mrf.mxu0
  %v3552 = vadd.f32 %v3440, %v3551
  %3553 = vmatmul.f32.gmra.mxu0 %v3467
  %v3554 = vpop.f32.mrf.mxu0
  %v3555 = vadd.f32 %v3443, %v3554
  %3556 = vdwg.mxu0
  %s3557 = scalar_lea.vmem %s6, 128
  %v3558 = vld [vmem:[%s3557] sm:$0xff]
  %v3559 = vld [vmem:[%s3557 + $0x8] sm:$0xff]
  %v3560 = vld [vmem:[%s3557 + $0x10] sm:$0xff]
  %v3561 = vld [vmem:[%s3557 + $0x18] sm:$0xff]
  %v3562 = vld [vmem:[%s3557 + $0x20] sm:$0xff]
  %v3563 = vld [vmem:[%s3557 + $0x28] sm:$0xff]
  %v3564 = vld [vmem:[%s3557 + $0x30] sm:$0xff]
  %v3565 = vld [vmem:[%s3557 + $0x38] sm:$0xff]
  %v3567 = vsel %vm1621, %v3558, 0
  %v3570 = vsel %vm1621, %v3559, 0
  %v3573 = vsel %vm1621, %v3560, 0
  %v3576 = vsel %vm1621, %v3561, 0
  %v3579 = vsel %vm1621, %v3562, 0
  %v3582 = vsel %vm1621, %v3563, 0
  %v3585 = vsel %vm1621, %v3564, 0
  %v3588 = vsel %vm1621, %v3565, 0
  %3590 = vmatpush.msra.mxu0 0.0
  %3591 = vmatpush.msra.mxu0 0.0
  %3592 = vmatpush.msra.mxu0 0.0
  %3593 = vmatpush.msra.mxu0 0.0
  %3594 = vmatpush.msra.mxu0 0.0
  %3595 = vmatpush.msra.mxu0 0.0
  %3596 = vmatpush.msra.mxu0 0.0
  %3597 = vmatpush.msra.mxu0 0.0
  %3598 = vmatpush.msra.mxu0 %v3154
  %3599 = vmatpush.msra.mxu0 %v3139
  %3600 = vmatpush.msra.mxu0 %v3124
  %3601 = vmatpush.msra.mxu0 %v3109
  %3602 = vmatpush.msra.mxu0 %v3094
  %3603 = vmatpush.msra.mxu0 %v3079
  %3604 = vmatpush.msra.mxu0 %v3064
  %3605 = vmatpush.msra.mxu0 %v3049
  %3606 = vmatmul.f32.gmra.mxu0 %v3567
  %v3607 = vpop.f32.mrf.mxu0
  %v3608 = vadd.f32 0.0, %v3607
  %3609 = vmatmul.f32.gmra.mxu0 %v3570
  %v3610 = vpop.f32.mrf.mxu0
  %v3611 = vadd.f32 0.0, %v3610
  %3612 = vmatmul.f32.gmra.mxu0 %v3573
  %v3613 = vpop.f32.mrf.mxu0
  %v3614 = vadd.f32 0.0, %v3613
  %3615 = vmatmul.f32.gmra.mxu0 %v3576
  %v3616 = vpop.f32.mrf.mxu0
  %v3617 = vadd.f32 0.0, %v3616
  %3618 = vmatmul.f32.gmra.mxu0 %v3579
  %v3619 = vpop.f32.mrf.mxu0
  %v3620 = vadd.f32 0.0, %v3619
  %3621 = vmatmul.f32.gmra.mxu0 %v3582
  %v3622 = vpop.f32.mrf.mxu0
  %v3623 = vadd.f32 0.0, %v3622
  %3624 = vmatmul.f32.gmra.mxu0 %v3585
  %v3625 = vpop.f32.mrf.mxu0
  %v3626 = vadd.f32 0.0, %v3625
  %3627 = vmatmul.f32.gmra.mxu0 %v3588
  %v3628 = vpop.f32.mrf.mxu0
  %v3629 = vadd.f32 0.0, %v3628
  %3630 = vdwg.mxu0
  %s3631 = scalar_lea.vmem %s3, 224
  %v3632 = vld [vmem:[%s3631] sm:$0xff]
  %v3633 = vld [vmem:[%s3631 + $0x8] sm:$0xff]
  %v3634 = vld [vmem:[%s3631 + $0x10] sm:$0xff]
  %v3635 = vld [vmem:[%s3631 + $0x18] sm:$0xff]
  %v3636 = vld [vmem:[%s3631 + $0x20] sm:$0xff]
  %v3637 = vld [vmem:[%s3631 + $0x28] sm:$0xff]
  %v3638 = vld [vmem:[%s3631 + $0x30] sm:$0xff]
  %v3639 = vld [vmem:[%s3631 + $0x38] sm:$0xff]
  %v3640 = vld [vmem:[%s3631 + $0x40] sm:$0xff]
  %v3641 = vld [vmem:[%s3631 + $0x48] sm:$0xff]
  %v3642 = vld [vmem:[%s3631 + $0x50] sm:$0xff]
  %v3643 = vld [vmem:[%s3631 + $0x58] sm:$0xff]
  %v3644 = vld [vmem:[%s3631 + $0x60] sm:$0x1]
  %v3645 = vld [vmem:[%s3631 + $0x68] sm:$0x1]
  %v3647 = vsel %vm3331, %v3608, 0
  %v3650 = vsel %vm3331, %v3611, 0
  %v3653 = vsel %vm3331, %v3614, 0
  %v3656 = vsel %vm3331, %v3617, 0
  %v3659 = vsel %vm3331, %v3620, 0
  %v3662 = vsel %vm3331, %v3623, 0
  %v3665 = vsel %vm3331, %v3626, 0
  %v3668 = vsel %vm3331, %v3629, 0
  %v3671 = vsel %vm3356, %v3644, 0
  %v3674 = vsel %vm3356, %v3645, 0
  %3676 = vmatpush.msra.mxu0 0.0
  %3677 = vmatpush.msra.mxu0 0.0
  %3678 = vmatpush.msra.mxu0 0.0
  %3679 = vmatpush.msra.mxu0 0.0
  %3680 = vmatpush.msra.mxu0 0.0
  %3681 = vmatpush.msra.mxu0 0.0
  %3682 = vmatpush.msra.mxu0 0.0
  %3683 = vmatpush.msra.mxu0 0.0
  %3684 = vmatpush.msra.mxu0 0.0
  %3685 = vmatpush.msra.mxu0 %v3671
  %3686 = vmatpush.msra.mxu0 %v3642
  %3687 = vmatpush.msra.mxu0 %v3640
  %3688 = vmatpush.msra.mxu0 %v3638
  %3689 = vmatpush.msra.mxu0 %v3636
  %3690 = vmatpush.msra.mxu0 %v3634
  %3691 = vmatpush.msra.mxu0 %v3632
  %3692 = vmatmul.f32.gmra.mxu0 %v3647
  %v3693 = vpop.f32.mrf.mxu0
  %v3694 = vadd.f32 0.0, %v3693
  %3695 = vmatmul.f32.gmra.mxu0 %v3650
  %v3696 = vpop.f32.mrf.mxu0
  %v3697 = vadd.f32 0.0, %v3696
  %3698 = vmatmul.f32.gmra.mxu0 %v3653
  %v3699 = vpop.f32.mrf.mxu0
  %v3700 = vadd.f32 0.0, %v3699
  %3701 = vmatmul.f32.gmra.mxu0 %v3656
  %v3702 = vpop.f32.mrf.mxu0
  %v3703 = vadd.f32 0.0, %v3702
  %3704 = vmatmul.f32.gmra.mxu0 %v3659
  %v3705 = vpop.f32.mrf.mxu0
  %v3706 = vadd.f32 0.0, %v3705
  %3707 = vmatmul.f32.gmra.mxu0 %v3662
  %v3708 = vpop.f32.mrf.mxu0
  %v3709 = vadd.f32 0.0, %v3708
  %3710 = vmatmul.f32.gmra.mxu0 %v3665
  %v3711 = vpop.f32.mrf.mxu0
  %v3712 = vadd.f32 0.0, %v3711
  %3713 = vmatmul.f32.gmra.mxu0 %v3668
  %v3714 = vpop.f32.mrf.mxu0
  %v3715 = vadd.f32 0.0, %v3714
  %3716 = vdwg.mxu0
  %3717 = vmatpush.msra.mxu0 0.0
  %3718 = vmatpush.msra.mxu0 0.0
  %3719 = vmatpush.msra.mxu0 0.0
  %3720 = vmatpush.msra.mxu0 0.0
  %3721 = vmatpush.msra.mxu0 0.0
  %3722 = vmatpush.msra.mxu0 0.0
  %3723 = vmatpush.msra.mxu0 0.0
  %3724 = vmatpush.msra.mxu0 0.0
  %3725 = vmatpush.msra.mxu0 0.0
  %3726 = vmatpush.msra.mxu0 %v3674
  %3727 = vmatpush.msra.mxu0 %v3643
  %3728 = vmatpush.msra.mxu0 %v3641
  %3729 = vmatpush.msra.mxu0 %v3639
  %3730 = vmatpush.msra.mxu0 %v3637
  %3731 = vmatpush.msra.mxu0 %v3635
  %3732 = vmatpush.msra.mxu0 %v3633
  %3733 = vmatmul.f32.gmra.mxu0 %v3647
  %v3734 = vpop.f32.mrf.mxu0
  %v3735 = vadd.f32 0.0, %v3734
  %3736 = vmatmul.f32.gmra.mxu0 %v3650
  %v3737 = vpop.f32.mrf.mxu0
  %v3738 = vadd.f32 0.0, %v3737
  %3739 = vmatmul.f32.gmra.mxu0 %v3653
  %v3740 = vpop.f32.mrf.mxu0
  %v3741 = vadd.f32 0.0, %v3740
  %3742 = vmatmul.f32.gmra.mxu0 %v3656
  %v3743 = vpop.f32.mrf.mxu0
  %v3744 = vadd.f32 0.0, %v3743
  %3745 = vmatmul.f32.gmra.mxu0 %v3659
  %v3746 = vpop.f32.mrf.mxu0
  %v3747 = vadd.f32 0.0, %v3746
  %3748 = vmatmul.f32.gmra.mxu0 %v3662
  %v3749 = vpop.f32.mrf.mxu0
  %v3750 = vadd.f32 0.0, %v3749
  %3751 = vmatmul.f32.gmra.mxu0 %v3665
  %v3752 = vpop.f32.mrf.mxu0
  %v3753 = vadd.f32 0.0, %v3752
  %3754 = vmatmul.f32.gmra.mxu0 %v3668
  %v3755 = vpop.f32.mrf.mxu0
  %v3756 = vadd.f32 0.0, %v3755
  %3757 = vdwg.mxu0
  %v3758 = vadd.f32 %v3493, %v3694
  %v3759 = vadd.f32 %v3534, %v3735
  %v3760 = vadd.f32 %v3496, %v3697
  %v3761 = vadd.f32 %v3537, %v3738
  %v3762 = vadd.f32 %v3499, %v3700
  %v3763 = vadd.f32 %v3540, %v3741
  %v3764 = vadd.f32 %v3502, %v3703
  %v3765 = vadd.f32 %v3543, %v3744
  %v3766 = vadd.f32 %v3505, %v3706
  %v3767 = vadd.f32 %v3546, %v3747
  %v3768 = vadd.f32 %v3508, %v3709
  %v3769 = vadd.f32 %v3549, %v3750
  %v3770 = vadd.f32 %v3511, %v3712
  %v3771 = vadd.f32 %v3552, %v3753
  %v3772 = vadd.f32 %v3514, %v3715
  %v3773 = vadd.f32 %v3555, %v3756
  %s3774 = scalar_lea.vmem %s6, 192
  %v3775 = vld [vmem:[%s3774] sm:$0xff]
  %v3776 = vld [vmem:[%s3774 + $0x8] sm:$0xff]
  %v3777 = vld [vmem:[%s3774 + $0x10] sm:$0xff]
  %v3778 = vld [vmem:[%s3774 + $0x18] sm:$0xff]
  %v3779 = vld [vmem:[%s3774 + $0x20] sm:$0xff]
  %v3780 = vld [vmem:[%s3774 + $0x28] sm:$0xff]
  %v3781 = vld [vmem:[%s3774 + $0x30] sm:$0xff]
  %v3782 = vld [vmem:[%s3774 + $0x38] sm:$0xff]
  %v3784 = vsel %vm1621, %v3775, 0
  %v3787 = vsel %vm1621, %v3776, 0
  %v3790 = vsel %vm1621, %v3777, 0
  %v3793 = vsel %vm1621, %v3778, 0
  %v3796 = vsel %vm1621, %v3779, 0
  %v3799 = vsel %vm1621, %v3780, 0
  %v3802 = vsel %vm1621, %v3781, 0
  %v3805 = vsel %vm1621, %v3782, 0
  %3807 = vmatpush.msra.mxu0 0.0
  %3808 = vmatpush.msra.mxu0 0.0
  %3809 = vmatpush.msra.mxu0 0.0
  %3810 = vmatpush.msra.mxu0 0.0
  %3811 = vmatpush.msra.mxu0 0.0
  %3812 = vmatpush.msra.mxu0 0.0
  %3813 = vmatpush.msra.mxu0 0.0
  %3814 = vmatpush.msra.mxu0 0.0
  %3815 = vmatpush.msra.mxu0 %v3154
  %3816 = vmatpush.msra.mxu0 %v3139
  %3817 = vmatpush.msra.mxu0 %v3124
  %3818 = vmatpush.msra.mxu0 %v3109
  %3819 = vmatpush.msra.mxu0 %v3094
  %3820 = vmatpush.msra.mxu0 %v3079
  %3821 = vmatpush.msra.mxu0 %v3064
  %3822 = vmatpush.msra.mxu0 %v3049
  %3823 = vmatmul.f32.gmra.mxu0 %v3784
  %v3824 = vpop.f32.mrf.mxu0
  %v3825 = vadd.f32 0.0, %v3824
  %3826 = vmatmul.f32.gmra.mxu0 %v3787
  %v3827 = vpop.f32.mrf.mxu0
  %v3828 = vadd.f32 0.0, %v3827
  %3829 = vmatmul.f32.gmra.mxu0 %v3790
  %v3830 = vpop.f32.mrf.mxu0
  %v3831 = vadd.f32 0.0, %v3830
  %3832 = vmatmul.f32.gmra.mxu0 %v3793
  %v3833 = vpop.f32.mrf.mxu0
  %v3834 = vadd.f32 0.0, %v3833
  %3835 = vmatmul.f32.gmra.mxu0 %v3796
  %v3836 = vpop.f32.mrf.mxu0
  %v3837 = vadd.f32 0.0, %v3836
  %3838 = vmatmul.f32.gmra.mxu0 %v3799
  %v3839 = vpop.f32.mrf.mxu0
  %v3840 = vadd.f32 0.0, %v3839
  %3841 = vmatmul.f32.gmra.mxu0 %v3802
  %v3842 = vpop.f32.mrf.mxu0
  %v3843 = vadd.f32 0.0, %v3842
  %3844 = vmatmul.f32.gmra.mxu0 %v3805
  %v3845 = vpop.f32.mrf.mxu0
  %v3846 = vadd.f32 0.0, %v3845
  %3847 = vdwg.mxu0
  %s3848 = scalar_lea.vmem %s3, 336
  %v3849 = vld [vmem:[%s3848] sm:$0xff]
  %v3850 = vld [vmem:[%s3848 + $0x8] sm:$0xff]
  %v3851 = vld [vmem:[%s3848 + $0x10] sm:$0xff]
  %v3852 = vld [vmem:[%s3848 + $0x18] sm:$0xff]
  %v3853 = vld [vmem:[%s3848 + $0x20] sm:$0xff]
  %v3854 = vld [vmem:[%s3848 + $0x28] sm:$0xff]
  %v3855 = vld [vmem:[%s3848 + $0x30] sm:$0xff]
  %v3856 = vld [vmem:[%s3848 + $0x38] sm:$0xff]
  %v3857 = vld [vmem:[%s3848 + $0x40] sm:$0xff]
  %v3858 = vld [vmem:[%s3848 + $0x48] sm:$0xff]
  %v3859 = vld [vmem:[%s3848 + $0x50] sm:$0xff]
  %v3860 = vld [vmem:[%s3848 + $0x58] sm:$0xff]
  %v3861 = vld [vmem:[%s3848 + $0x60] sm:$0x1]
  %v3862 = vld [vmem:[%s3848 + $0x68] sm:$0x1]
  %v3864 = vsel %vm3331, %v3825, 0
  %v3867 = vsel %vm3331, %v3828, 0
  %v3870 = vsel %vm3331, %v3831, 0
  %v3873 = vsel %vm3331, %v3834, 0
  %v3876 = vsel %vm3331, %v3837, 0
  %v3879 = vsel %vm3331, %v3840, 0
  %v3882 = vsel %vm3331, %v3843, 0
  %v3885 = vsel %vm3331, %v3846, 0
  %v3888 = vsel %vm3356, %v3861, 0
  %v3891 = vsel %vm3356, %v3862, 0
  %3893 = vmatpush.msra.mxu0 0.0
  %3894 = vmatpush.msra.mxu0 0.0
  %3895 = vmatpush.msra.mxu0 0.0
  %3896 = vmatpush.msra.mxu0 0.0
  %3897 = vmatpush.msra.mxu0 0.0
  %3898 = vmatpush.msra.mxu0 0.0
  %3899 = vmatpush.msra.mxu0 0.0
  %3900 = vmatpush.msra.mxu0 0.0
  %3901 = vmatpush.msra.mxu0 0.0
  %3902 = vmatpush.msra.mxu0 %v3888
  %3903 = vmatpush.msra.mxu0 %v3859
  %3904 = vmatpush.msra.mxu0 %v3857
  %3905 = vmatpush.msra.mxu0 %v3855
  %3906 = vmatpush.msra.mxu0 %v3853
  %3907 = vmatpush.msra.mxu0 %v3851
  %3908 = vmatpush.msra.mxu0 %v3849
  %3909 = vmatmul.f32.gmra.mxu0 %v3864
  %v3910 = vpop.f32.mrf.mxu0
  %v3911 = vadd.f32 0.0, %v3910
  %3912 = vmatmul.f32.gmra.mxu0 %v3867
  %v3913 = vpop.f32.mrf.mxu0
  %v3914 = vadd.f32 0.0, %v3913
  %3915 = vmatmul.f32.gmra.mxu0 %v3870
  %v3916 = vpop.f32.mrf.mxu0
  %v3917 = vadd.f32 0.0, %v3916
  %3918 = vmatmul.f32.gmra.mxu0 %v3873
  %v3919 = vpop.f32.mrf.mxu0
  %v3920 = vadd.f32 0.0, %v3919
  %3921 = vmatmul.f32.gmra.mxu0 %v3876
  %v3922 = vpop.f32.mrf.mxu0
  %v3923 = vadd.f32 0.0, %v3922
  %3924 = vmatmul.f32.gmra.mxu0 %v3879
  %v3925 = vpop.f32.mrf.mxu0
  %v3926 = vadd.f32 0.0, %v3925
  %3927 = vmatmul.f32.gmra.mxu0 %v3882
  %v3928 = vpop.f32.mrf.mxu0
  %v3929 = vadd.f32 0.0, %v3928
  %3930 = vmatmul.f32.gmra.mxu0 %v3885
  %v3931 = vpop.f32.mrf.mxu0
  %v3932 = vadd.f32 0.0, %v3931
  %3933 = vdwg.mxu0
  %3934 = vmatpush.msra.mxu0 0.0
  %3935 = vmatpush.msra.mxu0 0.0
  %3936 = vmatpush.msra.mxu0 0.0
  %3937 = vmatpush.msra.mxu0 0.0
  %3938 = vmatpush.msra.mxu0 0.0
  %3939 = vmatpush.msra.mxu0 0.0
  %3940 = vmatpush.msra.mxu0 0.0
  %3941 = vmatpush.msra.mxu0 0.0
  %3942 = vmatpush.msra.mxu0 0.0
  %3943 = vmatpush.msra.mxu0 %v3891
  %3944 = vmatpush.msra.mxu0 %v3860
  %3945 = vmatpush.msra.mxu0 %v3858
  %3946 = vmatpush.msra.mxu0 %v3856
  %3947 = vmatpush.msra.mxu0 %v3854
  %3948 = vmatpush.msra.mxu0 %v3852
  %3949 = vmatpush.msra.mxu0 %v3850
  %3950 = vmatmul.f32.gmra.mxu0 %v3864
  %v3951 = vpop.f32.mrf.mxu0
  %v3952 = vadd.f32 0.0, %v3951
  %3953 = vmatmul.f32.gmra.mxu0 %v3867
  %v3954 = vpop.f32.mrf.mxu0
  %v3955 = vadd.f32 0.0, %v3954
  %3956 = vmatmul.f32.gmra.mxu0 %v3870
  %v3957 = vpop.f32.mrf.mxu0
  %v3958 = vadd.f32 0.0, %v3957
  %3959 = vmatmul.f32.gmra.mxu0 %v3873
  %v3960 = vpop.f32.mrf.mxu0
  %v3961 = vadd.f32 0.0, %v3960
  %3962 = vmatmul.f32.gmra.mxu0 %v3876
  %v3963 = vpop.f32.mrf.mxu0
  %v3964 = vadd.f32 0.0, %v3963
  %3965 = vmatmul.f32.gmra.mxu0 %v3879
  %v3966 = vpop.f32.mrf.mxu0
  %v3967 = vadd.f32 0.0, %v3966
  %3968 = vmatmul.f32.gmra.mxu0 %v3882
  %v3969 = vpop.f32.mrf.mxu0
  %v3970 = vadd.f32 0.0, %v3969
  %3971 = vmatmul.f32.gmra.mxu0 %v3885
  %v3972 = vpop.f32.mrf.mxu0
  %v3973 = vadd.f32 0.0, %v3972
  %3974 = vdwg.mxu0
  %v3975 = vadd.f32 %v3758, %v3911
  %v3976 = vadd.f32 %v3759, %v3952
  %v3977 = vadd.f32 %v3760, %v3914
  %v3978 = vadd.f32 %v3761, %v3955
  %v3979 = vadd.f32 %v3762, %v3917
  %v3980 = vadd.f32 %v3763, %v3958
  %v3981 = vadd.f32 %v3764, %v3920
  %v3982 = vadd.f32 %v3765, %v3961
  %v3983 = vadd.f32 %v3766, %v3923
  %v3984 = vadd.f32 %v3767, %v3964
  %v3985 = vadd.f32 %v3768, %v3926
  %v3986 = vadd.f32 %v3769, %v3967
  %v3987 = vadd.f32 %v3770, %v3929
  %v3988 = vadd.f32 %v3771, %v3970
  %v3989 = vadd.f32 %v3772, %v3932
  %v3990 = vadd.f32 %v3773, %v3973
  %s3991 = scalar_lea.vmem %s6, 256
  %v3992 = vld [vmem:[%s3991] sm:$0xff]
  %v3993 = vld [vmem:[%s3991 + $0x8] sm:$0xff]
  %v3994 = vld [vmem:[%s3991 + $0x10] sm:$0xff]
  %v3995 = vld [vmem:[%s3991 + $0x18] sm:$0xff]
  %v3996 = vld [vmem:[%s3991 + $0x20] sm:$0xff]
  %v3997 = vld [vmem:[%s3991 + $0x28] sm:$0xff]
  %v3998 = vld [vmem:[%s3991 + $0x30] sm:$0xff]
  %v3999 = vld [vmem:[%s3991 + $0x38] sm:$0xff]
  %v4001 = vsel %vm1621, %v3992, 0
  %v4004 = vsel %vm1621, %v3993, 0
  %v4007 = vsel %vm1621, %v3994, 0
  %v4010 = vsel %vm1621, %v3995, 0
  %v4013 = vsel %vm1621, %v3996, 0
  %v4016 = vsel %vm1621, %v3997, 0
  %v4019 = vsel %vm1621, %v3998, 0
  %v4022 = vsel %vm1621, %v3999, 0
  %4024 = vmatpush.msra.mxu0 0.0
  %4025 = vmatpush.msra.mxu0 0.0
  %4026 = vmatpush.msra.mxu0 0.0
  %4027 = vmatpush.msra.mxu0 0.0
  %4028 = vmatpush.msra.mxu0 0.0
  %4029 = vmatpush.msra.mxu0 0.0
  %4030 = vmatpush.msra.mxu0 0.0
  %4031 = vmatpush.msra.mxu0 0.0
  %4032 = vmatpush.msra.mxu0 %v3154
  %4033 = vmatpush.msra.mxu0 %v3139
  %4034 = vmatpush.msra.mxu0 %v3124
  %4035 = vmatpush.msra.mxu0 %v3109
  %4036 = vmatpush.msra.mxu0 %v3094
  %4037 = vmatpush.msra.mxu0 %v3079
  %4038 = vmatpush.msra.mxu0 %v3064
  %4039 = vmatpush.msra.mxu0 %v3049
  %4040 = vmatmul.f32.gmra.mxu0 %v4001
  %v4041 = vpop.f32.mrf.mxu0
  %v4042 = vadd.f32 0.0, %v4041
  %4043 = vmatmul.f32.gmra.mxu0 %v4004
  %v4044 = vpop.f32.mrf.mxu0
  %v4045 = vadd.f32 0.0, %v4044
  %4046 = vmatmul.f32.gmra.mxu0 %v4007
  %v4047 = vpop.f32.mrf.mxu0
  %v4048 = vadd.f32 0.0, %v4047
  %4049 = vmatmul.f32.gmra.mxu0 %v4010
  %v4050 = vpop.f32.mrf.mxu0
  %v4051 = vadd.f32 0.0, %v4050
  %4052 = vmatmul.f32.gmra.mxu0 %v4013
  %v4053 = vpop.f32.mrf.mxu0
  %v4054 = vadd.f32 0.0, %v4053
  %4055 = vmatmul.f32.gmra.mxu0 %v4016
  %v4056 = vpop.f32.mrf.mxu0
  %v4057 = vadd.f32 0.0, %v4056
  %4058 = vmatmul.f32.gmra.mxu0 %v4019
  %v4059 = vpop.f32.mrf.mxu0
  %v4060 = vadd.f32 0.0, %v4059
  %4061 = vmatmul.f32.gmra.mxu0 %v4022
  %v4062 = vpop.f32.mrf.mxu0
  %v4063 = vadd.f32 0.0, %v4062
  %4064 = vdwg.mxu0
  %s4065 = scalar_lea.vmem %s3, 448
  %v4066 = vld [vmem:[%s4065] sm:$0xff]
  %v4067 = vld [vmem:[%s4065 + $0x8] sm:$0xff]
  %v4068 = vld [vmem:[%s4065 + $0x10] sm:$0xff]
  %v4069 = vld [vmem:[%s4065 + $0x18] sm:$0xff]
  %v4070 = vld [vmem:[%s4065 + $0x20] sm:$0xff]
  %v4071 = vld [vmem:[%s4065 + $0x28] sm:$0xff]
  %v4072 = vld [vmem:[%s4065 + $0x30] sm:$0xff]
  %v4073 = vld [vmem:[%s4065 + $0x38] sm:$0xff]
  %v4074 = vld [vmem:[%s4065 + $0x40] sm:$0xff]
  %v4075 = vld [vmem:[%s4065 + $0x48] sm:$0xff]
  %v4076 = vld [vmem:[%s4065 + $0x50] sm:$0xff]
  %v4077 = vld [vmem:[%s4065 + $0x58] sm:$0xff]
  %v4078 = vld [vmem:[%s4065 + $0x60] sm:$0x1]
  %v4079 = vld [vmem:[%s4065 + $0x68] sm:$0x1]
  %v4081 = vsel %vm3331, %v4042, 0
  %v4084 = vsel %vm3331, %v4045, 0
  %v4087 = vsel %vm3331, %v4048, 0
  %v4090 = vsel %vm3331, %v4051, 0
  %v4093 = vsel %vm3331, %v4054, 0
  %v4096 = vsel %vm3331, %v4057, 0
  %v4099 = vsel %vm3331, %v4060, 0
  %v4102 = vsel %vm3331, %v4063, 0
  %v4105 = vsel %vm3356, %v4078, 0
  %v4108 = vsel %vm3356, %v4079, 0
  %4110 = vmatpush.msra.mxu0 0.0
  %4111 = vmatpush.msra.mxu0 0.0
  %4112 = vmatpush.msra.mxu0 0.0
  %4113 = vmatpush.msra.mxu0 0.0
  %4114 = vmatpush.msra.mxu0 0.0
  %4115 = vmatpush.msra.mxu0 0.0
  %4116 = vmatpush.msra.mxu0 0.0
  %4117 = vmatpush.msra.mxu0 0.0
  %4118 = vmatpush.msra.mxu0 0.0
  %4119 = vmatpush.msra.mxu0 %v4105
  %4120 = vmatpush.msra.mxu0 %v4076
  %4121 = vmatpush.msra.mxu0 %v4074
  %4122 = vmatpush.msra.mxu0 %v4072
  %4123 = vmatpush.msra.mxu0 %v4070
  %4124 = vmatpush.msra.mxu0 %v4068
  %4125 = vmatpush.msra.mxu0 %v4066
  %4126 = vmatmul.f32.gmra.mxu0 %v4081
  %v4127 = vpop.f32.mrf.mxu0
  %v4128 = vadd.f32 0.0, %v4127
  %4129 = vmatmul.f32.gmra.mxu0 %v4084
  %v4130 = vpop.f32.mrf.mxu0
  %v4131 = vadd.f32 0.0, %v4130
  %4132 = vmatmul.f32.gmra.mxu0 %v4087
  %v4133 = vpop.f32.mrf.mxu0
  %v4134 = vadd.f32 0.0, %v4133
  %4135 = vmatmul.f32.gmra.mxu0 %v4090
  %v4136 = vpop.f32.mrf.mxu0
  %v4137 = vadd.f32 0.0, %v4136
  %4138 = vmatmul.f32.gmra.mxu0 %v4093
  %v4139 = vpop.f32.mrf.mxu0
  %v4140 = vadd.f32 0.0, %v4139
  %4141 = vmatmul.f32.gmra.mxu0 %v4096
  %v4142 = vpop.f32.mrf.mxu0
  %v4143 = vadd.f32 0.0, %v4142
  %4144 = vmatmul.f32.gmra.mxu0 %v4099
  %v4145 = vpop.f32.mrf.mxu0
  %v4146 = vadd.f32 0.0, %v4145
  %4147 = vmatmul.f32.gmra.mxu0 %v4102
  %v4148 = vpop.f32.mrf.mxu0
  %v4149 = vadd.f32 0.0, %v4148
  %4150 = vdwg.mxu0
  %4151 = vmatpush.msra.mxu0 0.0
  %4152 = vmatpush.msra.mxu0 0.0
  %4153 = vmatpush.msra.mxu0 0.0
  %4154 = vmatpush.msra.mxu0 0.0
  %4155 = vmatpush.msra.mxu0 0.0
  %4156 = vmatpush.msra.mxu0 0.0
  %4157 = vmatpush.msra.mxu0 0.0
  %4158 = vmatpush.msra.mxu0 0.0
  %4159 = vmatpush.msra.mxu0 0.0
  %4160 = vmatpush.msra.mxu0 %v4108
  %4161 = vmatpush.msra.mxu0 %v4077
  %4162 = vmatpush.msra.mxu0 %v4075
  %4163 = vmatpush.msra.mxu0 %v4073
  %4164 = vmatpush.msra.mxu0 %v4071
  %4165 = vmatpush.msra.mxu0 %v4069
  %4166 = vmatpush.msra.mxu0 %v4067
  %4167 = vmatmul.f32.gmra.mxu0 %v4081
  %v4168 = vpop.f32.mrf.mxu0
  %v4169 = vadd.f32 0.0, %v4168
  %4170 = vmatmul.f32.gmra.mxu0 %v4084
  %v4171 = vpop.f32.mrf.mxu0
  %v4172 = vadd.f32 0.0, %v4171
  %4173 = vmatmul.f32.gmra.mxu0 %v4087
  %v4174 = vpop.f32.mrf.mxu0
  %v4175 = vadd.f32 0.0, %v4174
  %4176 = vmatmul.f32.gmra.mxu0 %v4090
  %v4177 = vpop.f32.mrf.mxu0
  %v4178 = vadd.f32 0.0, %v4177
  %4179 = vmatmul.f32.gmra.mxu0 %v4093
  %v4180 = vpop.f32.mrf.mxu0
  %v4181 = vadd.f32 0.0, %v4180
  %4182 = vmatmul.f32.gmra.mxu0 %v4096
  %v4183 = vpop.f32.mrf.mxu0
  %v4184 = vadd.f32 0.0, %v4183
  %4185 = vmatmul.f32.gmra.mxu0 %v4099
  %v4186 = vpop.f32.mrf.mxu0
  %v4187 = vadd.f32 0.0, %v4186
  %4188 = vmatmul.f32.gmra.mxu0 %v4102
  %v4189 = vpop.f32.mrf.mxu0
  %v4190 = vadd.f32 0.0, %v4189
  %4191 = vdwg.mxu0
  %v4192 = vadd.f32 %v3975, %v4128
  %v4193 = vadd.f32 %v3976, %v4169
  %v4194 = vadd.f32 %v3977, %v4131
  %v4195 = vadd.f32 %v3978, %v4172
  %v4196 = vadd.f32 %v3979, %v4134
  %v4197 = vadd.f32 %v3980, %v4175
  %v4198 = vadd.f32 %v3981, %v4137
  %v4199 = vadd.f32 %v3982, %v4178
  %v4200 = vadd.f32 %v3983, %v4140
  %v4201 = vadd.f32 %v3984, %v4181
  %v4202 = vadd.f32 %v3985, %v4143
  %v4203 = vadd.f32 %v3986, %v4184
  %v4204 = vadd.f32 %v3987, %v4146
  %v4205 = vadd.f32 %v3988, %v4187
  %v4206 = vadd.f32 %v3989, %v4149
  %v4207 = vadd.f32 %v3990, %v4190
  %s4208 = scalar_lea.vmem %s6, 320
  %v4209 = vld [vmem:[%s4208] sm:$0xff]
  %v4210 = vld [vmem:[%s4208 + $0x8] sm:$0xff]
  %v4211 = vld [vmem:[%s4208 + $0x10] sm:$0xff]
  %v4212 = vld [vmem:[%s4208 + $0x18] sm:$0xff]
  %v4213 = vld [vmem:[%s4208 + $0x20] sm:$0xff]
  %v4214 = vld [vmem:[%s4208 + $0x28] sm:$0xff]
  %v4215 = vld [vmem:[%s4208 + $0x30] sm:$0xff]
  %v4216 = vld [vmem:[%s4208 + $0x38] sm:$0xff]
  %v4218 = vsel %vm1621, %v4209, 0
  %v4221 = vsel %vm1621, %v4210, 0
  %v4224 = vsel %vm1621, %v4211, 0
  %v4227 = vsel %vm1621, %v4212, 0
  %v4230 = vsel %vm1621, %v4213, 0
  %v4233 = vsel %vm1621, %v4214, 0
  %v4236 = vsel %vm1621, %v4215, 0
  %v4239 = vsel %vm1621, %v4216, 0
  %4241 = vmatpush.msra.mxu0 0.0
  %4242 = vmatpush.msra.mxu0 0.0
  %4243 = vmatpush.msra.mxu0 0.0
  %4244 = vmatpush.msra.mxu0 0.0
  %4245 = vmatpush.msra.mxu0 0.0
  %4246 = vmatpush.msra.mxu0 0.0
  %4247 = vmatpush.msra.mxu0 0.0
  %4248 = vmatpush.msra.mxu0 0.0
  %4249 = vmatpush.msra.mxu0 %v3154
  %4250 = vmatpush.msra.mxu0 %v3139
  %4251 = vmatpush.msra.mxu0 %v3124
  %4252 = vmatpush.msra.mxu0 %v3109
  %4253 = vmatpush.msra.mxu0 %v3094
  %4254 = vmatpush.msra.mxu0 %v3079
  %4255 = vmatpush.msra.mxu0 %v3064
  %4256 = vmatpush.msra.mxu0 %v3049
  %4257 = vmatmul.f32.gmra.mxu0 %v4218
  %v4258 = vpop.f32.mrf.mxu0
  %v4259 = vadd.f32 0.0, %v4258
  %4260 = vmatmul.f32.gmra.mxu0 %v4221
  %v4261 = vpop.f32.mrf.mxu0
  %v4262 = vadd.f32 0.0, %v4261
  %4263 = vmatmul.f32.gmra.mxu0 %v4224
  %v4264 = vpop.f32.mrf.mxu0
  %v4265 = vadd.f32 0.0, %v4264
  %4266 = vmatmul.f32.gmra.mxu0 %v4227
  %v4267 = vpop.f32.mrf.mxu0
  %v4268 = vadd.f32 0.0, %v4267
  %4269 = vmatmul.f32.gmra.mxu0 %v4230
  %v4270 = vpop.f32.mrf.mxu0
  %v4271 = vadd.f32 0.0, %v4270
  %4272 = vmatmul.f32.gmra.mxu0 %v4233
  %v4273 = vpop.f32.mrf.mxu0
  %v4274 = vadd.f32 0.0, %v4273
  %4275 = vmatmul.f32.gmra.mxu0 %v4236
  %v4276 = vpop.f32.mrf.mxu0
  %v4277 = vadd.f32 0.0, %v4276
  %4278 = vmatmul.f32.gmra.mxu0 %v4239
  %v4279 = vpop.f32.mrf.mxu0
  %v4280 = vadd.f32 0.0, %v4279
  %4281 = vdwg.mxu0
  %s4282 = scalar_lea.vmem %s3, 560
  %v4283 = vld [vmem:[%s4282] sm:$0xff]
  %v4284 = vld [vmem:[%s4282 + $0x8] sm:$0xff]
  %v4285 = vld [vmem:[%s4282 + $0x10] sm:$0xff]
  %v4286 = vld [vmem:[%s4282 + $0x18] sm:$0xff]
  %v4287 = vld [vmem:[%s4282 + $0x20] sm:$0xff]
  %v4288 = vld [vmem:[%s4282 + $0x28] sm:$0xff]
  %v4289 = vld [vmem:[%s4282 + $0x30] sm:$0xff]
  %v4290 = vld [vmem:[%s4282 + $0x38] sm:$0xff]
  %v4291 = vld [vmem:[%s4282 + $0x40] sm:$0xff]
  %v4292 = vld [vmem:[%s4282 + $0x48] sm:$0xff]
  %v4293 = vld [vmem:[%s4282 + $0x50] sm:$0xff]
  %v4294 = vld [vmem:[%s4282 + $0x58] sm:$0xff]
  %v4295 = vld [vmem:[%s4282 + $0x60] sm:$0x1]
  %v4296 = vld [vmem:[%s4282 + $0x68] sm:$0x1]
  %v4298 = vsel %vm3331, %v4259, 0
  %v4301 = vsel %vm3331, %v4262, 0
  %v4304 = vsel %vm3331, %v4265, 0
  %v4307 = vsel %vm3331, %v4268, 0
  %v4310 = vsel %vm3331, %v4271, 0
  %v4313 = vsel %vm3331, %v4274, 0
  %v4316 = vsel %vm3331, %v4277, 0
  %v4319 = vsel %vm3331, %v4280, 0
  %v4322 = vsel %vm3356, %v4295, 0
  %v4325 = vsel %vm3356, %v4296, 0
  %4327 = vmatpush.msra.mxu0 0.0
  %4328 = vmatpush.msra.mxu0 0.0
  %4329 = vmatpush.msra.mxu0 0.0
  %4330 = vmatpush.msra.mxu0 0.0
  %4331 = vmatpush.msra.mxu0 0.0
  %4332 = vmatpush.msra.mxu0 0.0
  %4333 = vmatpush.msra.mxu0 0.0
  %4334 = vmatpush.msra.mxu0 0.0
  %4335 = vmatpush.msra.mxu0 0.0
  %4336 = vmatpush.msra.mxu0 %v4322
  %4337 = vmatpush.msra.mxu0 %v4293
  %4338 = vmatpush.msra.mxu0 %v4291
  %4339 = vmatpush.msra.mxu0 %v4289
  %4340 = vmatpush.msra.mxu0 %v4287
  %4341 = vmatpush.msra.mxu0 %v4285
  %4342 = vmatpush.msra.mxu0 %v4283
  %4343 = vmatmul.f32.gmra.mxu0 %v4298
  %v4344 = vpop.f32.mrf.mxu0
  %v4345 = vadd.f32 0.0, %v4344
  %4346 = vmatmul.f32.gmra.mxu0 %v4301
  %v4347 = vpop.f32.mrf.mxu0
  %v4348 = vadd.f32 0.0, %v4347
  %4349 = vmatmul.f32.gmra.mxu0 %v4304
  %v4350 = vpop.f32.mrf.mxu0
  %v4351 = vadd.f32 0.0, %v4350
  %4352 = vmatmul.f32.gmra.mxu0 %v4307
  %v4353 = vpop.f32.mrf.mxu0
  %v4354 = vadd.f32 0.0, %v4353
  %4355 = vmatmul.f32.gmra.mxu0 %v4310
  %v4356 = vpop.f32.mrf.mxu0
  %v4357 = vadd.f32 0.0, %v4356
  %4358 = vmatmul.f32.gmra.mxu0 %v4313
  %v4359 = vpop.f32.mrf.mxu0
  %v4360 = vadd.f32 0.0, %v4359
  %4361 = vmatmul.f32.gmra.mxu0 %v4316
  %v4362 = vpop.f32.mrf.mxu0
  %v4363 = vadd.f32 0.0, %v4362
  %4364 = vmatmul.f32.gmra.mxu0 %v4319
  %v4365 = vpop.f32.mrf.mxu0
  %v4366 = vadd.f32 0.0, %v4365
  %4367 = vdwg.mxu0
  %4368 = vmatpush.msra.mxu0 0.0
  %4369 = vmatpush.msra.mxu0 0.0
  %4370 = vmatpush.msra.mxu0 0.0
  %4371 = vmatpush.msra.mxu0 0.0
  %4372 = vmatpush.msra.mxu0 0.0
  %4373 = vmatpush.msra.mxu0 0.0
  %4374 = vmatpush.msra.mxu0 0.0
  %4375 = vmatpush.msra.mxu0 0.0
  %4376 = vmatpush.msra.mxu0 0.0
  %4377 = vmatpush.msra.mxu0 %v4325
  %4378 = vmatpush.msra.mxu0 %v4294
  %4379 = vmatpush.msra.mxu0 %v4292
  %4380 = vmatpush.msra.mxu0 %v4290
  %4381 = vmatpush.msra.mxu0 %v4288
  %4382 = vmatpush.msra.mxu0 %v4286
  %4383 = vmatpush.msra.mxu0 %v4284
  %4384 = vmatmul.f32.gmra.mxu0 %v4298
  %v4385 = vpop.f32.mrf.mxu0
  %v4386 = vadd.f32 0.0, %v4385
  %4387 = vmatmul.f32.gmra.mxu0 %v4301
  %v4388 = vpop.f32.mrf.mxu0
  %v4389 = vadd.f32 0.0, %v4388
  %4390 = vmatmul.f32.gmra.mxu0 %v4304
  %v4391 = vpop.f32.mrf.mxu0
  %v4392 = vadd.f32 0.0, %v4391
  %4393 = vmatmul.f32.gmra.mxu0 %v4307
  %v4394 = vpop.f32.mrf.mxu0
  %v4395 = vadd.f32 0.0, %v4394
  %4396 = vmatmul.f32.gmra.mxu0 %v4310
  %v4397 = vpop.f32.mrf.mxu0
  %v4398 = vadd.f32 0.0, %v4397
  %4399 = vmatmul.f32.gmra.mxu0 %v4313
  %v4400 = vpop.f32.mrf.mxu0
  %v4401 = vadd.f32 0.0, %v4400
  %4402 = vmatmul.f32.gmra.mxu0 %v4316
  %v4403 = vpop.f32.mrf.mxu0
  %v4404 = vadd.f32 0.0, %v4403
  %4405 = vmatmul.f32.gmra.mxu0 %v4319
  %v4406 = vpop.f32.mrf.mxu0
  %v4407 = vadd.f32 0.0, %v4406
  %4408 = vdwg.mxu0
  %v4409 = vadd.f32 %v4192, %v4345
  %v4410 = vadd.f32 %v4193, %v4386
  %v4411 = vadd.f32 %v4194, %v4348
  %v4412 = vadd.f32 %v4195, %v4389
  %v4413 = vadd.f32 %v4196, %v4351
  %v4414 = vadd.f32 %v4197, %v4392
  %v4415 = vadd.f32 %v4198, %v4354
  %v4416 = vadd.f32 %v4199, %v4395
  %v4417 = vadd.f32 %v4200, %v4357
  %v4418 = vadd.f32 %v4201, %v4398
  %v4419 = vadd.f32 %v4202, %v4360
  %v4420 = vadd.f32 %v4203, %v4401
  %v4421 = vadd.f32 %v4204, %v4363
  %v4422 = vadd.f32 %v4205, %v4404
  %v4423 = vadd.f32 %v4206, %v4366
  %v4424 = vadd.f32 %v4207, %v4407
  %s4425 = scalar_lea.vmem %s6, 384
  %v4426 = vld [vmem:[%s4425] sm:$0xff]
  %v4427 = vld [vmem:[%s4425 + $0x8] sm:$0xff]
  %v4428 = vld [vmem:[%s4425 + $0x10] sm:$0xff]
  %v4429 = vld [vmem:[%s4425 + $0x18] sm:$0xff]
  %v4430 = vld [vmem:[%s4425 + $0x20] sm:$0xff]
  %v4431 = vld [vmem:[%s4425 + $0x28] sm:$0xff]
  %v4432 = vld [vmem:[%s4425 + $0x30] sm:$0xff]
  %v4433 = vld [vmem:[%s4425 + $0x38] sm:$0xff]
  %v4435 = vsel %vm1621, %v4426, 0
  %v4438 = vsel %vm1621, %v4427, 0
  %v4441 = vsel %vm1621, %v4428, 0
  %v4444 = vsel %vm1621, %v4429, 0
  %v4447 = vsel %vm1621, %v4430, 0
  %v4450 = vsel %vm1621, %v4431, 0
  %v4453 = vsel %vm1621, %v4432, 0
  %v4456 = vsel %vm1621, %v4433, 0
  %4458 = vmatpush.msra.mxu0 0.0
  %4459 = vmatpush.msra.mxu0 0.0
  %4460 = vmatpush.msra.mxu0 0.0
  %4461 = vmatpush.msra.mxu0 0.0
  %4462 = vmatpush.msra.mxu0 0.0
  %4463 = vmatpush.msra.mxu0 0.0
  %4464 = vmatpush.msra.mxu0 0.0
  %4465 = vmatpush.msra.mxu0 0.0
  %4466 = vmatpush.msra.mxu0 %v3154
  %4467 = vmatpush.msra.mxu0 %v3139
  %4468 = vmatpush.msra.mxu0 %v3124
  %4469 = vmatpush.msra.mxu0 %v3109
  %4470 = vmatpush.msra.mxu0 %v3094
  %4471 = vmatpush.msra.mxu0 %v3079
  %4472 = vmatpush.msra.mxu0 %v3064
  %4473 = vmatpush.msra.mxu0 %v3049
  %4474 = vmatmul.f32.gmra.mxu0 %v4435
  %v4475 = vpop.f32.mrf.mxu0
  %v4476 = vadd.f32 0.0, %v4475
  %4477 = vmatmul.f32.gmra.mxu0 %v4438
  %v4478 = vpop.f32.mrf.mxu0
  %v4479 = vadd.f32 0.0, %v4478
  %4480 = vmatmul.f32.gmra.mxu0 %v4441
  %v4481 = vpop.f32.mrf.mxu0
  %v4482 = vadd.f32 0.0, %v4481
  %4483 = vmatmul.f32.gmra.mxu0 %v4444
  %v4484 = vpop.f32.mrf.mxu0
  %v4485 = vadd.f32 0.0, %v4484
  %4486 = vmatmul.f32.gmra.mxu0 %v4447
  %v4487 = vpop.f32.mrf.mxu0
  %v4488 = vadd.f32 0.0, %v4487
  %4489 = vmatmul.f32.gmra.mxu0 %v4450
  %v4490 = vpop.f32.mrf.mxu0
  %v4491 = vadd.f32 0.0, %v4490
  %4492 = vmatmul.f32.gmra.mxu0 %v4453
  %v4493 = vpop.f32.mrf.mxu0
  %v4494 = vadd.f32 0.0, %v4493
  %4495 = vmatmul.f32.gmra.mxu0 %v4456
  %v4496 = vpop.f32.mrf.mxu0
  %v4497 = vadd.f32 0.0, %v4496
  %4498 = vdwg.mxu0
  %s4499 = scalar_lea.vmem %s3, 672
  %v4500 = vld [vmem:[%s4499] sm:$0xff]
  %v4501 = vld [vmem:[%s4499 + $0x8] sm:$0xff]
  %v4502 = vld [vmem:[%s4499 + $0x10] sm:$0xff]
  %v4503 = vld [vmem:[%s4499 + $0x18] sm:$0xff]
  %v4504 = vld [vmem:[%s4499 + $0x20] sm:$0xff]
  %v4505 = vld [vmem:[%s4499 + $0x28] sm:$0xff]
  %v4506 = vld [vmem:[%s4499 + $0x30] sm:$0xff]
  %v4507 = vld [vmem:[%s4499 + $0x38] sm:$0xff]
  %v4508 = vld [vmem:[%s4499 + $0x40] sm:$0xff]
  %v4509 = vld [vmem:[%s4499 + $0x48] sm:$0xff]
  %v4510 = vld [vmem:[%s4499 + $0x50] sm:$0xff]
  %v4511 = vld [vmem:[%s4499 + $0x58] sm:$0xff]
  %v4512 = vld [vmem:[%s4499 + $0x60] sm:$0x1]
  %v4513 = vld [vmem:[%s4499 + $0x68] sm:$0x1]
  %v4515 = vsel %vm3331, %v4476, 0
  %v4518 = vsel %vm3331, %v4479, 0
  %v4521 = vsel %vm3331, %v4482, 0
  %v4524 = vsel %vm3331, %v4485, 0
  %v4527 = vsel %vm3331, %v4488, 0
  %v4530 = vsel %vm3331, %v4491, 0
  %v4533 = vsel %vm3331, %v4494, 0
  %v4536 = vsel %vm3331, %v4497, 0
  %v4539 = vsel %vm3356, %v4512, 0
  %v4542 = vsel %vm3356, %v4513, 0
  %4544 = vmatpush.msra.mxu0 0.0
  %4545 = vmatpush.msra.mxu0 0.0
  %4546 = vmatpush.msra.mxu0 0.0
  %4547 = vmatpush.msra.mxu0 0.0
  %4548 = vmatpush.msra.mxu0 0.0
  %4549 = vmatpush.msra.mxu0 0.0
  %4550 = vmatpush.msra.mxu0 0.0
  %4551 = vmatpush.msra.mxu0 0.0
  %4552 = vmatpush.msra.mxu0 0.0
  %4553 = vmatpush.msra.mxu0 %v4539
  %4554 = vmatpush.msra.mxu0 %v4510
  %4555 = vmatpush.msra.mxu0 %v4508
  %4556 = vmatpush.msra.mxu0 %v4506
  %4557 = vmatpush.msra.mxu0 %v4504
  %4558 = vmatpush.msra.mxu0 %v4502
  %4559 = vmatpush.msra.mxu0 %v4500
  %4560 = vmatmul.f32.gmra.mxu0 %v4515
  %v4561 = vpop.f32.mrf.mxu0
  %v4562 = vadd.f32 0.0, %v4561
  %4563 = vmatmul.f32.gmra.mxu0 %v4518
  %v4564 = vpop.f32.mrf.mxu0
  %v4565 = vadd.f32 0.0, %v4564
  %4566 = vmatmul.f32.gmra.mxu0 %v4521
  %v4567 = vpop.f32.mrf.mxu0
  %v4568 = vadd.f32 0.0, %v4567
  %4569 = vmatmul.f32.gmra.mxu0 %v4524
  %v4570 = vpop.f32.mrf.mxu0
  %v4571 = vadd.f32 0.0, %v4570
  %4572 = vmatmul.f32.gmra.mxu0 %v4527
  %v4573 = vpop.f32.mrf.mxu0
  %v4574 = vadd.f32 0.0, %v4573
  %4575 = vmatmul.f32.gmra.mxu0 %v4530
  %v4576 = vpop.f32.mrf.mxu0
  %v4577 = vadd.f32 0.0, %v4576
  %4578 = vmatmul.f32.gmra.mxu0 %v4533
  %v4579 = vpop.f32.mrf.mxu0
  %v4580 = vadd.f32 0.0, %v4579
  %4581 = vmatmul.f32.gmra.mxu0 %v4536
  %v4582 = vpop.f32.mrf.mxu0
  %v4583 = vadd.f32 0.0, %v4582
  %4584 = vdwg.mxu0
  %4585 = vmatpush.msra.mxu0 0.0
  %4586 = vmatpush.msra.mxu0 0.0
  %4587 = vmatpush.msra.mxu0 0.0
  %4588 = vmatpush.msra.mxu0 0.0
  %4589 = vmatpush.msra.mxu0 0.0
  %4590 = vmatpush.msra.mxu0 0.0
  %4591 = vmatpush.msra.mxu0 0.0
  %4592 = vmatpush.msra.mxu0 0.0
  %4593 = vmatpush.msra.mxu0 0.0
  %4594 = vmatpush.msra.mxu0 %v4542
  %4595 = vmatpush.msra.mxu0 %v4511
  %4596 = vmatpush.msra.mxu0 %v4509
  %4597 = vmatpush.msra.mxu0 %v4507
  %4598 = vmatpush.msra.mxu0 %v4505
  %4599 = vmatpush.msra.mxu0 %v4503
  %4600 = vmatpush.msra.mxu0 %v4501
  %4601 = vmatmul.f32.gmra.mxu0 %v4515
  %v4602 = vpop.f32.mrf.mxu0
  %v4603 = vadd.f32 0.0, %v4602
  %4604 = vmatmul.f32.gmra.mxu0 %v4518
  %v4605 = vpop.f32.mrf.mxu0
  %v4606 = vadd.f32 0.0, %v4605
  %4607 = vmatmul.f32.gmra.mxu0 %v4521
  %v4608 = vpop.f32.mrf.mxu0
  %v4609 = vadd.f32 0.0, %v4608
  %4610 = vmatmul.f32.gmra.mxu0 %v4524
  %v4611 = vpop.f32.mrf.mxu0
  %v4612 = vadd.f32 0.0, %v4611
  %4613 = vmatmul.f32.gmra.mxu0 %v4527
  %v4614 = vpop.f32.mrf.mxu0
  %v4615 = vadd.f32 0.0, %v4614
  %4616 = vmatmul.f32.gmra.mxu0 %v4530
  %v4617 = vpop.f32.mrf.mxu0
  %v4618 = vadd.f32 0.0, %v4617
  %4619 = vmatmul.f32.gmra.mxu0 %v4533
  %v4620 = vpop.f32.mrf.mxu0
  %v4621 = vadd.f32 0.0, %v4620
  %4622 = vmatmul.f32.gmra.mxu0 %v4536
  %v4623 = vpop.f32.mrf.mxu0
  %v4624 = vadd.f32 0.0, %v4623
  %4625 = vdwg.mxu0
  %v4626 = vadd.f32 %v4409, %v4562
  %v4627 = vadd.f32 %v4410, %v4603
  %v4628 = vadd.f32 %v4411, %v4565
  %v4629 = vadd.f32 %v4412, %v4606
  %v4630 = vadd.f32 %v4413, %v4568
  %v4631 = vadd.f32 %v4414, %v4609
  %v4632 = vadd.f32 %v4415, %v4571
  %v4633 = vadd.f32 %v4416, %v4612
  %v4634 = vadd.f32 %v4417, %v4574
  %v4635 = vadd.f32 %v4418, %v4615
  %v4636 = vadd.f32 %v4419, %v4577
  %v4637 = vadd.f32 %v4420, %v4618
  %v4638 = vadd.f32 %v4421, %v4580
  %v4639 = vadd.f32 %v4422, %v4621
  %v4640 = vadd.f32 %v4423, %v4583
  %v4641 = vadd.f32 %v4424, %v4624
  %s4642 = scalar_lea.vmem %s6, 448
  %v4643 = vld [vmem:[%s4642] sm:$0xff]
  %v4644 = vld [vmem:[%s4642 + $0x8] sm:$0xff]
  %v4645 = vld [vmem:[%s4642 + $0x10] sm:$0xff]
  %v4646 = vld [vmem:[%s4642 + $0x18] sm:$0xff]
  %v4647 = vld [vmem:[%s4642 + $0x20] sm:$0xff]
  %v4648 = vld [vmem:[%s4642 + $0x28] sm:$0xff]
  %v4649 = vld [vmem:[%s4642 + $0x30] sm:$0xff]
  %v4650 = vld [vmem:[%s4642 + $0x38] sm:$0xff]
  %v4652 = vsel %vm1621, %v4643, 0
  %v4655 = vsel %vm1621, %v4644, 0
  %v4658 = vsel %vm1621, %v4645, 0
  %v4661 = vsel %vm1621, %v4646, 0
  %v4664 = vsel %vm1621, %v4647, 0
  %v4667 = vsel %vm1621, %v4648, 0
  %v4670 = vsel %vm1621, %v4649, 0
  %v4673 = vsel %vm1621, %v4650, 0
  %4675 = vmatpush.msra.mxu0 0.0
  %4676 = vmatpush.msra.mxu0 0.0
  %4677 = vmatpush.msra.mxu0 0.0
  %4678 = vmatpush.msra.mxu0 0.0
  %4679 = vmatpush.msra.mxu0 0.0
  %4680 = vmatpush.msra.mxu0 0.0
  %4681 = vmatpush.msra.mxu0 0.0
  %4682 = vmatpush.msra.mxu0 0.0
  %4683 = vmatpush.msra.mxu0 %v3154
  %4684 = vmatpush.msra.mxu0 %v3139
  %4685 = vmatpush.msra.mxu0 %v3124
  %4686 = vmatpush.msra.mxu0 %v3109
  %4687 = vmatpush.msra.mxu0 %v3094
  %4688 = vmatpush.msra.mxu0 %v3079
  %4689 = vmatpush.msra.mxu0 %v3064
  %4690 = vmatpush.msra.mxu0 %v3049
  %4691 = vmatmul.f32.gmra.mxu0 %v4652
  %v4692 = vpop.f32.mrf.mxu0
  %v4693 = vadd.f32 0.0, %v4692
  %4694 = vmatmul.f32.gmra.mxu0 %v4655
  %v4695 = vpop.f32.mrf.mxu0
  %v4696 = vadd.f32 0.0, %v4695
  %4697 = vmatmul.f32.gmra.mxu0 %v4658
  %v4698 = vpop.f32.mrf.mxu0
  %v4699 = vadd.f32 0.0, %v4698
  %4700 = vmatmul.f32.gmra.mxu0 %v4661
  %v4701 = vpop.f32.mrf.mxu0
  %v4702 = vadd.f32 0.0, %v4701
  %4703 = vmatmul.f32.gmra.mxu0 %v4664
  %v4704 = vpop.f32.mrf.mxu0
  %v4705 = vadd.f32 0.0, %v4704
  %4706 = vmatmul.f32.gmra.mxu0 %v4667
  %v4707 = vpop.f32.mrf.mxu0
  %v4708 = vadd.f32 0.0, %v4707
  %4709 = vmatmul.f32.gmra.mxu0 %v4670
  %v4710 = vpop.f32.mrf.mxu0
  %v4711 = vadd.f32 0.0, %v4710
  %4712 = vmatmul.f32.gmra.mxu0 %v4673
  %v4713 = vpop.f32.mrf.mxu0
  %v4714 = vadd.f32 0.0, %v4713
  %4715 = vdwg.mxu0
  %s4716 = scalar_lea.vmem %s3, 784
  %v4717 = vld [vmem:[%s4716] sm:$0xff]
  %v4718 = vld [vmem:[%s4716 + $0x8] sm:$0xff]
  %v4719 = vld [vmem:[%s4716 + $0x10] sm:$0xff]
  %v4720 = vld [vmem:[%s4716 + $0x18] sm:$0xff]
  %v4721 = vld [vmem:[%s4716 + $0x20] sm:$0xff]
  %v4722 = vld [vmem:[%s4716 + $0x28] sm:$0xff]
  %v4723 = vld [vmem:[%s4716 + $0x30] sm:$0xff]
  %v4724 = vld [vmem:[%s4716 + $0x38] sm:$0xff]
  %v4725 = vld [vmem:[%s4716 + $0x40] sm:$0xff]
  %v4726 = vld [vmem:[%s4716 + $0x48] sm:$0xff]
  %v4727 = vld [vmem:[%s4716 + $0x50] sm:$0xff]
  %v4728 = vld [vmem:[%s4716 + $0x58] sm:$0xff]
  %v4729 = vld [vmem:[%s4716 + $0x60] sm:$0x1]
  %v4730 = vld [vmem:[%s4716 + $0x68] sm:$0x1]
  %v4732 = vsel %vm3331, %v4693, 0
  %v4735 = vsel %vm3331, %v4696, 0
  %v4738 = vsel %vm3331, %v4699, 0
  %v4741 = vsel %vm3331, %v4702, 0
  %v4744 = vsel %vm3331, %v4705, 0
  %v4747 = vsel %vm3331, %v4708, 0
  %v4750 = vsel %vm3331, %v4711, 0
  %v4753 = vsel %vm3331, %v4714, 0
  %v4756 = vsel %vm3356, %v4729, 0
  %v4759 = vsel %vm3356, %v4730, 0
  %4761 = vmatpush.msra.mxu0 0.0
  %4762 = vmatpush.msra.mxu0 0.0
  %4763 = vmatpush.msra.mxu0 0.0
  %4764 = vmatpush.msra.mxu0 0.0
  %4765 = vmatpush.msra.mxu0 0.0
  %4766 = vmatpush.msra.mxu0 0.0
  %4767 = vmatpush.msra.mxu0 0.0
  %4768 = vmatpush.msra.mxu0 0.0
  %4769 = vmatpush.msra.mxu0 0.0
  %4770 = vmatpush.msra.mxu0 %v4756
  %4771 = vmatpush.msra.mxu0 %v4727
  %4772 = vmatpush.msra.mxu0 %v4725
  %4773 = vmatpush.msra.mxu0 %v4723
  %4774 = vmatpush.msra.mxu0 %v4721
  %4775 = vmatpush.msra.mxu0 %v4719
  %4776 = vmatpush.msra.mxu0 %v4717
  %4777 = vmatmul.f32.gmra.mxu0 %v4732
  %v4778 = vpop.f32.mrf.mxu0
  %v4779 = vadd.f32 0.0, %v4778
  %4780 = vmatmul.f32.gmra.mxu0 %v4735
  %v4781 = vpop.f32.mrf.mxu0
  %v4782 = vadd.f32 0.0, %v4781
  %4783 = vmatmul.f32.gmra.mxu0 %v4738
  %v4784 = vpop.f32.mrf.mxu0
  %v4785 = vadd.f32 0.0, %v4784
  %4786 = vmatmul.f32.gmra.mxu0 %v4741
  %v4787 = vpop.f32.mrf.mxu0
  %v4788 = vadd.f32 0.0, %v4787
  %4789 = vmatmul.f32.gmra.mxu0 %v4744
  %v4790 = vpop.f32.mrf.mxu0
  %v4791 = vadd.f32 0.0, %v4790
  %4792 = vmatmul.f32.gmra.mxu0 %v4747
  %v4793 = vpop.f32.mrf.mxu0
  %v4794 = vadd.f32 0.0, %v4793
  %4795 = vmatmul.f32.gmra.mxu0 %v4750
  %v4796 = vpop.f32.mrf.mxu0
  %v4797 = vadd.f32 0.0, %v4796
  %4798 = vmatmul.f32.gmra.mxu0 %v4753
  %v4799 = vpop.f32.mrf.mxu0
  %v4800 = vadd.f32 0.0, %v4799
  %4801 = vdwg.mxu0
  %4802 = vmatpush.msra.mxu0 0.0
  %4803 = vmatpush.msra.mxu0 0.0
  %4804 = vmatpush.msra.mxu0 0.0
  %4805 = vmatpush.msra.mxu0 0.0
  %4806 = vmatpush.msra.mxu0 0.0
  %4807 = vmatpush.msra.mxu0 0.0
  %4808 = vmatpush.msra.mxu0 0.0
  %4809 = vmatpush.msra.mxu0 0.0
  %4810 = vmatpush.msra.mxu0 0.0
  %4811 = vmatpush.msra.mxu0 %v4759
  %4812 = vmatpush.msra.mxu0 %v4728
  %4813 = vmatpush.msra.mxu0 %v4726
  %4814 = vmatpush.msra.mxu0 %v4724
  %4815 = vmatpush.msra.mxu0 %v4722
  %4816 = vmatpush.msra.mxu0 %v4720
  %4817 = vmatpush.msra.mxu0 %v4718
  %4818 = vmatmul.f32.gmra.mxu0 %v4732
  %v4819 = vpop.f32.mrf.mxu0
  %v4820 = vadd.f32 0.0, %v4819
  %4821 = vmatmul.f32.gmra.mxu0 %v4735
  %v4822 = vpop.f32.mrf.mxu0
  %v4823 = vadd.f32 0.0, %v4822
  %4824 = vmatmul.f32.gmra.mxu0 %v4738
  %v4825 = vpop.f32.mrf.mxu0
  %v4826 = vadd.f32 0.0, %v4825
  %4827 = vmatmul.f32.gmra.mxu0 %v4741
  %v4828 = vpop.f32.mrf.mxu0
  %v4829 = vadd.f32 0.0, %v4828
  %4830 = vmatmul.f32.gmra.mxu0 %v4744
  %v4831 = vpop.f32.mrf.mxu0
  %v4832 = vadd.f32 0.0, %v4831
  %4833 = vmatmul.f32.gmra.mxu0 %v4747
  %v4834 = vpop.f32.mrf.mxu0
  %v4835 = vadd.f32 0.0, %v4834
  %4836 = vmatmul.f32.gmra.mxu0 %v4750
  %v4837 = vpop.f32.mrf.mxu0
  %v4838 = vadd.f32 0.0, %v4837
  %4839 = vmatmul.f32.gmra.mxu0 %v4753
  %v4840 = vpop.f32.mrf.mxu0
  %v4841 = vadd.f32 0.0, %v4840
  %4842 = vdwg.mxu0
  %v4843 = vadd.f32 %v4626, %v4779
  %v4844 = vadd.f32 %v4627, %v4820
  %v4845 = vadd.f32 %v4628, %v4782
  %v4846 = vadd.f32 %v4629, %v4823
  %v4847 = vadd.f32 %v4630, %v4785
  %v4848 = vadd.f32 %v4631, %v4826
  %v4849 = vadd.f32 %v4632, %v4788
  %v4850 = vadd.f32 %v4633, %v4829
  %v4851 = vadd.f32 %v4634, %v4791
  %v4852 = vadd.f32 %v4635, %v4832
  %v4853 = vadd.f32 %v4636, %v4794
  %v4854 = vadd.f32 %v4637, %v4835
  %v4855 = vadd.f32 %v4638, %v4797
  %v4856 = vadd.f32 %v4639, %v4838
  %v4857 = vadd.f32 %v4640, %v4800
  %v4858 = vadd.f32 %v4641, %v4841
  %s4859 = scalar_lea.vmem %s6, 512
  %v4860 = vld [vmem:[%s4859] sm:$0xff]
  %v4861 = vld [vmem:[%s4859 + $0x8] sm:$0xff]
  %v4862 = vld [vmem:[%s4859 + $0x10] sm:$0xff]
  %v4863 = vld [vmem:[%s4859 + $0x18] sm:$0xff]
  %v4864 = vld [vmem:[%s4859 + $0x20] sm:$0xff]
  %v4865 = vld [vmem:[%s4859 + $0x28] sm:$0xff]
  %v4866 = vld [vmem:[%s4859 + $0x30] sm:$0xff]
  %v4867 = vld [vmem:[%s4859 + $0x38] sm:$0xff]
  %v4869 = vsel %vm1621, %v4860, 0
  %v4872 = vsel %vm1621, %v4861, 0
  %v4875 = vsel %vm1621, %v4862, 0
  %v4878 = vsel %vm1621, %v4863, 0
  %v4881 = vsel %vm1621, %v4864, 0
  %v4884 = vsel %vm1621, %v4865, 0
  %v4887 = vsel %vm1621, %v4866, 0
  %v4890 = vsel %vm1621, %v4867, 0
  %4892 = vmatpush.msra.mxu0 0.0
  %4893 = vmatpush.msra.mxu0 0.0
  %4894 = vmatpush.msra.mxu0 0.0
  %4895 = vmatpush.msra.mxu0 0.0
  %4896 = vmatpush.msra.mxu0 0.0
  %4897 = vmatpush.msra.mxu0 0.0
  %4898 = vmatpush.msra.mxu0 0.0
  %4899 = vmatpush.msra.mxu0 0.0
  %4900 = vmatpush.msra.mxu0 %v3154
  %4901 = vmatpush.msra.mxu0 %v3139
  %4902 = vmatpush.msra.mxu0 %v3124
  %4903 = vmatpush.msra.mxu0 %v3109
  %4904 = vmatpush.msra.mxu0 %v3094
  %4905 = vmatpush.msra.mxu0 %v3079
  %4906 = vmatpush.msra.mxu0 %v3064
  %4907 = vmatpush.msra.mxu0 %v3049
  %4908 = vmatmul.f32.gmra.mxu0 %v4869
  %v4909 = vpop.f32.mrf.mxu0
  %v4910 = vadd.f32 0.0, %v4909
  %4911 = vmatmul.f32.gmra.mxu0 %v4872
  %v4912 = vpop.f32.mrf.mxu0
  %v4913 = vadd.f32 0.0, %v4912
  %4914 = vmatmul.f32.gmra.mxu0 %v4875
  %v4915 = vpop.f32.mrf.mxu0
  %v4916 = vadd.f32 0.0, %v4915
  %4917 = vmatmul.f32.gmra.mxu0 %v4878
  %v4918 = vpop.f32.mrf.mxu0
  %v4919 = vadd.f32 0.0, %v4918
  %4920 = vmatmul.f32.gmra.mxu0 %v4881
  %v4921 = vpop.f32.mrf.mxu0
  %v4922 = vadd.f32 0.0, %v4921
  %4923 = vmatmul.f32.gmra.mxu0 %v4884
  %v4924 = vpop.f32.mrf.mxu0
  %v4925 = vadd.f32 0.0, %v4924
  %4926 = vmatmul.f32.gmra.mxu0 %v4887
  %v4927 = vpop.f32.mrf.mxu0
  %v4928 = vadd.f32 0.0, %v4927
  %4929 = vmatmul.f32.gmra.mxu0 %v4890
  %v4930 = vpop.f32.mrf.mxu0
  %v4931 = vadd.f32 0.0, %v4930
  %4932 = vdwg.mxu0
  %s4933 = scalar_lea.vmem %s3, 896
  %v4934 = vld [vmem:[%s4933] sm:$0xff]
  %v4935 = vld [vmem:[%s4933 + $0x8] sm:$0xff]
  %v4936 = vld [vmem:[%s4933 + $0x10] sm:$0xff]
  %v4937 = vld [vmem:[%s4933 + $0x18] sm:$0xff]
  %v4938 = vld [vmem:[%s4933 + $0x20] sm:$0xff]
  %v4939 = vld [vmem:[%s4933 + $0x28] sm:$0xff]
  %v4940 = vld [vmem:[%s4933 + $0x30] sm:$0xff]
  %v4941 = vld [vmem:[%s4933 + $0x38] sm:$0xff]
  %v4942 = vld [vmem:[%s4933 + $0x40] sm:$0xff]
  %v4943 = vld [vmem:[%s4933 + $0x48] sm:$0xff]
  %v4944 = vld [vmem:[%s4933 + $0x50] sm:$0xff]
  %v4945 = vld [vmem:[%s4933 + $0x58] sm:$0xff]
  %v4946 = vld [vmem:[%s4933 + $0x60] sm:$0x1]
  %v4947 = vld [vmem:[%s4933 + $0x68] sm:$0x1]
  %v4949 = vsel %vm3331, %v4910, 0
  %v4952 = vsel %vm3331, %v4913, 0
  %v4955 = vsel %vm3331, %v4916, 0
  %v4958 = vsel %vm3331, %v4919, 0
  %v4961 = vsel %vm3331, %v4922, 0
  %v4964 = vsel %vm3331, %v4925, 0
  %v4967 = vsel %vm3331, %v4928, 0
  %v4970 = vsel %vm3331, %v4931, 0
  %v4973 = vsel %vm3356, %v4946, 0
  %v4976 = vsel %vm3356, %v4947, 0
  %4978 = vmatpush.msra.mxu0 0.0
  %4979 = vmatpush.msra.mxu0 0.0
  %4980 = vmatpush.msra.mxu0 0.0
  %4981 = vmatpush.msra.mxu0 0.0
  %4982 = vmatpush.msra.mxu0 0.0
  %4983 = vmatpush.msra.mxu0 0.0
  %4984 = vmatpush.msra.mxu0 0.0
  %4985 = vmatpush.msra.mxu0 0.0
  %4986 = vmatpush.msra.mxu0 0.0
  %4987 = vmatpush.msra.mxu0 %v4973
  %4988 = vmatpush.msra.mxu0 %v4944
  %4989 = vmatpush.msra.mxu0 %v4942
  %4990 = vmatpush.msra.mxu0 %v4940
  %4991 = vmatpush.msra.mxu0 %v4938
  %4992 = vmatpush.msra.mxu0 %v4936
  %4993 = vmatpush.msra.mxu0 %v4934
  %4994 = vmatmul.f32.gmra.mxu0 %v4949
  %v4995 = vpop.f32.mrf.mxu0
  %v4996 = vadd.f32 0.0, %v4995
  %4997 = vmatmul.f32.gmra.mxu0 %v4952
  %v4998 = vpop.f32.mrf.mxu0
  %v4999 = vadd.f32 0.0, %v4998
  %5000 = vmatmul.f32.gmra.mxu0 %v4955
  %v5001 = vpop.f32.mrf.mxu0
  %v5002 = vadd.f32 0.0, %v5001
  %5003 = vmatmul.f32.gmra.mxu0 %v4958
  %v5004 = vpop.f32.mrf.mxu0
  %v5005 = vadd.f32 0.0, %v5004
  %5006 = vmatmul.f32.gmra.mxu0 %v4961
  %v5007 = vpop.f32.mrf.mxu0
  %v5008 = vadd.f32 0.0, %v5007
  %5009 = vmatmul.f32.gmra.mxu0 %v4964
  %v5010 = vpop.f32.mrf.mxu0
  %v5011 = vadd.f32 0.0, %v5010
  %5012 = vmatmul.f32.gmra.mxu0 %v4967
  %v5013 = vpop.f32.mrf.mxu0
  %v5014 = vadd.f32 0.0, %v5013
  %5015 = vmatmul.f32.gmra.mxu0 %v4970
  %v5016 = vpop.f32.mrf.mxu0
  %v5017 = vadd.f32 0.0, %v5016
  %5018 = vdwg.mxu0
  %5019 = vmatpush.msra.mxu0 0.0
  %5020 = vmatpush.msra.mxu0 0.0
  %5021 = vmatpush.msra.mxu0 0.0
  %5022 = vmatpush.msra.mxu0 0.0
  %5023 = vmatpush.msra.mxu0 0.0
  %5024 = vmatpush.msra.mxu0 0.0
  %5025 = vmatpush.msra.mxu0 0.0
  %5026 = vmatpush.msra.mxu0 0.0
  %5027 = vmatpush.msra.mxu0 0.0
  %5028 = vmatpush.msra.mxu0 %v4976
  %5029 = vmatpush.msra.mxu0 %v4945
  %5030 = vmatpush.msra.mxu0 %v4943
  %5031 = vmatpush.msra.mxu0 %v4941
  %5032 = vmatpush.msra.mxu0 %v4939
  %5033 = vmatpush.msra.mxu0 %v4937
  %5034 = vmatpush.msra.mxu0 %v4935
  %5035 = vmatmul.f32.gmra.mxu0 %v4949
  %v5036 = vpop.f32.mrf.mxu0
  %v5037 = vadd.f32 0.0, %v5036
  %5038 = vmatmul.f32.gmra.mxu0 %v4952
  %v5039 = vpop.f32.mrf.mxu0
  %v5040 = vadd.f32 0.0, %v5039
  %5041 = vmatmul.f32.gmra.mxu0 %v4955
  %v5042 = vpop.f32.mrf.mxu0
  %v5043 = vadd.f32 0.0, %v5042
  %5044 = vmatmul.f32.gmra.mxu0 %v4958
  %v5045 = vpop.f32.mrf.mxu0
  %v5046 = vadd.f32 0.0, %v5045
  %5047 = vmatmul.f32.gmra.mxu0 %v4961
  %v5048 = vpop.f32.mrf.mxu0
  %v5049 = vadd.f32 0.0, %v5048
  %5050 = vmatmul.f32.gmra.mxu0 %v4964
  %v5051 = vpop.f32.mrf.mxu0
  %v5052 = vadd.f32 0.0, %v5051
  %5053 = vmatmul.f32.gmra.mxu0 %v4967
  %v5054 = vpop.f32.mrf.mxu0
  %v5055 = vadd.f32 0.0, %v5054
  %5056 = vmatmul.f32.gmra.mxu0 %v4970
  %v5057 = vpop.f32.mrf.mxu0
  %v5058 = vadd.f32 0.0, %v5057
  %5059 = vdwg.mxu0
  %v5060 = vadd.f32 %v4843, %v4996
  %v5061 = vadd.f32 %v4844, %v5037
  %v5062 = vadd.f32 %v4845, %v4999
  %v5063 = vadd.f32 %v4846, %v5040
  %v5064 = vadd.f32 %v4847, %v5002
  %v5065 = vadd.f32 %v4848, %v5043
  %v5066 = vadd.f32 %v4849, %v5005
  %v5067 = vadd.f32 %v4850, %v5046
  %v5068 = vadd.f32 %v4851, %v5008
  %v5069 = vadd.f32 %v4852, %v5049
  %v5070 = vadd.f32 %v4853, %v5011
  %v5071 = vadd.f32 %v4854, %v5052
  %v5072 = vadd.f32 %v4855, %v5014
  %v5073 = vadd.f32 %v4856, %v5055
  %v5074 = vadd.f32 %v4857, %v5017
  %v5075 = vadd.f32 %v4858, %v5058
  %v5076 = vld [vmem:[%s10] sm:$0xff]
  %v5077 = vld [vmem:[%s10 + $0x8] sm:$0xff]
  %v5078 = vld [vmem:[%s10 + $0x10] sm:$0xff]
  %v5079 = vld [vmem:[%s10 + $0x18] sm:$0xff]
  %v5080 = vld [vmem:[%s10 + $0x20] sm:$0xff]
  %v5081 = vld [vmem:[%s10 + $0x28] sm:$0xff]
  %v5082 = vld [vmem:[%s10 + $0x30] sm:$0xff]
  %v5083 = vld [vmem:[%s10 + $0x38] sm:$0xff]
  %5085 = vset.pattern.permute.xlu0 0
  %5086 = vperm.xlu0 %5085, %v5076
  %v5087 = vpop.permute.xlu0 %5086
  %5090 = vset.pattern.permute.xlu0 0
  %5091 = vperm.xlu0 %5090, %v5077
  %v5092 = vpop.permute.xlu0 %5091
  %5095 = vset.pattern.permute.xlu0 0
  %5096 = vperm.xlu0 %5095, %v5078
  %v5097 = vpop.permute.xlu0 %5096
  %5100 = vset.pattern.permute.xlu0 0
  %5101 = vperm.xlu0 %5100, %v5079
  %v5102 = vpop.permute.xlu0 %5101
  %5105 = vset.pattern.permute.xlu0 0
  %5106 = vperm.xlu0 %5105, %v5080
  %v5107 = vpop.permute.xlu0 %5106
  %5110 = vset.pattern.permute.xlu0 0
  %5111 = vperm.xlu0 %5110, %v5081
  %v5112 = vpop.permute.xlu0 %5111
  %5115 = vset.pattern.permute.xlu0 0
  %5116 = vperm.xlu0 %5115, %v5082
  %v5117 = vpop.permute.xlu0 %5116
  %5120 = vset.pattern.permute.xlu0 0
  %5121 = vperm.xlu0 %5120, %v5083
  %v5122 = vpop.permute.xlu0 %5121
  %v5124 = vadd.f32 %v5060, %v5087
  %v5125 = vadd.f32 %v5061, %v5087
  %v5126 = vadd.f32 %v5062, %v5092
  %v5127 = vadd.f32 %v5063, %v5092
  %v5128 = vadd.f32 %v5064, %v5097
  %v5129 = vadd.f32 %v5065, %v5097
  %v5130 = vadd.f32 %v5066, %v5102
  %v5131 = vadd.f32 %v5067, %v5102
  %v5132 = vadd.f32 %v5068, %v5107
  %v5133 = vadd.f32 %v5069, %v5107
  %v5134 = vadd.f32 %v5070, %v5112
  %v5135 = vadd.f32 %v5071, %v5112
  %v5136 = vadd.f32 %v5072, %v5117
  %v5137 = vadd.f32 %v5073, %v5117
  %v5138 = vadd.f32 %v5074, %v5122
  %v5139 = vadd.f32 %v5075, %v5122
  %v5140 = vxor.u32 %v5124, 2147483648
  %v5141 = vxor.u32 %v5125, 2147483648
  %v5142 = vxor.u32 %v5126, 2147483648
  %v5143 = vxor.u32 %v5127, 2147483648
  %v5144 = vxor.u32 %v5128, 2147483648
  %v5145 = vxor.u32 %v5129, 2147483648
  %v5146 = vxor.u32 %v5130, 2147483648
  %v5147 = vxor.u32 %v5131, 2147483648
  %v5148 = vxor.u32 %v5132, 2147483648
  %v5149 = vxor.u32 %v5133, 2147483648
  %v5150 = vxor.u32 %v5134, 2147483648
  %v5151 = vxor.u32 %v5135, 2147483648
  %v5152 = vxor.u32 %v5136, 2147483648
  %v5153 = vxor.u32 %v5137, 2147483648
  %v5154 = vxor.u32 %v5138, 2147483648
  %v5155 = vxor.u32 %v5139, 2147483648
  %v5156 = vmul.f32 %v5140, 1.442695
  %v5157 = vpow.pop %v5156
  %v5158 = vmul.f32 %v5141, 1.442695
  %v5159 = vpow.pop %v5158
  %v5160 = vmul.f32 %v5142, 1.442695
  %v5161 = vpow.pop %v5160
  %v5162 = vmul.f32 %v5143, 1.442695
  %v5163 = vpow.pop %v5162
  %v5164 = vmul.f32 %v5144, 1.442695
  %v5165 = vpow.pop %v5164
  %v5166 = vmul.f32 %v5145, 1.442695
  %v5167 = vpow.pop %v5166
  %v5168 = vmul.f32 %v5146, 1.442695
  %v5169 = vpow.pop %v5168
  %v5170 = vmul.f32 %v5147, 1.442695
  %v5171 = vpow.pop %v5170
  %v5172 = vmul.f32 %v5148, 1.442695
  %v5173 = vpow.pop %v5172
  %v5174 = vmul.f32 %v5149, 1.442695
  %v5175 = vpow.pop %v5174
  %v5176 = vmul.f32 %v5150, 1.442695
  %v5177 = vpow.pop %v5176
  %v5178 = vmul.f32 %v5151, 1.442695
  %v5179 = vpow.pop %v5178
  %v5180 = vmul.f32 %v5152, 1.442695
  %v5181 = vpow.pop %v5180
  %v5182 = vmul.f32 %v5153, 1.442695
  %v5183 = vpow.pop %v5182
  %v5184 = vmul.f32 %v5154, 1.442695
  %v5185 = vpow.pop %v5184
  %v5186 = vmul.f32 %v5155, 1.442695
  %v5187 = vpow.pop %v5186
  %v5188 = vadd.f32 %v5157, 1.0
  %v5189 = vadd.f32 %v5159, 1.0
  %v5190 = vadd.f32 %v5161, 1.0
  %v5191 = vadd.f32 %v5163, 1.0
  %v5192 = vadd.f32 %v5165, 1.0
  %v5193 = vadd.f32 %v5167, 1.0
  %v5194 = vadd.f32 %v5169, 1.0
  %v5195 = vadd.f32 %v5171, 1.0
  %v5196 = vadd.f32 %v5173, 1.0
  %v5197 = vadd.f32 %v5175, 1.0
  %v5198 = vadd.f32 %v5177, 1.0
  %v5199 = vadd.f32 %v5179, 1.0
  %v5200 = vadd.f32 %v5181, 1.0
  %v5201 = vadd.f32 %v5183, 1.0
  %v5202 = vadd.f32 %v5185, 1.0
  %v5203 = vadd.f32 %v5187, 1.0
  %v5204 = vrcp.pop %v5188
  %v5205 = vmul.f32 %v5188, %v5204
  %v5206 = vsub.f32 1.0, %v5205
  %v5207 = vmul.f32 %v5204, %v5206
  %v5208 = vadd.f32 %v5204, %v5207
  %vm5209 = vweird.f32 %v5188
  %vm5210 = vweird.f32 %v5204
  %vm5211 = vmor %vm5209, %vm5210
  %v5212 = vsel %vm5211, %v5204, %v5208
  %v5213 = vand.u32 2147483647, %v5188
  %vm5214 = vcmp.eq.f32.partialorder %v5213, 8.507059e+37
  %v5215 = vand.u32 %v5188, 2147483648
  %v5216 = vor.u32 1.1754944e-38, %v5215
  %v5217 = vsel %vm5214, %v5216, %v5212
  %v5218 = vmul.f32 1.0, %v5217
  %v5219 = vrcp.pop %v5189
  %v5220 = vmul.f32 %v5189, %v5219
  %v5221 = vsub.f32 1.0, %v5220
  %v5222 = vmul.f32 %v5219, %v5221
  %v5223 = vadd.f32 %v5219, %v5222
  %vm5224 = vweird.f32 %v5189
  %vm5225 = vweird.f32 %v5219
  %vm5226 = vmor %vm5224, %vm5225
  %v5227 = vsel %vm5226, %v5219, %v5223
  %v5228 = vand.u32 2147483647, %v5189
  %vm5229 = vcmp.eq.f32.partialorder %v5228, 8.507059e+37
  %v5230 = vand.u32 %v5189, 2147483648
  %v5231 = vor.u32 1.1754944e-38, %v5230
  %v5232 = vsel %vm5229, %v5231, %v5227
  %v5233 = vmul.f32 1.0, %v5232
  %v5234 = vrcp.pop %v5190
  %v5235 = vmul.f32 %v5190, %v5234
  %v5236 = vsub.f32 1.0, %v5235
  %v5237 = vmul.f32 %v5234, %v5236
  %v5238 = vadd.f32 %v5234, %v5237
  %vm5239 = vweird.f32 %v5190
  %vm5240 = vweird.f32 %v5234
  %vm5241 = vmor %vm5239, %vm5240
  %v5242 = vsel %vm5241, %v5234, %v5238
  %v5243 = vand.u32 2147483647, %v5190
  %vm5244 = vcmp.eq.f32.partialorder %v5243, 8.507059e+37
  %v5245 = vand.u32 %v5190, 2147483648
  %v5246 = vor.u32 1.1754944e-38, %v5245
  %v5247 = vsel %vm5244, %v5246, %v5242
  %v5248 = vmul.f32 1.0, %v5247
  %v5249 = vrcp.pop %v5191
  %v5250 = vmul.f32 %v5191, %v5249
  %v5251 = vsub.f32 1.0, %v5250
  %v5252 = vmul.f32 %v5249, %v5251
  %v5253 = vadd.f32 %v5249, %v5252
  %vm5254 = vweird.f32 %v5191
  %vm5255 = vweird.f32 %v5249
  %vm5256 = vmor %vm5254, %vm5255
  %v5257 = vsel %vm5256, %v5249, %v5253
  %v5258 = vand.u32 2147483647, %v5191
  %vm5259 = vcmp.eq.f32.partialorder %v5258, 8.507059e+37
  %v5260 = vand.u32 %v5191, 2147483648
  %v5261 = vor.u32 1.1754944e-38, %v5260
  %v5262 = vsel %vm5259, %v5261, %v5257
  %v5263 = vmul.f32 1.0, %v5262
  %v5264 = vrcp.pop %v5192
  %v5265 = vmul.f32 %v5192, %v5264
  %v5266 = vsub.f32 1.0, %v5265
  %v5267 = vmul.f32 %v5264, %v5266
  %v5268 = vadd.f32 %v5264, %v5267
  %vm5269 = vweird.f32 %v5192
  %vm5270 = vweird.f32 %v5264
  %vm5271 = vmor %vm5269, %vm5270
  %v5272 = vsel %vm5271, %v5264, %v5268
  %v5273 = vand.u32 2147483647, %v5192
  %vm5274 = vcmp.eq.f32.partialorder %v5273, 8.507059e+37
  %v5275 = vand.u32 %v5192, 2147483648
  %v5276 = vor.u32 1.1754944e-38, %v5275
  %v5277 = vsel %vm5274, %v5276, %v5272
  %v5278 = vmul.f32 1.0, %v5277
  %v5279 = vrcp.pop %v5193
  %v5280 = vmul.f32 %v5193, %v5279
  %v5281 = vsub.f32 1.0, %v5280
  %v5282 = vmul.f32 %v5279, %v5281
  %v5283 = vadd.f32 %v5279, %v5282
  %vm5284 = vweird.f32 %v5193
  %vm5285 = vweird.f32 %v5279
  %vm5286 = vmor %vm5284, %vm5285
  %v5287 = vsel %vm5286, %v5279, %v5283
  %v5288 = vand.u32 2147483647, %v5193
  %vm5289 = vcmp.eq.f32.partialorder %v5288, 8.507059e+37
  %v5290 = vand.u32 %v5193, 2147483648
  %v5291 = vor.u32 1.1754944e-38, %v5290
  %v5292 = vsel %vm5289, %v5291, %v5287
  %v5293 = vmul.f32 1.0, %v5292
  %v5294 = vrcp.pop %v5194
  %v5295 = vmul.f32 %v5194, %v5294
  %v5296 = vsub.f32 1.0, %v5295
  %v5297 = vmul.f32 %v5294, %v5296
  %v5298 = vadd.f32 %v5294, %v5297
  %vm5299 = vweird.f32 %v5194
  %vm5300 = vweird.f32 %v5294
  %vm5301 = vmor %vm5299, %vm5300
  %v5302 = vsel %vm5301, %v5294, %v5298
  %v5303 = vand.u32 2147483647, %v5194
  %vm5304 = vcmp.eq.f32.partialorder %v5303, 8.507059e+37
  %v5305 = vand.u32 %v5194, 2147483648
  %v5306 = vor.u32 1.1754944e-38, %v5305
  %v5307 = vsel %vm5304, %v5306, %v5302
  %v5308 = vmul.f32 1.0, %v5307
  %v5309 = vrcp.pop %v5195
  %v5310 = vmul.f32 %v5195, %v5309
  %v5311 = vsub.f32 1.0, %v5310
  %v5312 = vmul.f32 %v5309, %v5311
  %v5313 = vadd.f32 %v5309, %v5312
  %vm5314 = vweird.f32 %v5195
  %vm5315 = vweird.f32 %v5309
  %vm5316 = vmor %vm5314, %vm5315
  %v5317 = vsel %vm5316, %v5309, %v5313
  %v5318 = vand.u32 2147483647, %v5195
  %vm5319 = vcmp.eq.f32.partialorder %v5318, 8.507059e+37
  %v5320 = vand.u32 %v5195, 2147483648
  %v5321 = vor.u32 1.1754944e-38, %v5320
  %v5322 = vsel %vm5319, %v5321, %v5317
  %v5323 = vmul.f32 1.0, %v5322
  %v5324 = vrcp.pop %v5196
  %v5325 = vmul.f32 %v5196, %v5324
  %v5326 = vsub.f32 1.0, %v5325
  %v5327 = vmul.f32 %v5324, %v5326
  %v5328 = vadd.f32 %v5324, %v5327
  %vm5329 = vweird.f32 %v5196
  %vm5330 = vweird.f32 %v5324
  %vm5331 = vmor %vm5329, %vm5330
  %v5332 = vsel %vm5331, %v5324, %v5328
  %v5333 = vand.u32 2147483647, %v5196
  %vm5334 = vcmp.eq.f32.partialorder %v5333, 8.507059e+37
  %v5335 = vand.u32 %v5196, 2147483648
  %v5336 = vor.u32 1.1754944e-38, %v5335
  %v5337 = vsel %vm5334, %v5336, %v5332
  %v5338 = vmul.f32 1.0, %v5337
  %v5339 = vrcp.pop %v5197
  %v5340 = vmul.f32 %v5197, %v5339
  %v5341 = vsub.f32 1.0, %v5340
  %v5342 = vmul.f32 %v5339, %v5341
  %v5343 = vadd.f32 %v5339, %v5342
  %vm5344 = vweird.f32 %v5197
  %vm5345 = vweird.f32 %v5339
  %vm5346 = vmor %vm5344, %vm5345
  %v5347 = vsel %vm5346, %v5339, %v5343
  %v5348 = vand.u32 2147483647, %v5197
  %vm5349 = vcmp.eq.f32.partialorder %v5348, 8.507059e+37
  %v5350 = vand.u32 %v5197, 2147483648
  %v5351 = vor.u32 1.1754944e-38, %v5350
  %v5352 = vsel %vm5349, %v5351, %v5347
  %v5353 = vmul.f32 1.0, %v5352
  %v5354 = vrcp.pop %v5198
  %v5355 = vmul.f32 %v5198, %v5354
  %v5356 = vsub.f32 1.0, %v5355
  %v5357 = vmul.f32 %v5354, %v5356
  %v5358 = vadd.f32 %v5354, %v5357
  %vm5359 = vweird.f32 %v5198
  %vm5360 = vweird.f32 %v5354
  %vm5361 = vmor %vm5359, %vm5360
  %v5362 = vsel %vm5361, %v5354, %v5358
  %v5363 = vand.u32 2147483647, %v5198
  %vm5364 = vcmp.eq.f32.partialorder %v5363, 8.507059e+37
  %v5365 = vand.u32 %v5198, 2147483648
  %v5366 = vor.u32 1.1754944e-38, %v5365
  %v5367 = vsel %vm5364, %v5366, %v5362
  %v5368 = vmul.f32 1.0, %v5367
  %v5369 = vrcp.pop %v5199
  %v5370 = vmul.f32 %v5199, %v5369
  %v5371 = vsub.f32 1.0, %v5370
  %v5372 = vmul.f32 %v5369, %v5371
  %v5373 = vadd.f32 %v5369, %v5372
  %vm5374 = vweird.f32 %v5199
  %vm5375 = vweird.f32 %v5369
  %vm5376 = vmor %vm5374, %vm5375
  %v5377 = vsel %vm5376, %v5369, %v5373
  %v5378 = vand.u32 2147483647, %v5199
  %vm5379 = vcmp.eq.f32.partialorder %v5378, 8.507059e+37
  %v5380 = vand.u32 %v5199, 2147483648
  %v5381 = vor.u32 1.1754944e-38, %v5380
  %v5382 = vsel %vm5379, %v5381, %v5377
  %v5383 = vmul.f32 1.0, %v5382
  %v5384 = vrcp.pop %v5200
  %v5385 = vmul.f32 %v5200, %v5384
  %v5386 = vsub.f32 1.0, %v5385
  %v5387 = vmul.f32 %v5384, %v5386
  %v5388 = vadd.f32 %v5384, %v5387
  %vm5389 = vweird.f32 %v5200
  %vm5390 = vweird.f32 %v5384
  %vm5391 = vmor %vm5389, %vm5390
  %v5392 = vsel %vm5391, %v5384, %v5388
  %v5393 = vand.u32 2147483647, %v5200
  %vm5394 = vcmp.eq.f32.partialorder %v5393, 8.507059e+37
  %v5395 = vand.u32 %v5200, 2147483648
  %v5396 = vor.u32 1.1754944e-38, %v5395
  %v5397 = vsel %vm5394, %v5396, %v5392
  %v5398 = vmul.f32 1.0, %v5397
  %v5399 = vrcp.pop %v5201
  %v5400 = vmul.f32 %v5201, %v5399
  %v5401 = vsub.f32 1.0, %v5400
  %v5402 = vmul.f32 %v5399, %v5401
  %v5403 = vadd.f32 %v5399, %v5402
  %vm5404 = vweird.f32 %v5201
  %vm5405 = vweird.f32 %v5399
  %vm5406 = vmor %vm5404, %vm5405
  %v5407 = vsel %vm5406, %v5399, %v5403
  %v5408 = vand.u32 2147483647, %v5201
  %vm5409 = vcmp.eq.f32.partialorder %v5408, 8.507059e+37
  %v5410 = vand.u32 %v5201, 2147483648
  %v5411 = vor.u32 1.1754944e-38, %v5410
  %v5412 = vsel %vm5409, %v5411, %v5407
  %v5413 = vmul.f32 1.0, %v5412
  %v5414 = vrcp.pop %v5202
  %v5415 = vmul.f32 %v5202, %v5414
  %v5416 = vsub.f32 1.0, %v5415
  %v5417 = vmul.f32 %v5414, %v5416
  %v5418 = vadd.f32 %v5414, %v5417
  %vm5419 = vweird.f32 %v5202
  %vm5420 = vweird.f32 %v5414
  %vm5421 = vmor %vm5419, %vm5420
  %v5422 = vsel %vm5421, %v5414, %v5418
  %v5423 = vand.u32 2147483647, %v5202
  %vm5424 = vcmp.eq.f32.partialorder %v5423, 8.507059e+37
  %v5425 = vand.u32 %v5202, 2147483648
  %v5426 = vor.u32 1.1754944e-38, %v5425
  %v5427 = vsel %vm5424, %v5426, %v5422
  %v5428 = vmul.f32 1.0, %v5427
  %v5429 = vrcp.pop %v5203
  %v5430 = vmul.f32 %v5203, %v5429
  %v5431 = vsub.f32 1.0, %v5430
  %v5432 = vmul.f32 %v5429, %v5431
  %v5433 = vadd.f32 %v5429, %v5432
  %vm5434 = vweird.f32 %v5203
  %vm5435 = vweird.f32 %v5429
  %vm5436 = vmor %vm5434, %vm5435
  %v5437 = vsel %vm5436, %v5429, %v5433
  %v5438 = vand.u32 2147483647, %v5203
  %vm5439 = vcmp.eq.f32.partialorder %v5438, 8.507059e+37
  %v5440 = vand.u32 %v5203, 2147483648
  %v5441 = vor.u32 1.1754944e-38, %v5440
  %v5442 = vsel %vm5439, %v5441, %v5437
  %v5443 = vmul.f32 1.0, %v5442
  %v5444 = vld [vmem:[%s7] sm:$0xff]
  %v5445 = vld [vmem:[%s7 + $0x8] sm:$0xff]
  %v5446 = vld [vmem:[%s7 + $0x10] sm:$0x3]
  %v5448 = vsel %vm1621, %v5444, 0
  %v5451 = vsel %vm1621, %v5445, 0
  %v5454 = vsel %vm1621, %v5446, 0
  %5456 = vmatpush.msra.mxu0 0.0
  %5457 = vmatpush.msra.mxu0 0.0
  %5458 = vmatpush.msra.mxu0 0.0
  %5459 = vmatpush.msra.mxu0 0.0
  %5460 = vmatpush.msra.mxu0 0.0
  %5461 = vmatpush.msra.mxu0 0.0
  %5462 = vmatpush.msra.mxu0 0.0
  %5463 = vmatpush.msra.mxu0 0.0
  %5464 = vmatpush.msra.mxu0 %v5428
  %5465 = vmatpush.msra.mxu0 %v5398
  %5466 = vmatpush.msra.mxu0 %v5368
  %5467 = vmatpush.msra.mxu0 %v5338
  %5468 = vmatpush.msra.mxu0 %v5308
  %5469 = vmatpush.msra.mxu0 %v5278
  %5470 = vmatpush.msra.mxu0 %v5248
  %5471 = vmatpush.msra.mxu0 %v5218
  %5472 = vmatmul.f32.gmra.mxu0 %v5448
  %v5473 = vpop.f32.mrf.mxu0
  %v5474 = vadd.f32 0.0, %v5473
  %5475 = vmatmul.f32.gmra.mxu0 %v5451
  %v5476 = vpop.f32.mrf.mxu0
  %v5477 = vadd.f32 0.0, %v5476
  %5478 = vmatmul.f32.gmra.mxu0 %v5454
  %v5479 = vpop.f32.mrf.mxu0
  %v5480 = vadd.f32 0.0, %v5479
  %5481 = vdwg.mxu0
  %5482 = vmatpush.msra.mxu0 0.0
  %5483 = vmatpush.msra.mxu0 0.0
  %5484 = vmatpush.msra.mxu0 0.0
  %5485 = vmatpush.msra.mxu0 0.0
  %5486 = vmatpush.msra.mxu0 0.0
  %5487 = vmatpush.msra.mxu0 0.0
  %5488 = vmatpush.msra.mxu0 0.0
  %5489 = vmatpush.msra.mxu0 0.0
  %5490 = vmatpush.msra.mxu0 %v5443
  %5491 = vmatpush.msra.mxu0 %v5413
  %5492 = vmatpush.msra.mxu0 %v5383
  %5493 = vmatpush.msra.mxu0 %v5353
  %5494 = vmatpush.msra.mxu0 %v5323
  %5495 = vmatpush.msra.mxu0 %v5293
  %5496 = vmatpush.msra.mxu0 %v5263
  %5497 = vmatpush.msra.mxu0 %v5233
  %5498 = vmatmul.f32.gmra.mxu0 %v5448
  %v5499 = vpop.f32.mrf.mxu0
  %v5500 = vadd.f32 0.0, %v5499
  %5501 = vmatmul.f32.gmra.mxu0 %v5451
  %v5502 = vpop.f32.mrf.mxu0
  %v5503 = vadd.f32 0.0, %v5502
  %5504 = vmatmul.f32.gmra.mxu0 %v5454
  %v5505 = vpop.f32.mrf.mxu0
  %v5506 = vadd.f32 0.0, %v5505
  %5507 = vdwg.mxu0
  %5508 = vst [vmem:[#allocation2] sm:$0xff] 0.0
  %vm5509 = vcmask 785408
  %5510 = vst.msk [vmem:[#allocation2 + $0x8] sm:$0xff] %vm5509, 0.0
  %5511 = vst [vmem:[#allocation2 + $0x10] sm:$0xff] 0.0
  %5512 = vst.msk [vmem:[#allocation2 + $0x18] sm:$0xff] %vm5509, 0.0
  %5513 = vst [vmem:[#allocation2 + $0x20] sm:$0x3] 0.0
  %vm5514 = vcmask 779264
  %5515 = vst.msk [vmem:[#allocation2 + $0x28] sm:$0x3] %vm5514, 0.0
  %5516 = vst [vmem:[#allocation2] sm:$0xff] %v5474
  %vm5517 = vcmask 556032
  %5518 = vst.msk [vmem:[#allocation2 + $0x8] sm:$0xff] %vm5517, %v5500
  %5519 = vst [vmem:[#allocation2 + $0x10] sm:$0xff] %v5477
  %5520 = vst.msk [vmem:[#allocation2 + $0x18] sm:$0xff] %vm5517, %v5503
  %5521 = vst [vmem:[#allocation2 + $0x20] sm:$0x3] %v5480
  %vm5522 = vcmask 549888
  %5523 = vst.msk [vmem:[#allocation2 + $0x28] sm:$0x3] %vm5522, %v5506
  %v5524 = vld [vmem:[%s12] sm:$0x3]
  %v5525 = vld [vmem:[#allocation3] sm:$0x1]
  %s5526 = scalar_lea.vmem [#allocation2], 4
  %v5527 = vld [vmem:[%s5526] ss:$8 sm:$0x3]
  %s5528 = scalar_lea.vmem [#allocation2], 5
  %v5529 = vld [vmem:[%s5528] ss:$8 sm:$0x3]
  %s5530 = scalar_lea.vmem [#allocation2], 3
  %v5531 = vld [vmem:[%s5530] ss:$8 sm:$0x3]
  %5533 = vrot.lane.b32.xlu0 %v5524, 1
  %v5534 = vpop.permute.xlu0 %5533
  %v5535 = vrot.slane %v5534, 7
  %vm5536 = vcmask 7168
  %v5537 = vsel %vm5536, %v5535, %v5534
  %v5539 = vmul.f32 %v5531, %v5537
  %5541 = vrot.lane.b32.xlu0 %v5539, 127
  %v5542 = vpop.permute.xlu0 %5541
  %v5543 = vrot.slane %v5542, 1
  %vm5544 = vcmask 1039360
  %v5545 = vsel %vm5544, %v5542, %v5543
  %v5547 = vadd.f32 %v5529, %v5545
  %s5548 = scalar_lea.vmem [#allocation2], 7
  %v5549 = vld [vmem:[%s5548] ss:$8 sm:$0x3]
  %s5550 = scalar_lea.vmem [#allocation2], 1
  %v5551 = vld [vmem:[%s5550] ss:$8 sm:$0x3]
  %5553 = vrot.lane.b32.xlu0 %v5551, 114
  %v5554 = vpop.permute.xlu0 %5553
  %v5555 = vrot.slane %v5554, 1
  %vm5556 = vcmask 932864
  %v5557 = vsel %vm5556, %v5554, %v5555
  %v5559 = vadd.f32 %v5549, %v5557
  %s5560 = scalar_lea.vmem [#allocation2], 16
  %v5561 = vld [vmem:[%s5560] ss:$8 sm:$0x3]
  %s5562 = scalar_lea.vmem [#allocation2], 6
  %v5563 = vld [vmem:[%s5562] ss:$8 sm:$0x3]
  %v5564 = vmul.f32 %v5563, %v5537
  %5566 = vrot.lane.b32.xlu0 %v5564, 127
  %v5567 = vpop.permute.xlu0 %5566
  %v5568 = vrot.slane %v5567, 1
  %v5569 = vsel %vm5544, %v5567, %v5568
  %v5571 = vadd.f32 %v5561, %v5569
  %s5572 = scalar_lea.vmem [#allocation2], 2
  %v5573 = vld [vmem:[%s5572] ss:$8 sm:$0x3]
  %5575 = vrot.lane.b32.xlu0 %v5573, 114
  %v5576 = vpop.permute.xlu0 %5575
  %v5577 = vrot.slane %v5576, 1
  %v5578 = vsel %vm5556, %v5576, %v5577
  %v5580 = vadd.f32 %v5571, %v5578
  %v5581 = vld [vmem:[#allocation2] ss:$8 sm:$0x3]
  %5582 = vrot.lane.b32.xlu0 %v5524, 15
  %v5583 = vpop.permute.xlu0 %5582
  %v5584 = vrot.slane %v5583, 7
  %vm5585 = vcmask 121856
  %v5586 = vsel %vm5585, %v5584, %v5583
  %v5588 = vmul.f32 %v5581, %v5586
  %5590 = vrot.lane.b32.xlu0 %v5588, 113
  %v5591 = vpop.permute.xlu0 %5590
  %v5592 = vrot.slane %v5591, 1
  %vm5593 = vcmask 924672
  %v5594 = vsel %vm5593, %v5591, %v5592
  %v5596 = vadd.f32 %v5580, %v5594
  %5598 = vset.pattern.permute.xlu0 0
  %5599 = vperm.xlu0 %5598, %v5525
  %v5600 = vpop.permute.xlu0 %5599
  %v5602 = vperm.slane %v5600, 0
  %v5603 = vadd.f32 %v5527, %v5602
  %v5604 = vxor.u32 %v5603, 2147483648
  %v5605 = vmul.f32 %v5604, 1.442695
  %v5606 = vpow.pop %v5605
  %v5607 = vadd.f32 %v5606, 1.0
  %v5608 = vrcp.pop %v5607
  %v5609 = vmul.f32 %v5607, %v5608
  %v5610 = vsub.f32 1.0, %v5609
  %v5611 = vmul.f32 %v5608, %v5610
  %v5612 = vadd.f32 %v5608, %v5611
  %vm5613 = vweird.f32 %v5607
  %vm5614 = vweird.f32 %v5608
  %vm5615 = vmor %vm5613, %vm5614
  %v5616 = vsel %vm5615, %v5608, %v5612
  %v5617 = vand.u32 2147483647, %v5607
  %vm5618 = vcmp.eq.f32.partialorder %v5617, 8.507059e+37
  %v5619 = vand.u32 %v5607, 2147483648
  %v5620 = vor.u32 1.1754944e-38, %v5619
  %v5621 = vsel %vm5618, %v5620, %v5616
  %v5622 = vmul.f32 1.0, %v5621
  %v5623 = vlaneseq
  %vm5624 = vcmp.ge.s32.totalorder %v5623, 0
  %vm5625 = vcmp.lt.s32.totalorder %v5623, 196
  %vm5626 = vmand %vm5624, %vm5625
  %5627 = vst.msk [vmem:[%s13] ss:$8 sm:$0x3] %vm5626, %v5622
  %5628 = vst.msk [vmem:[%s13] ss:$8 sm:$0x0] %vm5626, %v5622
  %v5629 = vadd.f32 %v5547, %v5602
  %v5630 = vxor.u32 %v5629, 2147483648
  %v5631 = vmul.f32 %v5630, 1.442695
  %v5632 = vpow.pop %v5631
  %v5633 = vadd.f32 %v5632, 1.0
  %v5634 = vrcp.pop %v5633
  %v5635 = vmul.f32 %v5633, %v5634
  %v5636 = vsub.f32 1.0, %v5635
  %v5637 = vmul.f32 %v5634, %v5636
  %v5638 = vadd.f32 %v5634, %v5637
  %vm5639 = vweird.f32 %v5633
  %vm5640 = vweird.f32 %v5634
  %vm5641 = vmor %vm5639, %vm5640
  %v5642 = vsel %vm5641, %v5634, %v5638
  %v5643 = vand.u32 2147483647, %v5633
  %vm5644 = vcmp.eq.f32.partialorder %v5643, 8.507059e+37
  %v5645 = vand.u32 %v5633, 2147483648
  %v5646 = vor.u32 1.1754944e-38, %v5645
  %v5647 = vsel %vm5644, %v5646, %v5642
  %v5648 = vmul.f32 1.0, %v5647
  %s5649 = scalar_lea.vmem %s13, 1
  %5650 = vst.msk [vmem:[%s5649] ss:$8 sm:$0x3] %vm5626, %v5648
  %5651 = vst.msk [vmem:[%s5649] ss:$8 sm:$0x0] %vm5626, %v5648
  %v5652 = vadd.f32 %v5559, %v5602
  %v5653 = vxor.u32 %v5652, 2147483648
  %v5654 = vmul.f32 %v5653, 1.442695
  %v5655 = vpow.pop %v5654
  %v5656 = vadd.f32 %v5655, 1.0
  %v5657 = vrcp.pop %v5656
  %v5658 = vmul.f32 %v5656, %v5657
  %v5659 = vsub.f32 1.0, %v5658
  %v5660 = vmul.f32 %v5657, %v5659
  %v5661 = vadd.f32 %v5657, %v5660
  %vm5662 = vweird.f32 %v5656
  %vm5663 = vweird.f32 %v5657
  %vm5664 = vmor %vm5662, %vm5663
  %v5665 = vsel %vm5664, %v5657, %v5661
  %v5666 = vand.u32 2147483647, %v5656
  %vm5667 = vcmp.eq.f32.partialorder %v5666, 8.507059e+37
  %v5668 = vand.u32 %v5656, 2147483648
  %v5669 = vor.u32 1.1754944e-38, %v5668
  %v5670 = vsel %vm5667, %v5669, %v5665
  %v5671 = vmul.f32 1.0, %v5670
  %s5672 = scalar_lea.vmem %s13, 2
  %5673 = vst.msk [vmem:[%s5672] ss:$8 sm:$0x3] %vm5626, %v5671
  %5674 = vst.msk [vmem:[%s5672] ss:$8 sm:$0x0] %vm5626, %v5671
  %v5675 = vadd.f32 %v5596, %v5602
  %v5676 = vxor.u32 %v5675, 2147483648
  %v5677 = vmul.f32 %v5676, 1.442695
  %v5678 = vpow.pop %v5677
  %v5679 = vadd.f32 %v5678, 1.0
  %v5680 = vrcp.pop %v5679
  %v5681 = vmul.f32 %v5679, %v5680
  %v5682 = vsub.f32 1.0, %v5681
  %v5683 = vmul.f32 %v5680, %v5682
  %v5684 = vadd.f32 %v5680, %v5683
  %vm5685 = vweird.f32 %v5679
  %vm5686 = vweird.f32 %v5680
  %vm5687 = vmor %vm5685, %vm5686
  %v5688 = vsel %vm5687, %v5680, %v5684
  %v5689 = vand.u32 2147483647, %v5679
  %vm5690 = vcmp.eq.f32.partialorder %v5689, 8.507059e+37
  %v5691 = vand.u32 %v5679, 2147483648
  %v5692 = vor.u32 1.1754944e-38, %v5691
  %v5693 = vsel %vm5690, %v5692, %v5688
  %v5694 = vmul.f32 1.0, %v5693
  %s5695 = scalar_lea.vmem %s13, 3
  %5696 = vst.msk [vmem:[%s5695] ss:$8 sm:$0x3] %vm5626, %v5694
  %5697 = vst.msk [vmem:[%s5695] ss:$8 sm:$0x0] %vm5626, %v5694
  %s5698 = scalar_lea.vmem [#allocation2], 21
  %v5699 = vld [vmem:[%s5698] ss:$8 sm:$0x3]
  %s5700 = scalar_lea.vmem [#allocation2], 22
  %v5701 = vld [vmem:[%s5700] ss:$8 sm:$0x3]
  %s5702 = scalar_lea.vmem [#allocation2], 20
  %v5703 = vld [vmem:[%s5702] ss:$8 sm:$0x3]
  %v5704 = vmul.f32 %v5703, %v5537
  %5706 = vrot.lane.b32.xlu0 %v5704, 127
  %v5707 = vpop.permute.xlu0 %5706
  %v5708 = vrot.slane %v5707, 1
  %v5709 = vsel %vm5544, %v5707, %v5708
  %v5711 = vadd.f32 %v5701, %v5709
  %s5712 = scalar_lea.vmem [#allocation2], 32
  %v5713 = vld [vmem:[%s5712] ss:$8 sm:$0x3]
  %s5714 = scalar_lea.vmem [#allocation2], 18
  %v5715 = vld [vmem:[%s5714] ss:$8 sm:$0x3]
  %5717 = vrot.lane.b32.xlu0 %v5715, 114
  %v5718 = vpop.permute.xlu0 %5717
  %v5719 = vrot.slane %v5718, 1
  %v5720 = vsel %vm5556, %v5718, %v5719
  %v5722 = vadd.f32 %v5713, %v5720
  %s5723 = scalar_lea.vmem [#allocation2], 33
  %v5724 = vld [vmem:[%s5723] ss:$8 sm:$0x3]
  %s5725 = scalar_lea.vmem [#allocation2], 23
  %v5726 = vld [vmem:[%s5725] ss:$8 sm:$0x3]
  %v5727 = vmul.f32 %v5726, %v5537
  %5729 = vrot.lane.b32.xlu0 %v5727, 127
  %v5730 = vpop.permute.xlu0 %5729
  %v5731 = vrot.slane %v5730, 1
  %v5732 = vsel %vm5544, %v5730, %v5731
  %v5734 = vadd.f32 %v5724, %v5732
  %s5735 = scalar_lea.vmem [#allocation2], 19
  %v5736 = vld [vmem:[%s5735] ss:$8 sm:$0x3]
  %5738 = vrot.lane.b32.xlu0 %v5736, 114
  %v5739 = vpop.permute.xlu0 %5738
  %v5740 = vrot.slane %v5739, 1
  %v5741 = vsel %vm5556, %v5739, %v5740
  %v5743 = vadd.f32 %v5734, %v5741
  %s5744 = scalar_lea.vmem [#allocation2], 17
  %v5745 = vld [vmem:[%s5744] ss:$8 sm:$0x3]
  %v5746 = vmul.f32 %v5745, %v5586
  %5748 = vrot.lane.b32.xlu0 %v5746, 113
  %v5749 = vpop.permute.xlu0 %5748
  %v5750 = vrot.slane %v5749, 1
  %v5751 = vsel %vm5593, %v5749, %v5750
  %v5753 = vadd.f32 %v5743, %v5751
  %v5754 = vadd.f32 %v5699, %v5602
  %v5755 = vxor.u32 %v5754, 2147483648
  %v5756 = vmul.f32 %v5755, 1.442695
  %v5757 = vpow.pop %v5756
  %v5758 = vadd.f32 %v5757, 1.0
  %v5759 = vrcp.pop %v5758
  %v5760 = vmul.f32 %v5758, %v5759
  %v5761 = vsub.f32 1.0, %v5760
  %v5762 = vmul.f32 %v5759, %v5761
  %v5763 = vadd.f32 %v5759, %v5762
  %vm5764 = vweird.f32 %v5758
  %vm5765 = vweird.f32 %v5759
  %vm5766 = vmor %vm5764, %vm5765
  %v5767 = vsel %vm5766, %v5759, %v5763
  %v5768 = vand.u32 2147483647, %v5758
  %vm5769 = vcmp.eq.f32.partialorder %v5768, 8.507059e+37
  %v5770 = vand.u32 %v5758, 2147483648
  %v5771 = vor.u32 1.1754944e-38, %v5770
  %v5772 = vsel %vm5769, %v5771, %v5767
  %v5773 = vmul.f32 1.0, %v5772
  %s5774 = scalar_lea.vmem %s13, 4
  %5775 = vst.msk [vmem:[%s5774] ss:$8 sm:$0x3] %vm5626, %v5773
  %5776 = vst.msk [vmem:[%s5774] ss:$8 sm:$0x0] %vm5626, %v5773
  %v5777 = vadd.f32 %v5711, %v5602
  %v5778 = vxor.u32 %v5777, 2147483648
  %v5779 = vmul.f32 %v5778, 1.442695
  %v5780 = vpow.pop %v5779
  %v5781 = vadd.f32 %v5780, 1.0
  %v5782 = vrcp.pop %v5781
  %v5783 = vmul.f32 %v5781, %v5782
  %v5784 = vsub.f32 1.0, %v5783
  %v5785 = vmul.f32 %v5782, %v5784
  %v5786 = vadd.f32 %v5782, %v5785
  %vm5787 = vweird.f32 %v5781
  %vm5788 = vweird.f32 %v5782
  %vm5789 = vmor %vm5787, %vm5788
  %v5790 = vsel %vm5789, %v5782, %v5786
  %v5791 = vand.u32 2147483647, %v5781
  %vm5792 = vcmp.eq.f32.partialorder %v5791, 8.507059e+37
  %v5793 = vand.u32 %v5781, 2147483648
  %v5794 = vor.u32 1.1754944e-38, %v5793
  %v5795 = vsel %vm5792, %v5794, %v5790
  %v5796 = vmul.f32 1.0, %v5795
  %s5797 = scalar_lea.vmem %s13, 5
  %5798 = vst.msk [vmem:[%s5797] ss:$8 sm:$0x3] %vm5626, %v5796
  %5799 = vst.msk [vmem:[%s5797] ss:$8 sm:$0x0] %vm5626, %v5796
  %v5800 = vadd.f32 %v5722, %v5602
  %v5801 = vxor.u32 %v5800, 2147483648
  %v5802 = vmul.f32 %v5801, 1.442695
  %v5803 = vpow.pop %v5802
  %v5804 = vadd.f32 %v5803, 1.0
  %v5805 = vrcp.pop %v5804
  %v5806 = vmul.f32 %v5804, %v5805
  %v5807 = vsub.f32 1.0, %v5806
  %v5808 = vmul.f32 %v5805, %v5807
  %v5809 = vadd.f32 %v5805, %v5808
  %vm5810 = vweird.f32 %v5804
  %vm5811 = vweird.f32 %v5805
  %vm5812 = vmor %vm5810, %vm5811
  %v5813 = vsel %vm5812, %v5805, %v5809
  %v5814 = vand.u32 2147483647, %v5804
  %vm5815 = vcmp.eq.f32.partialorder %v5814, 8.507059e+37
  %v5816 = vand.u32 %v5804, 2147483648
  %v5817 = vor.u32 1.1754944e-38, %v5816
  %v5818 = vsel %vm5815, %v5817, %v5813
  %v5819 = vmul.f32 1.0, %v5818
  %s5820 = scalar_lea.vmem %s13, 6
  %5821 = vst.msk [vmem:[%s5820] ss:$8 sm:$0x3] %vm5626, %v5819
  %5822 = vst.msk [vmem:[%s5820] ss:$8 sm:$0x0] %vm5626, %v5819
  %v5823 = vadd.f32 %v5753, %v5602
  %v5824 = vxor.u32 %v5823, 2147483648
  %v5825 = vmul.f32 %v5824, 1.442695
  %v5826 = vpow.pop %v5825
  %v5827 = vadd.f32 %v5826, 1.0
  %v5828 = vrcp.pop %v5827
  %v5829 = vmul.f32 %v5827, %v5828
  %v5830 = vsub.f32 1.0, %v5829
  %v5831 = vmul.f32 %v5828, %v5830
  %v5832 = vadd.f32 %v5828, %v5831
  %vm5833 = vweird.f32 %v5827
  %vm5834 = vweird.f32 %v5828
  %vm5835 = vmor %vm5833, %vm5834
  %v5836 = vsel %vm5835, %v5828, %v5832
  %v5837 = vand.u32 2147483647, %v5827
  %vm5838 = vcmp.eq.f32.partialorder %v5837, 8.507059e+37
  %v5839 = vand.u32 %v5827, 2147483648
  %v5840 = vor.u32 1.1754944e-38, %v5839
  %v5841 = vsel %vm5838, %v5840, %v5836
  %v5842 = vmul.f32 1.0, %v5841
  %s5843 = scalar_lea.vmem %s13, 7
  %5844 = vst.msk [vmem:[%s5843] ss:$8 sm:$0x3] %vm5626, %v5842
  %5845 = vst.msk [vmem:[%s5843] ss:$8 sm:$0x0] %vm5626, %v5842
  // Predicated region
  $region54: #{conv_decoder_forward.1} parent=0 // pred_check
    _
  $region55: #{conv_decoder_forward.1} parent=0 // pred_check_branch
    %5847 = sbr.rel (0) target = $region57
  $region56: #{conv_decoder_forward.1} parent=0 // pred_region
    _
  $region57: #{conv_decoder_forward.1} parent=0 // pred_fallthru
    _
  // Predicated region
  $region58: #{conv_decoder_forward.1} parent=0 // pred_check
    _
  $region59: #{conv_decoder_forward.1} parent=0 // pred_check_branch
    %5849 = sbr.rel (0) target = $region61
  $region60: #{conv_decoder_forward.1} parent=0 // pred_region
    _
  $region61: #{conv_decoder_forward.1} parent=0 // pred_fallthru
    _

</llo_original>
